<compile_context>
chip_gen: v7x
topology: tpu7x:2x2x1
jax: 0.10.0
libtpu: 0.0.40
codegen_flags: <defaults>
</compile_context>

<pallas_src>
import functools

import jax
import jax.numpy as jnp
from jax.experimental import pallas as pl
from jax.experimental.pallas import tpu as pltpu


def _round_up(x, m):
    return (x + m - 1) // m * m


def _meta_arch_kernel(x_ref,      # (TC, BC, D)   time-chunk of the (time-major) input
                      wih_ref,    # (D, 4*HP)     W_ih^T, gate order (i,f,o,g), lane-padded
                      whh_ref,    # (HP, 4*HP)    W_hh^T, gate order (i,f,o,g), lane-padded
                      b_ref,      # (1, 4*HP)     b_ih + b_hh (f32)
                      w1_ref,     # (HP, H)       predictor layer-1 weight^T (padded rows)
                      b1_ref,     # (1, H)
                      w2_ref,     # (H, D)        predictor layer-2 weight^T
                      b2_ref,     # (1, D)
                      out_ref,    # (BC, P)       packed [pred | h_n | c_n], lane-aligned
                      h_scr,      # (BC, HP) f32  recurrent hidden state (persists over t)
                      c_scr,      # (BC, HP) f32  recurrent cell state
                      gx_scr,     # (TC, BC, 4*HP) f32  hoisted input projection
                      *, seq_len: int):
    t = pl.program_id(1)
    TC, BC, D = x_ref.shape
    HP = whh_ref.shape[0]
    G = 4 * HP

    n_chunks = -(-seq_len // TC)                 # static
    t_rem = seq_len - (n_chunks - 1) * TC        # valid steps in the final chunk
    # Two interleaved, independent recurrence chains when the batch block is
    # large enough to keep both sub-blocks sublane-aligned (ILP in the
    # latency-bound step loop).
    NSUB = 2 if (BC >= 16 and BC % 16 == 0) else 1
    SB = BC // NSUB

    @pl.when(t == 0)
    def _init():
        h_scr[...] = jnp.zeros_like(h_scr)
        c_scr[...] = jnp.zeros_like(c_scr)

    wih = wih_ref[...]
    whh = whh_ref[...]
    bias = b_ref[...]

    # ---- hoisted input projection: x @ W_ih + b for the whole chunk ---------
    # Done in <=8-timestep sub-blocks and staged to VMEM scratch so live vreg
    # pressure stays bounded even for large time chunks.
    PROJ = 8
    for ss in range(0, TC, PROJ):
        n = min(PROJ, TC - ss)
        xb = x_ref[ss:ss + n].reshape(n * BC, D).astype(wih.dtype)
        gb = jnp.dot(xb, wih, preferred_element_type=jnp.float32) + bias
        gx_scr[ss:ss + n] = gb.reshape(n, BC, G)

    # ---- serial recurrence over the chunk (fully unrolled) ------------------
    h_sub = [h_scr[pl.ds(k * SB, SB), :] for k in range(NSUB)]
    c_sub = [c_scr[pl.ds(k * SB, SB), :] for k in range(NSUB)]
    for s in range(TC):
        gx_s = gx_scr[s]                          # (BC, 4*HP) f32
        masked = s >= t_rem                       # static: only the ragged tail steps
        if masked:
            keep = jnp.full((SB, HP), t * TC + s, jnp.int32) < seq_len
        for k in range(NSUB):                     # independent chains -> ILP
            g = gx_s[k * SB:(k + 1) * SB] + jnp.dot(
                h_sub[k].astype(whh.dtype), whh,
                preferred_element_type=jnp.float32)
            act = jax.nn.sigmoid(g[:, :3 * HP])   # (i, f, o) in one contiguous pass
            gg = jnp.tanh(g[:, 3 * HP:])
            i = act[:, 0 * HP:1 * HP]
            f = act[:, 1 * HP:2 * HP]
            o = act[:, 2 * HP:3 * HP]
            c_new = f * c_sub[k] + i * gg
            h_new = o * jnp.tanh(c_new)
            if masked:
                c_sub[k] = jnp.where(keep, c_new, c_sub[k])
                h_sub[k] = jnp.where(keep, h_new, h_sub[k])
            else:
                c_sub[k] = c_new
                h_sub[k] = h_new

    for k in range(NSUB):
        h_scr[pl.ds(k * SB, SB), :] = h_sub[k]
        c_scr[pl.ds(k * SB, SB), :] = c_sub[k]

    @pl.when(t == n_chunks - 1)
    def _finalize():
        h = jnp.concatenate(h_sub, axis=0) if NSUB > 1 else h_sub[0]
        c = jnp.concatenate(c_sub, axis=0) if NSUB > 1 else c_sub[0]
        # predictor MLP on the last valid hidden state (== lstm_out[:, -1, :])
        z = jnp.maximum(
            jnp.dot(h.astype(w1_ref.dtype), w1_ref[...],
                    preferred_element_type=jnp.float32) + b1_ref[...], 0.0)
        pred = (jnp.dot(z.astype(w2_ref.dtype), w2_ref[...],
                        preferred_element_type=jnp.float32) + b2_ref[...])
        DP = out_ref.shape[1] - 2 * HP            # 128-aligned slot width for pred
        pieces = [pred]
        if DP > D:
            pieces.append(jnp.zeros((BC, DP - D), jnp.float32))
        pieces += [h, c]
        out_ref[...] = jnp.concatenate(pieces, axis=1).astype(out_ref.dtype)


def init_params(key, input_dim: int, hidden_dim: int):
    """Deterministic synthetic parameters (PyTorch layout, gate order i,f,g,o)."""
    ks = jax.random.split(key, 8)
    s = 0.1
    p = {
        # nn.LSTM: weight_ih_l0 (4H, D), weight_hh_l0 (4H, H), biases (4H,)
        "w_ih_t": (jax.random.normal(ks[0], (input_dim, 4 * hidden_dim)) * s),
        "w_hh_t": (jax.random.normal(ks[1], (hidden_dim, 4 * hidden_dim)) * s),
        "b_lstm": (jax.random.normal(ks[2], (1, 4 * hidden_dim)) * s
                   + jax.random.normal(ks[3], (1, 4 * hidden_dim)) * s),  # b_ih + b_hh
        # predictor: Linear(H,H) then Linear(H,D)
        "w1_t": (jax.random.normal(ks[4], (hidden_dim, hidden_dim)) * s),
        "b1": (jax.random.normal(ks[5], (1, hidden_dim)) * s),
        "w2_t": (jax.random.normal(ks[6], (hidden_dim, input_dim)) * s),
        "b2": (jax.random.normal(ks[7], (1, input_dim)) * s),
    }
    return jax.tree.map(lambda a: a.astype(jnp.float32), p)


def _cast_matmul_weights(params, dtype):
    """Cast only the matmul weights (bf16 recommended on all gens); biases stay f32."""
    out = dict(params)
    for k in ("w_ih_t", "w_hh_t", "w1_t", "w2_t"):
        out[k] = params[k].astype(dtype)
    return out


def _prepare_kernel_weights(params):
    """Permute gates (i,f,g,o)->(i,f,o,g) and pad each gate to a 128-lane slot."""
    H = params["w_hh_t"].shape[0]
    D = params["w_ih_t"].shape[0]
    HP = _round_up(H, 128)
    wdt = params["w_ih_t"].dtype

    def perm_pad(w):                      # (..., 4H) -> (..., 4HP), order (i,f,o,g)
        gates = [w[..., 0:H], w[..., H:2 * H],
                 w[..., 3 * H:4 * H], w[..., 2 * H:3 * H]]
        if HP != H:
            pad = [(0, 0)] * (w.ndim - 1) + [(0, HP - H)]
            gates = [jnp.pad(g, pad) for g in gates]
        return jnp.concatenate(gates, axis=-1)

    wih = perm_pad(params["w_ih_t"]).astype(wdt)             # (D, 4HP)
    whh = perm_pad(params["w_hh_t"])                         # (H, 4HP)
    w1 = params["w1_t"]
    if HP != H:
        whh = jnp.pad(whh, ((0, HP - H), (0, 0)))
        w1 = jnp.pad(w1, ((0, HP - H), (0, 0)))
    whh = whh.astype(wdt)                                    # (HP, 4HP)
    w1 = w1.astype(wdt)                                      # (HP, H)
    b = perm_pad(params["b_lstm"]).astype(jnp.float32)       # (1, 4HP)
    b1 = params["b1"].astype(jnp.float32)                    # (1, H)
    w2 = params["w2_t"].astype(wdt)                          # (H, D)
    b2 = params["b2"].astype(jnp.float32)                    # (1, D)
    return wih, whh, b, w1, b1, w2, b2, H, HP, D, wdt


def meta_architecture_forward(x, params, *, time_chunk=32, batch_chunk=None):
    """x: (B, T, D) float32.  Returns (pred (B,D), {'h_n': (1,B,H), 'c_n': (1,B,H)})."""
    B, T, D = x.shape
    wih, whh, b, w1, b1, w2, b2, H, HP, D_w, wdt = _prepare_kernel_weights(params)
    assert D_w == D, "input_dim mismatch between x and params"

    # --- batch blocking: sublane-aligned (multiple of 8); >=2 batch blocks when
    #     B > 8 so the "parallel" axis feeds both v7x TensorCores --------------
    if batch_chunk is not None:
        bc = int(batch_chunk)
        if bc <= 0 or bc % 8 != 0:
            raise ValueError("batch_chunk must be a positive multiple of 8")
        B_pad = _round_up(B, bc)
    elif B <= 8:
        bc = 8
        B_pad = 8
    else:
        B_pad = _round_up(B, 16)
        bc = B_pad // 2
    nbc = B_pad // bc

    # --- time blocking: large chunks amortize the ~600-cycle grid-step overhead;
    #     ragged tails are masked in-kernel (no divisor fallback to tc=1) -------
    tc = max(1, min(int(time_chunk), T))
    ntc = pl.cdiv(T, tc)
    T_pad = ntc * tc

    G = 4 * HP
    DP = _round_up(D, 128)
    P = DP + 2 * HP     # packed output: [pred | h_n | c_n], each 128-lane aligned

    # x: cast to the matmul dtype (halves streamed DMA for bf16), time-major so
    # per-step gate slabs are leading-dim selects, zero-pad batch/time so every
    # block is full (padded timesteps are masked in-kernel, padded rows dropped).
    x_p = jnp.transpose(x.astype(wdt), (1, 0, 2))
    x_p = jnp.pad(x_p, ((0, T_pad - T), (0, B_pad - B), (0, 0)))

    # --- VMEM budget, clamped to this generation's physical VMEM --------------
    def nbytes(a):
        return int(a.size) * a.dtype.itemsize
    weight_bytes = sum(nbytes(a) for a in (wih, whh, b, w1, b1, w2, b2))
    try:
        vmem_cap = int(pltpu.get_tpu_info().vmem_capacity_bytes)
    except Exception:
        vmem_cap = 64 << 20                      # v7x-safe fallback

    def vmem_limit(weight_bufs):
        est = (weight_bufs * weight_bytes
               + 2 * tc * bc * D * x_p.dtype.itemsize    # double-buffered x chunk
               + 2 * bc * P * 4                          # output block
               + 2 * bc * HP * 4                         # h/c scratch
               + tc * bc * G * 4                         # gates scratch
               + (2 << 20))                              # temporaries headroom
        if est <= (16 << 20):
            return None
        return int(min(est * 1.25, vmem_cap - (12 << 20)))

    kernel = functools.partial(_meta_arch_kernel, seq_len=T)

    def run(single_buffer_weights):
        if single_buffer_weights:
            wmode = dict(pipeline_mode=pl.Buffered(1))   # weights never change
            wbufs = 1
        else:
            wmode = {}
            wbufs = 2
        in_specs = [
            pl.BlockSpec((tc, bc, D), lambda bb, t: (t, bb, 0)),       # streamed x
            pl.BlockSpec((D, G), lambda bb, t: (0, 0), **wmode),       # resident weights
            pl.BlockSpec((HP, G), lambda bb, t: (0, 0), **wmode),
            pl.BlockSpec((1, G), lambda bb, t: (0, 0), **wmode),
            pl.BlockSpec((HP, H), lambda bb, t: (0, 0), **wmode),
            pl.BlockSpec((1, H), lambda bb, t: (0, 0), **wmode),
            pl.BlockSpec((H, D), lambda bb, t: (0, 0), **wmode),
            pl.BlockSpec((1, D), lambda bb, t: (0, 0), **wmode),
        ]
        return pl.pallas_call(
            kernel,
            out_shape=jax.ShapeDtypeStruct((B_pad, P), jnp.float32),
            grid=(nbc, ntc),
            in_specs=in_specs,
            out_specs=pl.BlockSpec((bc, P), lambda bb, t: (bb, 0)),
            scratch_shapes=[pltpu.VMEM((bc, HP), jnp.float32),
                            pltpu.VMEM((bc, HP), jnp.float32),
                            pltpu.VMEM((tc, bc, G), jnp.float32)],
            compiler_params=pltpu.CompilerParams(
                dimension_semantics=("parallel", "arbitrary"),
                vmem_limit_bytes=vmem_limit(wbufs)),
        )(x_p, wih, whh, b, w1, b1, w2, b2)

    try:
        out = run(True)       # single-buffered resident weights
    except Exception:
        out = run(False)      # fall back to default double buffering

    pred = out[:B, :D]
    h_n = out[:B, DP:DP + H]
    c_n = out[:B, DP + HP:DP + HP + H]
    # PyTorch h_n/c_n shape: (num_layers=1, B, H)
    return pred, {"h_n": h_n[None, ...], "c_n": c_n[None, ...]}


def _reference_forward(x, p):
    """Pure-JAX reference of the same math (PyTorch gate order, f32 accumulation)."""
    B, T, D = x.shape
    H = p["w_hh_t"].shape[0]
    wd = p["w_ih_t"].dtype
    h = jnp.zeros((B, H), jnp.float32)
    c = jnp.zeros((B, H), jnp.float32)
    for t in range(T):
        g = (jnp.dot(x[:, t, :].astype(wd), p["w_ih_t"],
                     preferred_element_type=jnp.float32)
             + jnp.dot(h.astype(wd), p["w_hh_t"],
                       preferred_element_type=jnp.float32)
             + p["b_lstm"])
        i = jax.nn.sigmoid(g[:, :H])
        f = jax.nn.sigmoid(g[:, H:2 * H])
        gg = jnp.tanh(g[:, 2 * H:3 * H])
        o = jax.nn.sigmoid(g[:, 3 * H:])
        c = f * c + i * gg
        h = o * jnp.tanh(c)
    z = jnp.maximum(jnp.dot(h.astype(p["w1_t"].dtype), p["w1_t"],
                            preferred_element_type=jnp.float32) + p["b1"], 0.0)
    pred = jnp.dot(z.astype(p["w2_t"].dtype), p["w2_t"],
                   preferred_element_type=jnp.float32) + p["b2"]
    return pred, h, c


if __name__ == "__main__":
    # Small shapes consistent with the module: batch=2, seq=8, input_dim=4, hidden=32.
    B, T, D, H = 2, 8, 4, 32

    key = jax.random.PRNGKey(0)
    k_x, k_p, k_x2 = jax.random.split(key, 3)
    x = jax.random.normal(k_x, (B, T, D), dtype=jnp.float32)
    params = init_params(k_p, D, H)

    # --- f32 path (matches PyTorch numerics) --------------------------------
    pred, state = meta_architecture_forward(x, params)
    pred = jax.block_until_ready(pred)
    h_n = jax.block_until_ready(state["h_n"])
    c_n = jax.block_until_ready(state["c_n"])
    pred_ref, h_ref, c_ref = _reference_forward(x, params)
    assert pred.shape == (B, D) and h_n.shape == (1, B, H) and c_n.shape == (1, B, H)
    assert jnp.allclose(pred, pred_ref, atol=1e-4), "pred mismatch"
    assert jnp.allclose(h_n[0], h_ref, atol=1e-4), "h_n mismatch"
    assert jnp.allclose(c_n[0], c_ref, atol=1e-4), "c_n mismatch"

    # --- bf16 weights/x path (MXU-native on v5e/v6e/v7x, halves DMA bytes) --
    params_bf16 = _cast_matmul_weights(params, jnp.bfloat16)
    pred_b, state_b = meta_architecture_forward(x, params_bf16)
    pred_b = jax.block_until_ready(pred_b)
    pred_rb, h_rb, c_rb = _reference_forward(x, params_bf16)
    assert jnp.allclose(pred_b, pred_rb, atol=2e-2), "bf16 pred mismatch"
    assert jnp.allclose(state_b["h_n"][0], h_rb, atol=2e-2), "bf16 h_n mismatch"
    assert jnp.allclose(state_b["c_n"][0], c_rb, atol=2e-2), "bf16 c_n mismatch"

    # --- multi-time-chunk + ragged-tail + 2-batch-block path (f32) ----------
    B2, T2 = 16, 13
    x2 = jax.random.normal(k_x2, (B2, T2, D), dtype=jnp.float32)
    pred2, state2 = meta_architecture_forward(x2, params, time_chunk=8)
    pred2 = jax.block_until_ready(pred2)
    pred2_ref, h2_ref, c2_ref = _reference_forward(x2, params)
    assert jnp.allclose(pred2, pred2_ref, atol=1e-4), "ragged pred mismatch"
    assert jnp.allclose(state2["h_n"][0], h2_ref, atol=1e-4), "ragged h_n mismatch"
    assert jnp.allclose(state2["c_n"][0], c2_ref, atol=1e-4), "ragged c_n mismatch"

    print("KERNEL_OK")
</pallas_src>

<mosaic_0001>
module attributes {stable_mosaic.version = 11 : i64} {
  func.func @_meta_arch_kernel(%arg0: i32, %arg1: i32, %arg2: memref<8x8x4xf32, #tpu.memory_space<vmem>>, %arg3: memref<4x512xf32, #tpu.memory_space<vmem>>, %arg4: memref<128x512xf32, #tpu.memory_space<vmem>>, %arg5: memref<1x512xf32, #tpu.memory_space<vmem>>, %arg6: memref<128x32xf32, #tpu.memory_space<vmem>>, %arg7: memref<1x32xf32, #tpu.memory_space<vmem>>, %arg8: memref<32x4xf32, #tpu.memory_space<vmem>>, %arg9: memref<1x4xf32, #tpu.memory_space<vmem>>, %arg10: memref<8x384xf32, #tpu.memory_space<vmem>>, %arg11: memref<8x128xf32, #tpu.memory_space<vmem>>, %arg12: memref<8x128xf32, #tpu.memory_space<vmem>>, %arg13: memref<8x8x512xf32, #tpu.memory_space<vmem>>) attributes {dimension_semantics = [#tpu.dimension_semantics<parallel>, #tpu.dimension_semantics<arbitrary>], iteration_bounds = array<i64: 1, 1>, scalar_prefetch = 0 : i64, scratch_operands = 3 : i64, tpu.core_type = #tpu.core_type<tc>, window_params = [{transform_indices = @transform_0, window_bounds = array<i64: 8, 8, 4>}, {pipeline_mode = #tpu.pipeline_mode<synchronous>, transform_indices = @transform_1, window_bounds = array<i64: 4, 512>}, {pipeline_mode = #tpu.pipeline_mode<synchronous>, transform_indices = @transform_2, window_bounds = array<i64: 128, 512>}, {pipeline_mode = #tpu.pipeline_mode<synchronous>, transform_indices = @transform_3, window_bounds = array<i64: 1, 512>}, {pipeline_mode = #tpu.pipeline_mode<synchronous>, transform_indices = @transform_4, window_bounds = array<i64: 128, 32>}, {pipeline_mode = #tpu.pipeline_mode<synchronous>, transform_indices = @transform_5, window_bounds = array<i64: 1, 32>}, {pipeline_mode = #tpu.pipeline_mode<synchronous>, transform_indices = @transform_6, window_bounds = array<i64: 32, 4>}, {pipeline_mode = #tpu.pipeline_mode<synchronous>, transform_indices = @transform_7, window_bounds = array<i64: 1, 4>}, {transform_indices = @transform_8, window_bounds = array<i64: 8, 384>}]} {
    %c0_i32 = arith.constant 0 : i32
    %0 = arith.cmpi eq, %arg1, %c0_i32 : i32
    %1 = arith.extui %0 : i1 to i32
    %c0_i32_0 = arith.constant 0 : i32
    %2 = arith.cmpi ne, %1, %c0_i32_0 : i32
    scf.if %2 {
      %cst_55 = arith.constant 0.000000e+00 : f32
      %180 = vector.broadcast %cst_55 : f32 to vector<8x128xf32>
      %c0_56 = arith.constant 0 : index
      %c0_57 = arith.constant 0 : index
      %181 = vector.load %arg11[%c0_56, %c0_57] : memref<8x128xf32, #tpu.memory_space<vmem>>, vector<8x128xf32>
      tpu.vector_store %arg11[%c0_56, %c0_57], %180 {strides = array<i32>} : memref<8x128xf32, #tpu.memory_space<vmem>>, vector<8x128xf32>,
      %cst_58 = arith.constant 0.000000e+00 : f32
      %182 = vector.broadcast %cst_58 : f32 to vector<8x128xf32>
      %c0_59 = arith.constant 0 : index
      %c0_60 = arith.constant 0 : index
      %183 = vector.load %arg12[%c0_59, %c0_60] : memref<8x128xf32, #tpu.memory_space<vmem>>, vector<8x128xf32>
      tpu.vector_store %arg12[%c0_59, %c0_60], %182 {strides = array<i32>} : memref<8x128xf32, #tpu.memory_space<vmem>>, vector<8x128xf32>,
    } else {
    }
    %c0 = arith.constant 0 : index
    %c0_1 = arith.constant 0 : index
    %3 = vector.load %arg3[%c0, %c0_1] : memref<4x512xf32, #tpu.memory_space<vmem>>, vector<4x512xf32>
    %c0_2 = arith.constant 0 : index
    %c0_3 = arith.constant 0 : index
    %4 = vector.load %arg4[%c0_2, %c0_3] : memref<128x512xf32, #tpu.memory_space<vmem>>, vector<128x512xf32>
    %c0_4 = arith.constant 0 : index
    %c0_5 = arith.constant 0 : index
    %5 = vector.load %arg5[%c0_4, %c0_5] : memref<1x512xf32, #tpu.memory_space<vmem>>, vector<1x512xf32>
    %c0_6 = arith.constant 0 : index
    %c0_7 = arith.constant 0 : index
    %c0_8 = arith.constant 0 : index
    %6 = vector.load %arg2[%c0_6, %c0_7, %c0_8] : memref<8x8x4xf32, #tpu.memory_space<vmem>>, vector<8x8x4xf32>
    %7 = vector.shape_cast %6 : vector<8x8x4xf32> to vector<64x4xf32>
    %cst = arith.constant dense<0.000000e+00> : vector<64x512xf32>
    %8 = tpu.matmul %7, %3, %cst {dimension_numbers = #tpu.dot_dimension_numbers<[1], [0], [0], [1], [0, 0, 1, 1], [], []>} : vector<64x4xf32>, vector<4x512xf32>, vector<64x512xf32> -> vector<64x512xf32>
    %9 = vector.broadcast %5 : vector<1x512xf32> to vector<64x512xf32>
    %10 = arith.addf %8, %9 : vector<64x512xf32>
    %11 = vector.shape_cast %10 : vector<64x512xf32> to vector<8x8x512xf32>
    %c0_9 = arith.constant 0 : index
    %c0_10 = arith.constant 0 : index
    %c0_11 = arith.constant 0 : index
    %12 = vector.load %arg13[%c0_9, %c0_10, %c0_11] : memref<8x8x512xf32, #tpu.memory_space<vmem>>, vector<8x8x512xf32>
    tpu.vector_store %arg13[%c0_9, %c0_10, %c0_11], %11 {strides = array<i32>} : memref<8x8x512xf32, #tpu.memory_space<vmem>>, vector<8x8x512xf32>,
    %c0_12 = arith.constant 0 : index
    %c0_13 = arith.constant 0 : index
    %13 = vector.load %arg11[%c0_12, %c0_13] : memref<8x128xf32, #tpu.memory_space<vmem>>, vector<8x128xf32>
    %c0_14 = arith.constant 0 : index
    %c0_15 = arith.constant 0 : index
    %14 = vector.load %arg12[%c0_14, %c0_15] : memref<8x128xf32, #tpu.memory_space<vmem>>, vector<8x128xf32>
    %c0_16 = arith.constant 0 : index
    %c0_17 = arith.constant 0 : index
    %c0_18 = arith.constant 0 : index
    %15 = vector.load %arg13[%c0_16, %c0_17, %c0_18] : memref<8x8x512xf32, #tpu.memory_space<vmem>>, vector<1x8x512xf32>
    %16 = vector.shape_cast %15 : vector<1x8x512xf32> to vector<8x512xf32>
    %cst_19 = arith.constant dense<0.000000e+00> : vector<8x512xf32>
    %17 = tpu.matmul %13, %4, %cst_19 {dimension_numbers = #tpu.dot_dimension_numbers<[1], [0], [0], [1], [0, 0, 1, 1], [], []>} : vector<8x128xf32>, vector<128x512xf32>, vector<8x512xf32> -> vector<8x512xf32>
    %18 = arith.addf %16, %17 : vector<8x512xf32>
    %19 = vector.extract_strided_slice %18 {offsets = [0, 0], sizes = [8, 384], strides = [1, 1]} : vector<8x512xf32> to vector<8x384xf32>
    %20 = arith.negf %19 : vector<8x384xf32>
    %21 = math.exp %20 : vector<8x384xf32>
    %cst_20 = arith.constant 1.000000e+00 : f32
    %22 = vector.broadcast %cst_20 : f32 to vector<8x384xf32>
    %23 = arith.addf %22, %21 : vector<8x384xf32>
    %24 = arith.divf %22, %23 : vector<8x384xf32>
    %25 = vector.extract_strided_slice %18 {offsets = [0, 384], sizes = [8, 128], strides = [1, 1]} : vector<8x512xf32> to vector<8x128xf32>
    %26 = math.tanh %25 : vector<8x128xf32>
    %27 = vector.extract_strided_slice %24 {offsets = [0, 0], sizes = [8, 128], strides = [1, 1]} : vector<8x384xf32> to vector<8x128xf32>
    %28 = vector.extract_strided_slice %24 {offsets = [0, 128], sizes = [8, 128], strides = [1, 1]} : vector<8x384xf32> to vector<8x128xf32>
    %29 = vector.extract_strided_slice %24 {offsets = [0, 256], sizes = [8, 128], strides = [1, 1]} : vector<8x384xf32> to vector<8x128xf32>
    %30 = arith.mulf %28, %14 : vector<8x128xf32>
    %31 = arith.mulf %27, %26 : vector<8x128xf32>
    %32 = arith.addf %30, %31 : vector<8x128xf32>
    %33 = math.tanh %32 : vector<8x128xf32>
    %34 = arith.mulf %29, %33 : vector<8x128xf32>
    %c1 = arith.constant 1 : index
    %c0_21 = arith.constant 0 : index
    %c0_22 = arith.constant 0 : index
    %35 = vector.load %arg13[%c1, %c0_21, %c0_22] : memref<8x8x512xf32, #tpu.memory_space<vmem>>, vector<1x8x512xf32>
    %36 = vector.shape_cast %35 : vector<1x8x512xf32> to vector<8x512xf32>
    %cst_23 = arith.constant dense<0.000000e+00> : vector<8x512xf32>
    %37 = tpu.matmul %34, %4, %cst_23 {dimension_numbers = #tpu.dot_dimension_numbers<[1], [0], [0], [1], [0, 0, 1, 1], [], []>} : vector<8x128xf32>, vector<128x512xf32>, vector<8x512xf32> -> vector<8x512xf32>
    %38 = arith.addf %36, %37 : vector<8x512xf32>
    %39 = vector.extract_strided_slice %38 {offsets = [0, 0], sizes = [8, 384], strides = [1, 1]} : vector<8x512xf32> to vector<8x384xf32>
    %40 = arith.negf %39 : vector<8x384xf32>
    %41 = math.exp %40 : vector<8x384xf32>
    %cst_24 = arith.constant 1.000000e+00 : f32
    %42 = vector.broadcast %cst_24 : f32 to vector<8x384xf32>
    %43 = arith.addf %42, %41 : vector<8x384xf32>
    %44 = arith.divf %42, %43 : vector<8x384xf32>
    %45 = vector.extract_strided_slice %38 {offsets = [0, 384], sizes = [8, 128], strides = [1, 1]} : vector<8x512xf32> to vector<8x128xf32>
    %46 = math.tanh %45 : vector<8x128xf32>
    %47 = vector.extract_strided_slice %44 {offsets = [0, 0], sizes = [8, 128], strides = [1, 1]} : vector<8x384xf32> to vector<8x128xf32>
    %48 = vector.extract_strided_slice %44 {offsets = [0, 128], sizes = [8, 128], strides = [1, 1]} : vector<8x384xf32> to vector<8x128xf32>
    %49 = vector.extract_strided_slice %44 {offsets = [0, 256], sizes = [8, 128], strides = [1, 1]} : vector<8x384xf32> to vector<8x128xf32>
    %50 = arith.mulf %48, %32 : vector<8x128xf32>
    %51 = arith.mulf %47, %46 : vector<8x128xf32>
    %52 = arith.addf %50, %51 : vector<8x128xf32>
    %53 = math.tanh %52 : vector<8x128xf32>
    %54 = arith.mulf %49, %53 : vector<8x128xf32>
    %c2 = arith.constant 2 : index
    %c0_25 = arith.constant 0 : index
    %c0_26 = arith.constant 0 : index
    %55 = vector.load %arg13[%c2, %c0_25, %c0_26] : memref<8x8x512xf32, #tpu.memory_space<vmem>>, vector<1x8x512xf32>
    %56 = vector.shape_cast %55 : vector<1x8x512xf32> to vector<8x512xf32>
    %cst_27 = arith.constant dense<0.000000e+00> : vector<8x512xf32>
    %57 = tpu.matmul %54, %4, %cst_27 {dimension_numbers = #tpu.dot_dimension_numbers<[1], [0], [0], [1], [0, 0, 1, 1], [], []>} : vector<8x128xf32>, vector<128x512xf32>, vector<8x512xf32> -> vector<8x512xf32>
    %58 = arith.addf %56, %57 : vector<8x512xf32>
    %59 = vector.extract_strided_slice %58 {offsets = [0, 0], sizes = [8, 384], strides = [1, 1]} : vector<8x512xf32> to vector<8x384xf32>
    %60 = arith.negf %59 : vector<8x384xf32>
    %61 = math.exp %60 : vector<8x384xf32>
    %cst_28 = arith.constant 1.000000e+00 : f32
    %62 = vector.broadcast %cst_28 : f32 to vector<8x384xf32>
    %63 = arith.addf %62, %61 : vector<8x384xf32>
    %64 = arith.divf %62, %63 : vector<8x384xf32>
    %65 = vector.extract_strided_slice %58 {offsets = [0, 384], sizes = [8, 128], strides = [1, 1]} : vector<8x512xf32> to vector<8x128xf32>
    %66 = math.tanh %65 : vector<8x128xf32>
    %67 = vector.extract_strided_slice %64 {offsets = [0, 0], sizes = [8, 128], strides = [1, 1]} : vector<8x384xf32> to vector<8x128xf32>
    %68 = vector.extract_strided_slice %64 {offsets = [0, 128], sizes = [8, 128], strides = [1, 1]} : vector<8x384xf32> to vector<8x128xf32>
    %69 = vector.extract_strided_slice %64 {offsets = [0, 256], sizes = [8, 128], strides = [1, 1]} : vector<8x384xf32> to vector<8x128xf32>
    %70 = arith.mulf %68, %52 : vector<8x128xf32>
    %71 = arith.mulf %67, %66 : vector<8x128xf32>
    %72 = arith.addf %70, %71 : vector<8x128xf32>
    %73 = math.tanh %72 : vector<8x128xf32>
    %74 = arith.mulf %69, %73 : vector<8x128xf32>
    %c3 = arith.constant 3 : index
    %c0_29 = arith.constant 0 : index
    %c0_30 = arith.constant 0 : index
    %75 = vector.load %arg13[%c3, %c0_29, %c0_30] : memref<8x8x512xf32, #tpu.memory_space<vmem>>, vector<1x8x512xf32>
    %76 = vector.shape_cast %75 : vector<1x8x512xf32> to vector<8x512xf32>
    %cst_31 = arith.constant dense<0.000000e+00> : vector<8x512xf32>
    %77 = tpu.matmul %74, %4, %cst_31 {dimension_numbers = #tpu.dot_dimension_numbers<[1], [0], [0], [1], [0, 0, 1, 1], [], []>} : vector<8x128xf32>, vector<128x512xf32>, vector<8x512xf32> -> vector<8x512xf32>
    %78 = arith.addf %76, %77 : vector<8x512xf32>
    %79 = vector.extract_strided_slice %78 {offsets = [0, 0], sizes = [8, 384], strides = [1, 1]} : vector<8x512xf32> to vector<8x384xf32>
    %80 = arith.negf %79 : vector<8x384xf32>
    %81 = math.exp %80 : vector<8x384xf32>
    %cst_32 = arith.constant 1.000000e+00 : f32
    %82 = vector.broadcast %cst_32 : f32 to vector<8x384xf32>
    %83 = arith.addf %82, %81 : vector<8x384xf32>
    %84 = arith.divf %82, %83 : vector<8x384xf32>
    %85 = vector.extract_strided_slice %78 {offsets = [0, 384], sizes = [8, 128], strides = [1, 1]} : vector<8x512xf32> to vector<8x128xf32>
    %86 = math.tanh %85 : vector<8x128xf32>
    %87 = vector.extract_strided_slice %84 {offsets = [0, 0], sizes = [8, 128], strides = [1, 1]} : vector<8x384xf32> to vector<8x128xf32>
    %88 = vector.extract_strided_slice %84 {offsets = [0, 128], sizes = [8, 128], strides = [1, 1]} : vector<8x384xf32> to vector<8x128xf32>
    %89 = vector.extract_strided_slice %84 {offsets = [0, 256], sizes = [8, 128], strides = [1, 1]} : vector<8x384xf32> to vector<8x128xf32>
    %90 = arith.mulf %88, %72 : vector<8x128xf32>
    %91 = arith.mulf %87, %86 : vector<8x128xf32>
    %92 = arith.addf %90, %91 : vector<8x128xf32>
    %93 = math.tanh %92 : vector<8x128xf32>
    %94 = arith.mulf %89, %93 : vector<8x128xf32>
    %c4 = arith.constant 4 : index
    %c0_33 = arith.constant 0 : index
    %c0_34 = arith.constant 0 : index
    %95 = vector.load %arg13[%c4, %c0_33, %c0_34] : memref<8x8x512xf32, #tpu.memory_space<vmem>>, vector<1x8x512xf32>
    %96 = vector.shape_cast %95 : vector<1x8x512xf32> to vector<8x512xf32>
    %cst_35 = arith.constant dense<0.000000e+00> : vector<8x512xf32>
    %97 = tpu.matmul %94, %4, %cst_35 {dimension_numbers = #tpu.dot_dimension_numbers<[1], [0], [0], [1], [0, 0, 1, 1], [], []>} : vector<8x128xf32>, vector<128x512xf32>, vector<8x512xf32> -> vector<8x512xf32>
    %98 = arith.addf %96, %97 : vector<8x512xf32>
    %99 = vector.extract_strided_slice %98 {offsets = [0, 0], sizes = [8, 384], strides = [1, 1]} : vector<8x512xf32> to vector<8x384xf32>
    %100 = arith.negf %99 : vector<8x384xf32>
    %101 = math.exp %100 : vector<8x384xf32>
    %cst_36 = arith.constant 1.000000e+00 : f32
    %102 = vector.broadcast %cst_36 : f32 to vector<8x384xf32>
    %103 = arith.addf %102, %101 : vector<8x384xf32>
    %104 = arith.divf %102, %103 : vector<8x384xf32>
    %105 = vector.extract_strided_slice %98 {offsets = [0, 384], sizes = [8, 128], strides = [1, 1]} : vector<8x512xf32> to vector<8x128xf32>
    %106 = math.tanh %105 : vector<8x128xf32>
    %107 = vector.extract_strided_slice %104 {offsets = [0, 0], sizes = [8, 128], strides = [1, 1]} : vector<8x384xf32> to vector<8x128xf32>
    %108 = vector.extract_strided_slice %104 {offsets = [0, 128], sizes = [8, 128], strides = [1, 1]} : vector<8x384xf32> to vector<8x128xf32>
    %109 = vector.extract_strided_slice %104 {offsets = [0, 256], sizes = [8, 128], strides = [1, 1]} : vector<8x384xf32> to vector<8x128xf32>
    %110 = arith.mulf %108, %92 : vector<8x128xf32>
    %111 = arith.mulf %107, %106 : vector<8x128xf32>
    %112 = arith.addf %110, %111 : vector<8x128xf32>
    %113 = math.tanh %112 : vector<8x128xf32>
    %114 = arith.mulf %109, %113 : vector<8x128xf32>
    %c5 = arith.constant 5 : index
    %c0_37 = arith.constant 0 : index
    %c0_38 = arith.constant 0 : index
    %115 = vector.load %arg13[%c5, %c0_37, %c0_38] : memref<8x8x512xf32, #tpu.memory_space<vmem>>, vector<1x8x512xf32>
    %116 = vector.shape_cast %115 : vector<1x8x512xf32> to vector<8x512xf32>
    %cst_39 = arith.constant dense<0.000000e+00> : vector<8x512xf32>
    %117 = tpu.matmul %114, %4, %cst_39 {dimension_numbers = #tpu.dot_dimension_numbers<[1], [0], [0], [1], [0, 0, 1, 1], [], []>} : vector<8x128xf32>, vector<128x512xf32>, vector<8x512xf32> -> vector<8x512xf32>
    %118 = arith.addf %116, %117 : vector<8x512xf32>
    %119 = vector.extract_strided_slice %118 {offsets = [0, 0], sizes = [8, 384], strides = [1, 1]} : vector<8x512xf32> to vector<8x384xf32>
    %120 = arith.negf %119 : vector<8x384xf32>
    %121 = math.exp %120 : vector<8x384xf32>
    %cst_40 = arith.constant 1.000000e+00 : f32
    %122 = vector.broadcast %cst_40 : f32 to vector<8x384xf32>
    %123 = arith.addf %122, %121 : vector<8x384xf32>
    %124 = arith.divf %122, %123 : vector<8x384xf32>
    %125 = vector.extract_strided_slice %118 {offsets = [0, 384], sizes = [8, 128], strides = [1, 1]} : vector<8x512xf32> to vector<8x128xf32>
    %126 = math.tanh %125 : vector<8x128xf32>
    %127 = vector.extract_strided_slice %124 {offsets = [0, 0], sizes = [8, 128], strides = [1, 1]} : vector<8x384xf32> to vector<8x128xf32>
    %128 = vector.extract_strided_slice %124 {offsets = [0, 128], sizes = [8, 128], strides = [1, 1]} : vector<8x384xf32> to vector<8x128xf32>
    %129 = vector.extract_strided_slice %124 {offsets = [0, 256], sizes = [8, 128], strides = [1, 1]} : vector<8x384xf32> to vector<8x128xf32>
    %130 = arith.mulf %128, %112 : vector<8x128xf32>
    %131 = arith.mulf %127, %126 : vector<8x128xf32>
    %132 = arith.addf %130, %131 : vector<8x128xf32>
    %133 = math.tanh %132 : vector<8x128xf32>
    %134 = arith.mulf %129, %133 : vector<8x128xf32>
    %c6 = arith.constant 6 : index
    %c0_41 = arith.constant 0 : index
    %c0_42 = arith.constant 0 : index
    %135 = vector.load %arg13[%c6, %c0_41, %c0_42] : memref<8x8x512xf32, #tpu.memory_space<vmem>>, vector<1x8x512xf32>
    %136 = vector.shape_cast %135 : vector<1x8x512xf32> to vector<8x512xf32>
    %cst_43 = arith.constant dense<0.000000e+00> : vector<8x512xf32>
    %137 = tpu.matmul %134, %4, %cst_43 {dimension_numbers = #tpu.dot_dimension_numbers<[1], [0], [0], [1], [0, 0, 1, 1], [], []>} : vector<8x128xf32>, vector<128x512xf32>, vector<8x512xf32> -> vector<8x512xf32>
    %138 = arith.addf %136, %137 : vector<8x512xf32>
    %139 = vector.extract_strided_slice %138 {offsets = [0, 0], sizes = [8, 384], strides = [1, 1]} : vector<8x512xf32> to vector<8x384xf32>
    %140 = arith.negf %139 : vector<8x384xf32>
    %141 = math.exp %140 : vector<8x384xf32>
    %cst_44 = arith.constant 1.000000e+00 : f32
    %142 = vector.broadcast %cst_44 : f32 to vector<8x384xf32>
    %143 = arith.addf %142, %141 : vector<8x384xf32>
    %144 = arith.divf %142, %143 : vector<8x384xf32>
    %145 = vector.extract_strided_slice %138 {offsets = [0, 384], sizes = [8, 128], strides = [1, 1]} : vector<8x512xf32> to vector<8x128xf32>
    %146 = math.tanh %145 : vector<8x128xf32>
    %147 = vector.extract_strided_slice %144 {offsets = [0, 0], sizes = [8, 128], strides = [1, 1]} : vector<8x384xf32> to vector<8x128xf32>
    %148 = vector.extract_strided_slice %144 {offsets = [0, 128], sizes = [8, 128], strides = [1, 1]} : vector<8x384xf32> to vector<8x128xf32>
    %149 = vector.extract_strided_slice %144 {offsets = [0, 256], sizes = [8, 128], strides = [1, 1]} : vector<8x384xf32> to vector<8x128xf32>
    %150 = arith.mulf %148, %132 : vector<8x128xf32>
    %151 = arith.mulf %147, %146 : vector<8x128xf32>
    %152 = arith.addf %150, %151 : vector<8x128xf32>
    %153 = math.tanh %152 : vector<8x128xf32>
    %154 = arith.mulf %149, %153 : vector<8x128xf32>
    %c7 = arith.constant 7 : index
    %c0_45 = arith.constant 0 : index
    %c0_46 = arith.constant 0 : index
    %155 = vector.load %arg13[%c7, %c0_45, %c0_46] : memref<8x8x512xf32, #tpu.memory_space<vmem>>, vector<1x8x512xf32>
    %156 = vector.shape_cast %155 : vector<1x8x512xf32> to vector<8x512xf32>
    %cst_47 = arith.constant dense<0.000000e+00> : vector<8x512xf32>
    %157 = tpu.matmul %154, %4, %cst_47 {dimension_numbers = #tpu.dot_dimension_numbers<[1], [0], [0], [1], [0, 0, 1, 1], [], []>} : vector<8x128xf32>, vector<128x512xf32>, vector<8x512xf32> -> vector<8x512xf32>
    %158 = arith.addf %156, %157 : vector<8x512xf32>
    %159 = vector.extract_strided_slice %158 {offsets = [0, 0], sizes = [8, 384], strides = [1, 1]} : vector<8x512xf32> to vector<8x384xf32>
    %160 = arith.negf %159 : vector<8x384xf32>
    %161 = math.exp %160 : vector<8x384xf32>
    %cst_48 = arith.constant 1.000000e+00 : f32
    %162 = vector.broadcast %cst_48 : f32 to vector<8x384xf32>
    %163 = arith.addf %162, %161 : vector<8x384xf32>
    %164 = arith.divf %162, %163 : vector<8x384xf32>
    %165 = vector.extract_strided_slice %158 {offsets = [0, 384], sizes = [8, 128], strides = [1, 1]} : vector<8x512xf32> to vector<8x128xf32>
    %166 = math.tanh %165 : vector<8x128xf32>
    %167 = vector.extract_strided_slice %164 {offsets = [0, 0], sizes = [8, 128], strides = [1, 1]} : vector<8x384xf32> to vector<8x128xf32>
    %168 = vector.extract_strided_slice %164 {offsets = [0, 128], sizes = [8, 128], strides = [1, 1]} : vector<8x384xf32> to vector<8x128xf32>
    %169 = vector.extract_strided_slice %164 {offsets = [0, 256], sizes = [8, 128], strides = [1, 1]} : vector<8x384xf32> to vector<8x128xf32>
    %170 = arith.mulf %168, %152 : vector<8x128xf32>
    %171 = arith.mulf %167, %166 : vector<8x128xf32>
    %172 = arith.addf %170, %171 : vector<8x128xf32>
    %173 = math.tanh %172 : vector<8x128xf32>
    %174 = arith.mulf %169, %173 : vector<8x128xf32>
    %c0_49 = arith.constant 0 : index
    %c0_50 = arith.constant 0 : index
    %175 = vector.load %arg11[%c0_49, %c0_50] : memref<8x128xf32, #tpu.memory_space<vmem>>, vector<8x128xf32>
    tpu.vector_store %arg11[%c0_49, %c0_50], %174 {strides = array<i32>} : memref<8x128xf32, #tpu.memory_space<vmem>>, vector<8x128xf32>,
    %c0_51 = arith.constant 0 : index
    %c0_52 = arith.constant 0 : index
    %176 = vector.load %arg12[%c0_51, %c0_52] : memref<8x128xf32, #tpu.memory_space<vmem>>, vector<8x128xf32>
    tpu.vector_store %arg12[%c0_51, %c0_52], %172 {strides = array<i32>} : memref<8x128xf32, #tpu.memory_space<vmem>>, vector<8x128xf32>,
    %c0_i32_53 = arith.constant 0 : i32
    %177 = arith.cmpi eq, %arg1, %c0_i32_53 : i32
    %178 = arith.extui %177 : i1 to i32
    %c0_i32_54 = arith.constant 0 : i32
    %179 = arith.cmpi ne, %178, %c0_i32_54 : i32
    scf.if %179 {
      %c0_55 = arith.constant 0 : index
      %c0_56 = arith.constant 0 : index
      %180 = vector.load %arg6[%c0_55, %c0_56] : memref<128x32xf32, #tpu.memory_space<vmem>>, vector<128x32xf32>
      %cst_57 = arith.constant dense<0.000000e+00> : vector<8x32xf32>
      %181 = tpu.matmul %174, %180, %cst_57 {dimension_numbers = #tpu.dot_dimension_numbers<[1], [0], [0], [1], [0, 0, 1, 1], [], []>} : vector<8x128xf32>, vector<128x32xf32>, vector<8x32xf32> -> vector<8x32xf32>
      %c0_58 = arith.constant 0 : index
      %c0_59 = arith.constant 0 : index
      %182 = vector.load %arg7[%c0_58, %c0_59] : memref<1x32xf32, #tpu.memory_space<vmem>>, vector<1x32xf32>
      %183 = vector.broadcast %182 : vector<1x32xf32> to vector<8x32xf32>
      %184 = arith.addf %181, %183 : vector<8x32xf32>
      %cst_60 = arith.constant 0.000000e+00 : f32
      %185 = vector.broadcast %cst_60 : f32 to vector<8x32xf32>
      %186 = arith.maximumf %184, %185 : vector<8x32xf32>
      %c0_61 = arith.constant 0 : index
      %c0_62 = arith.constant 0 : index
      %187 = vector.load %arg8[%c0_61, %c0_62] : memref<32x4xf32, #tpu.memory_space<vmem>>, vector<32x4xf32>
      %cst_63 = arith.constant dense<0.000000e+00> : vector<8x4xf32>
      %188 = tpu.matmul %186, %187, %cst_63 {dimension_numbers = #tpu.dot_dimension_numbers<[1], [0], [0], [1], [0, 0, 1, 1], [], []>} : vector<8x32xf32>, vector<32x4xf32>, vector<8x4xf32> -> vector<8x4xf32>
      %c0_64 = arith.constant 0 : index
      %c0_65 = arith.constant 0 : index
      %189 = vector.load %arg9[%c0_64, %c0_65] : memref<1x4xf32, #tpu.memory_space<vmem>>, vector<1x4xf32>
      %190 = vector.broadcast %189 : vector<1x4xf32> to vector<8x4xf32>
      %191 = arith.addf %188, %190 : vector<8x4xf32>
      %cst_66 = arith.constant 0.000000e+00 : f32
      %192 = vector.broadcast %cst_66 : f32 to vector<8x124xf32>
      %193 = tpu.concatenate %191, %192, %174, %172 in 1 : vector<8x4xf32>, vector<8x124xf32>, vector<8x128xf32>, vector<8x128xf32> -> vector<8x384xf32>
      %c0_67 = arith.constant 0 : index
      %c0_68 = arith.constant 0 : index
      %194 = vector.load %arg10[%c0_67, %c0_68] : memref<8x384xf32, #tpu.memory_space<vmem>>, vector<8x384xf32>
      tpu.vector_store %arg10[%c0_67, %c0_68], %193 {strides = array<i32>} : memref<8x384xf32, #tpu.memory_space<vmem>>, vector<8x384xf32>,
    } else {
    }
    return
  }
  func.func @transform_0(%arg0: i32, %arg1: i32) -> (i32, i32, i32) {
    %c0_i32 = arith.constant 0 : i32
    %c0_i32_0 = arith.constant 0 : i32
    return %arg1, %arg0, %c0_i32 : i32, i32, i32
  }
  func.func @transform_1(%arg0: i32, %arg1: i32) -> (i32, i32) {
    %c0_i32 = arith.constant 0 : i32
    %c0_i32_0 = arith.constant 0 : i32
    %c0_i32_1 = arith.constant 0 : i32
    return %c0_i32, %c0_i32_0 : i32, i32
  }
  func.func @transform_2(%arg0: i32, %arg1: i32) -> (i32, i32) {
    %c0_i32 = arith.constant 0 : i32
    %c0_i32_0 = arith.constant 0 : i32
    %c0_i32_1 = arith.constant 0 : i32
    return %c0_i32, %c0_i32_0 : i32, i32
  }
  func.func @transform_3(%arg0: i32, %arg1: i32) -> (i32, i32) {
    %c0_i32 = arith.constant 0 : i32
    %c0_i32_0 = arith.constant 0 : i32
    %c0_i32_1 = arith.constant 0 : i32
    return %c0_i32, %c0_i32_0 : i32, i32
  }
  func.func @transform_4(%arg0: i32, %arg1: i32) -> (i32, i32) {
    %c0_i32 = arith.constant 0 : i32
    %c0_i32_0 = arith.constant 0 : i32
    %c0_i32_1 = arith.constant 0 : i32
    return %c0_i32, %c0_i32_0 : i32, i32
  }
  func.func @transform_5(%arg0: i32, %arg1: i32) -> (i32, i32) {
    %c0_i32 = arith.constant 0 : i32
    %c0_i32_0 = arith.constant 0 : i32
    %c0_i32_1 = arith.constant 0 : i32
    return %c0_i32, %c0_i32_0 : i32, i32
  }
  func.func @transform_6(%arg0: i32, %arg1: i32) -> (i32, i32) {
    %c0_i32 = arith.constant 0 : i32
    %c0_i32_0 = arith.constant 0 : i32
    %c0_i32_1 = arith.constant 0 : i32
    return %c0_i32, %c0_i32_0 : i32, i32
  }
  func.func @transform_7(%arg0: i32, %arg1: i32) -> (i32, i32) {
    %c0_i32 = arith.constant 0 : i32
    %c0_i32_0 = arith.constant 0 : i32
    %c0_i32_1 = arith.constant 0 : i32
    return %c0_i32, %c0_i32_0 : i32, i32
  }
  func.func @transform_8(%arg0: i32, %arg1: i32) -> (i32, i32) {
    %c0_i32 = arith.constant 0 : i32
    %c0_i32_0 = arith.constant 0 : i32
    return %arg0, %c0_i32 : i32, i32
  }
}

module attributes {stable_mosaic.version = 11 : i64} {
  func.func @_meta_arch_kernel(%arg0: i32, %arg1: i32, %arg2: memref<8x8x4xf32, #tpu.memory_space<vmem>>, %arg3: memref<4x512xf32, #tpu.memory_space<vmem>>, %arg4: memref<128x512xf32, #tpu.memory_space<vmem>>, %arg5: memref<1x512xf32, #tpu.memory_space<vmem>>, %arg6: memref<128x32xf32, #tpu.memory_space<vmem>>, %arg7: memref<1x32xf32, #tpu.memory_space<vmem>>, %arg8: memref<32x4xf32, #tpu.memory_space<vmem>>, %arg9: memref<1x4xf32, #tpu.memory_space<vmem>>, %arg10: memref<8x384xf32, #tpu.memory_space<vmem>>, %arg11: memref<8x128xf32, #tpu.memory_space<vmem>>, %arg12: memref<8x128xf32, #tpu.memory_space<vmem>>, %arg13: memref<8x8x512xf32, #tpu.memory_space<vmem>>) attributes {dimension_semantics = [#tpu.dimension_semantics<parallel>, #tpu.dimension_semantics<arbitrary>], iteration_bounds = array<i64: 1, 1>, scalar_prefetch = 0 : i64, scratch_operands = 3 : i64, tpu.core_type = #tpu.core_type<tc>, window_params = [{transform_indices = @transform_0, window_bounds = array<i64: 8, 8, 4>}, {pipeline_mode = #tpu.pipeline_mode<synchronous>, transform_indices = @transform_1, window_bounds = array<i64: 4, 512>}, {pipeline_mode = #tpu.pipeline_mode<synchronous>, transform_indices = @transform_2, window_bounds = array<i64: 128, 512>}, {pipeline_mode = #tpu.pipeline_mode<synchronous>, transform_indices = @transform_3, window_bounds = array<i64: 1, 512>}, {pipeline_mode = #tpu.pipeline_mode<synchronous>, transform_indices = @transform_4, window_bounds = array<i64: 128, 32>}, {pipeline_mode = #tpu.pipeline_mode<synchronous>, transform_indices = @transform_5, window_bounds = array<i64: 1, 32>}, {pipeline_mode = #tpu.pipeline_mode<synchronous>, transform_indices = @transform_6, window_bounds = array<i64: 32, 4>}, {pipeline_mode = #tpu.pipeline_mode<synchronous>, transform_indices = @transform_7, window_bounds = array<i64: 1, 4>}, {transform_indices = @transform_8, window_bounds = array<i64: 8, 384>}]} {
    %c0_i32 = arith.constant 0 : i32
    %0 = arith.cmpi eq, %arg1, %c0_i32 : i32
    %1 = arith.extui %0 : i1 to i32
    %c0_i32_0 = arith.constant 0 : i32
    %2 = arith.cmpi ne, %1, %c0_i32_0 : i32
    scf.if %2 {
      %cst_55 = arith.constant 0.000000e+00 : f32
      %180 = vector.broadcast %cst_55 : f32 to vector<8x128xf32>
      %c0_56 = arith.constant 0 : index
      %c0_57 = arith.constant 0 : index
      %181 = vector.load %arg11[%c0_56, %c0_57] : memref<8x128xf32, #tpu.memory_space<vmem>>, vector<8x128xf32>
      tpu.vector_store %arg11[%c0_56, %c0_57], %180 {strides = array<i32>} : memref<8x128xf32, #tpu.memory_space<vmem>>, vector<8x128xf32>,
      %cst_58 = arith.constant 0.000000e+00 : f32
      %182 = vector.broadcast %cst_58 : f32 to vector<8x128xf32>
      %c0_59 = arith.constant 0 : index
      %c0_60 = arith.constant 0 : index
      %183 = vector.load %arg12[%c0_59, %c0_60] : memref<8x128xf32, #tpu.memory_space<vmem>>, vector<8x128xf32>
      tpu.vector_store %arg12[%c0_59, %c0_60], %182 {strides = array<i32>} : memref<8x128xf32, #tpu.memory_space<vmem>>, vector<8x128xf32>,
    } else {
    }
    %c0 = arith.constant 0 : index
    %c0_1 = arith.constant 0 : index
    %3 = vector.load %arg3[%c0, %c0_1] : memref<4x512xf32, #tpu.memory_space<vmem>>, vector<4x512xf32>
    %c0_2 = arith.constant 0 : index
    %c0_3 = arith.constant 0 : index
    %4 = vector.load %arg4[%c0_2, %c0_3] : memref<128x512xf32, #tpu.memory_space<vmem>>, vector<128x512xf32>
    %c0_4 = arith.constant 0 : index
    %c0_5 = arith.constant 0 : index
    %5 = vector.load %arg5[%c0_4, %c0_5] : memref<1x512xf32, #tpu.memory_space<vmem>>, vector<1x512xf32>
    %c0_6 = arith.constant 0 : index
    %c0_7 = arith.constant 0 : index
    %c0_8 = arith.constant 0 : index
    %6 = vector.load %arg2[%c0_6, %c0_7, %c0_8] : memref<8x8x4xf32, #tpu.memory_space<vmem>>, vector<8x8x4xf32>
    %7 = vector.shape_cast %6 : vector<8x8x4xf32> to vector<64x4xf32>
    %cst = arith.constant dense<0.000000e+00> : vector<64x512xf32>
    %8 = tpu.matmul %7, %3, %cst {dimension_numbers = #tpu.dot_dimension_numbers<[1], [0], [0], [1], [0, 0, 1, 1], [], []>} : vector<64x4xf32>, vector<4x512xf32>, vector<64x512xf32> -> vector<64x512xf32>
    %9 = vector.broadcast %5 : vector<1x512xf32> to vector<64x512xf32>
    %10 = arith.addf %8, %9 : vector<64x512xf32>
    %11 = vector.shape_cast %10 : vector<64x512xf32> to vector<8x8x512xf32>
    %c0_9 = arith.constant 0 : index
    %c0_10 = arith.constant 0 : index
    %c0_11 = arith.constant 0 : index
    %12 = vector.load %arg13[%c0_9, %c0_10, %c0_11] : memref<8x8x512xf32, #tpu.memory_space<vmem>>, vector<8x8x512xf32>
    tpu.vector_store %arg13[%c0_9, %c0_10, %c0_11], %11 {strides = array<i32>} : memref<8x8x512xf32, #tpu.memory_space<vmem>>, vector<8x8x512xf32>,
    %c0_12 = arith.constant 0 : index
    %c0_13 = arith.constant 0 : index
    %13 = vector.load %arg11[%c0_12, %c0_13] : memref<8x128xf32, #tpu.memory_space<vmem>>, vector<8x128xf32>
    %c0_14 = arith.constant 0 : index
    %c0_15 = arith.constant 0 : index
    %14 = vector.load %arg12[%c0_14, %c0_15] : memref<8x128xf32, #tpu.memory_space<vmem>>, vector<8x128xf32>
    %c0_16 = arith.constant 0 : index
    %c0_17 = arith.constant 0 : index
    %c0_18 = arith.constant 0 : index
    %15 = vector.load %arg13[%c0_16, %c0_17, %c0_18] : memref<8x8x512xf32, #tpu.memory_space<vmem>>, vector<1x8x512xf32>
    %16 = vector.shape_cast %15 : vector<1x8x512xf32> to vector<8x512xf32>
    %cst_19 = arith.constant dense<0.000000e+00> : vector<8x512xf32>
    %17 = tpu.matmul %13, %4, %cst_19 {dimension_numbers = #tpu.dot_dimension_numbers<[1], [0], [0], [1], [0, 0, 1, 1], [], []>} : vector<8x128xf32>, vector<128x512xf32>, vector<8x512xf32> -> vector<8x512xf32>
    %18 = arith.addf %16, %17 : vector<8x512xf32>
    %19 = vector.extract_strided_slice %18 {offsets = [0, 0], sizes = [8, 384], strides = [1, 1]} : vector<8x512xf32> to vector<8x384xf32>
    %20 = arith.negf %19 : vector<8x384xf32>
    %21 = math.exp %20 : vector<8x384xf32>
    %cst_20 = arith.constant 1.000000e+00 : f32
    %22 = vector.broadcast %cst_20 : f32 to vector<8x384xf32>
    %23 = arith.addf %22, %21 : vector<8x384xf32>
    %24 = arith.divf %22, %23 : vector<8x384xf32>
    %25 = vector.extract_strided_slice %18 {offsets = [0, 384], sizes = [8, 128], strides = [1, 1]} : vector<8x512xf32> to vector<8x128xf32>
    %26 = math.tanh %25 : vector<8x128xf32>
    %27 = vector.extract_strided_slice %24 {offsets = [0, 0], sizes = [8, 128], strides = [1, 1]} : vector<8x384xf32> to vector<8x128xf32>
    %28 = vector.extract_strided_slice %24 {offsets = [0, 128], sizes = [8, 128], strides = [1, 1]} : vector<8x384xf32> to vector<8x128xf32>
    %29 = vector.extract_strided_slice %24 {offsets = [0, 256], sizes = [8, 128], strides = [1, 1]} : vector<8x384xf32> to vector<8x128xf32>
    %30 = arith.mulf %28, %14 : vector<8x128xf32>
    %31 = arith.mulf %27, %26 : vector<8x128xf32>
    %32 = arith.addf %30, %31 : vector<8x128xf32>
    %33 = math.tanh %32 : vector<8x128xf32>
    %34 = arith.mulf %29, %33 : vector<8x128xf32>
    %c1 = arith.constant 1 : index
    %c0_21 = arith.constant 0 : index
    %c0_22 = arith.constant 0 : index
    %35 = vector.load %arg13[%c1, %c0_21, %c0_22] : memref<8x8x512xf32, #tpu.memory_space<vmem>>, vector<1x8x512xf32>
    %36 = vector.shape_cast %35 : vector<1x8x512xf32> to vector<8x512xf32>
    %cst_23 = arith.constant dense<0.000000e+00> : vector<8x512xf32>
    %37 = tpu.matmul %34, %4, %cst_23 {dimension_numbers = #tpu.dot_dimension_numbers<[1], [0], [0], [1], [0, 0, 1, 1], [], []>} : vector<8x128xf32>, vector<128x512xf32>, vector<8x512xf32> -> vector<8x512xf32>
    %38 = arith.addf %36, %37 : vector<8x512xf32>
    %39 = vector.extract_strided_slice %38 {offsets = [0, 0], sizes = [8, 384], strides = [1, 1]} : vector<8x512xf32> to vector<8x384xf32>
    %40 = arith.negf %39 : vector<8x384xf32>
    %41 = math.exp %40 : vector<8x384xf32>
    %cst_24 = arith.constant 1.000000e+00 : f32
    %42 = vector.broadcast %cst_24 : f32 to vector<8x384xf32>
    %43 = arith.addf %42, %41 : vector<8x384xf32>
    %44 = arith.divf %42, %43 : vector<8x384xf32>
    %45 = vector.extract_strided_slice %38 {offsets = [0, 384], sizes = [8, 128], strides = [1, 1]} : vector<8x512xf32> to vector<8x128xf32>
    %46 = math.tanh %45 : vector<8x128xf32>
    %47 = vector.extract_strided_slice %44 {offsets = [0, 0], sizes = [8, 128], strides = [1, 1]} : vector<8x384xf32> to vector<8x128xf32>
    %48 = vector.extract_strided_slice %44 {offsets = [0, 128], sizes = [8, 128], strides = [1, 1]} : vector<8x384xf32> to vector<8x128xf32>
    %49 = vector.extract_strided_slice %44 {offsets = [0, 256], sizes = [8, 128], strides = [1, 1]} : vector<8x384xf32> to vector<8x128xf32>
    %50 = arith.mulf %48, %32 : vector<8x128xf32>
    %51 = arith.mulf %47, %46 : vector<8x128xf32>
    %52 = arith.addf %50, %51 : vector<8x128xf32>
    %53 = math.tanh %52 : vector<8x128xf32>
    %54 = arith.mulf %49, %53 : vector<8x128xf32>
    %c2 = arith.constant 2 : index
    %c0_25 = arith.constant 0 : index
    %c0_26 = arith.constant 0 : index
    %55 = vector.load %arg13[%c2, %c0_25, %c0_26] : memref<8x8x512xf32, #tpu.memory_space<vmem>>, vector<1x8x512xf32>
    %56 = vector.shape_cast %55 : vector<1x8x512xf32> to vector<8x512xf32>
    %cst_27 = arith.constant dense<0.000000e+00> : vector<8x512xf32>
    %57 = tpu.matmul %54, %4, %cst_27 {dimension_numbers = #tpu.dot_dimension_numbers<[1], [0], [0], [1], [0, 0, 1, 1], [], []>} : vector<8x128xf32>, vector<128x512xf32>, vector<8x512xf32> -> vector<8x512xf32>
    %58 = arith.addf %56, %57 : vector<8x512xf32>
    %59 = vector.extract_strided_slice %58 {offsets = [0, 0], sizes = [8, 384], strides = [1, 1]} : vector<8x512xf32> to vector<8x384xf32>
    %60 = arith.negf %59 : vector<8x384xf32>
    %61 = math.exp %60 : vector<8x384xf32>
    %cst_28 = arith.constant 1.000000e+00 : f32
    %62 = vector.broadcast %cst_28 : f32 to vector<8x384xf32>
    %63 = arith.addf %62, %61 : vector<8x384xf32>
    %64 = arith.divf %62, %63 : vector<8x384xf32>
    %65 = vector.extract_strided_slice %58 {offsets = [0, 384], sizes = [8, 128], strides = [1, 1]} : vector<8x512xf32> to vector<8x128xf32>
    %66 = math.tanh %65 : vector<8x128xf32>
    %67 = vector.extract_strided_slice %64 {offsets = [0, 0], sizes = [8, 128], strides = [1, 1]} : vector<8x384xf32> to vector<8x128xf32>
    %68 = vector.extract_strided_slice %64 {offsets = [0, 128], sizes = [8, 128], strides = [1, 1]} : vector<8x384xf32> to vector<8x128xf32>
    %69 = vector.extract_strided_slice %64 {offsets = [0, 256], sizes = [8, 128], strides = [1, 1]} : vector<8x384xf32> to vector<8x128xf32>
    %70 = arith.mulf %68, %52 : vector<8x128xf32>
    %71 = arith.mulf %67, %66 : vector<8x128xf32>
    %72 = arith.addf %70, %71 : vector<8x128xf32>
    %73 = math.tanh %72 : vector<8x128xf32>
    %74 = arith.mulf %69, %73 : vector<8x128xf32>
    %c3 = arith.constant 3 : index
    %c0_29 = arith.constant 0 : index
    %c0_30 = arith.constant 0 : index
    %75 = vector.load %arg13[%c3, %c0_29, %c0_30] : memref<8x8x512xf32, #tpu.memory_space<vmem>>, vector<1x8x512xf32>
    %76 = vector.shape_cast %75 : vector<1x8x512xf32> to vector<8x512xf32>
    %cst_31 = arith.constant dense<0.000000e+00> : vector<8x512xf32>
    %77 = tpu.matmul %74, %4, %cst_31 {dimension_numbers = #tpu.dot_dimension_numbers<[1], [0], [0], [1], [0, 0, 1, 1], [], []>} : vector<8x128xf32>, vector<128x512xf32>, vector<8x512xf32> -> vector<8x512xf32>
    %78 = arith.addf %76, %77 : vector<8x512xf32>
    %79 = vector.extract_strided_slice %78 {offsets = [0, 0], sizes = [8, 384], strides = [1, 1]} : vector<8x512xf32> to vector<8x384xf32>
    %80 = arith.negf %79 : vector<8x384xf32>
    %81 = math.exp %80 : vector<8x384xf32>
    %cst_32 = arith.constant 1.000000e+00 : f32
    %82 = vector.broadcast %cst_32 : f32 to vector<8x384xf32>
    %83 = arith.addf %82, %81 : vector<8x384xf32>
    %84 = arith.divf %82, %83 : vector<8x384xf32>
    %85 = vector.extract_strided_slice %78 {offsets = [0, 384], sizes = [8, 128], strides = [1, 1]} : vector<8x512xf32> to vector<8x128xf32>
    %86 = math.tanh %85 : vector<8x128xf32>
    %87 = vector.extract_strided_slice %84 {offsets = [0, 0], sizes = [8, 128], strides = [1, 1]} : vector<8x384xf32> to vector<8x128xf32>
    %88 = vector.extract_strided_slice %84 {offsets = [0, 128], sizes = [8, 128], strides = [1, 1]} : vector<8x384xf32> to vector<8x128xf32>
    %89 = vector.extract_strided_slice %84 {offsets = [0, 256], sizes = [8, 128], strides = [1, 1]} : vector<8x384xf32> to vector<8x128xf32>
    %90 = arith.mulf %88, %72 : vector<8x128xf32>
    %91 = arith.mulf %87, %86 : vector<8x128xf32>
    %92 = arith.addf %90, %91 : vector<8x128xf32>
    %93 = math.tanh %92 : vector<8x128xf32>
    %94 = arith.mulf %89, %93 : vector<8x128xf32>
    %c4 = arith.constant 4 : index
    %c0_33 = arith.constant 0 : index
    %c0_34 = arith.constant 0 : index
    %95 = vector.load %arg13[%c4, %c0_33, %c0_34] : memref<8x8x512xf32, #tpu.memory_space<vmem>>, vector<1x8x512xf32>
    %96 = vector.shape_cast %95 : vector<1x8x512xf32> to vector<8x512xf32>
    %cst_35 = arith.constant dense<0.000000e+00> : vector<8x512xf32>
    %97 = tpu.matmul %94, %4, %cst_35 {dimension_numbers = #tpu.dot_dimension_numbers<[1], [0], [0], [1], [0, 0, 1, 1], [], []>} : vector<8x128xf32>, vector<128x512xf32>, vector<8x512xf32> -> vector<8x512xf32>
    %98 = arith.addf %96, %97 : vector<8x512xf32>
    %99 = vector.extract_strided_slice %98 {offsets = [0, 0], sizes = [8, 384], strides = [1, 1]} : vector<8x512xf32> to vector<8x384xf32>
    %100 = arith.negf %99 : vector<8x384xf32>
    %101 = math.exp %100 : vector<8x384xf32>
    %cst_36 = arith.constant 1.000000e+00 : f32
    %102 = vector.broadcast %cst_36 : f32 to vector<8x384xf32>
    %103 = arith.addf %102, %101 : vector<8x384xf32>
    %104 = arith.divf %102, %103 : vector<8x384xf32>
    %105 = vector.extract_strided_slice %98 {offsets = [0, 384], sizes = [8, 128], strides = [1, 1]} : vector<8x512xf32> to vector<8x128xf32>
    %106 = math.tanh %105 : vector<8x128xf32>
    %107 = vector.extract_strided_slice %104 {offsets = [0, 0], sizes = [8, 128], strides = [1, 1]} : vector<8x384xf32> to vector<8x128xf32>
    %108 = vector.extract_strided_slice %104 {offsets = [0, 128], sizes = [8, 128], strides = [1, 1]} : vector<8x384xf32> to vector<8x128xf32>
    %109 = vector.extract_strided_slice %104 {offsets = [0, 256], sizes = [8, 128], strides = [1, 1]} : vector<8x384xf32> to vector<8x128xf32>
    %110 = arith.mulf %108, %92 : vector<8x128xf32>
    %111 = arith.mulf %107, %106 : vector<8x128xf32>
    %112 = arith.addf %110, %111 : vector<8x128xf32>
    %113 = math.tanh %112 : vector<8x128xf32>
    %114 = arith.mulf %109, %113 : vector<8x128xf32>
    %c5 = arith.constant 5 : index
    %c0_37 = arith.constant 0 : index
    %c0_38 = arith.constant 0 : index
    %115 = vector.load %arg13[%c5, %c0_37, %c0_38] : memref<8x8x512xf32, #tpu.memory_space<vmem>>, vector<1x8x512xf32>
    %116 = vector.shape_cast %115 : vector<1x8x512xf32> to vector<8x512xf32>
    %cst_39 = arith.constant dense<0.000000e+00> : vector<8x512xf32>
    %117 = tpu.matmul %114, %4, %cst_39 {dimension_numbers = #tpu.dot_dimension_numbers<[1], [0], [0], [1], [0, 0, 1, 1], [], []>} : vector<8x128xf32>, vector<128x512xf32>, vector<8x512xf32> -> vector<8x512xf32>
    %118 = arith.addf %116, %117 : vector<8x512xf32>
    %119 = vector.extract_strided_slice %118 {offsets = [0, 0], sizes = [8, 384], strides = [1, 1]} : vector<8x512xf32> to vector<8x384xf32>
    %120 = arith.negf %119 : vector<8x384xf32>
    %121 = math.exp %120 : vector<8x384xf32>
    %cst_40 = arith.constant 1.000000e+00 : f32
    %122 = vector.broadcast %cst_40 : f32 to vector<8x384xf32>
    %123 = arith.addf %122, %121 : vector<8x384xf32>
    %124 = arith.divf %122, %123 : vector<8x384xf32>
    %125 = vector.extract_strided_slice %118 {offsets = [0, 384], sizes = [8, 128], strides = [1, 1]} : vector<8x512xf32> to vector<8x128xf32>
    %126 = math.tanh %125 : vector<8x128xf32>
    %127 = vector.extract_strided_slice %124 {offsets = [0, 0], sizes = [8, 128], strides = [1, 1]} : vector<8x384xf32> to vector<8x128xf32>
    %128 = vector.extract_strided_slice %124 {offsets = [0, 128], sizes = [8, 128], strides = [1, 1]} : vector<8x384xf32> to vector<8x128xf32>
    %129 = vector.extract_strided_slice %124 {offsets = [0, 256], sizes = [8, 128], strides = [1, 1]} : vector<8x384xf32> to vector<8x128xf32>
    %130 = arith.mulf %128, %112 : vector<8x128xf32>
    %131 = arith.mulf %127, %126 : vector<8x128xf32>
    %132 = arith.addf %130, %131 : vector<8x128xf32>
    %133 = math.tanh %132 : vector<8x128xf32>
    %134 = arith.mulf %129, %133 : vector<8x128xf32>
    %c6 = arith.constant 6 : index
    %c0_41 = arith.constant 0 : index
    %c0_42 = arith.constant 0 : index
    %135 = vector.load %arg13[%c6, %c0_41, %c0_42] : memref<8x8x512xf32, #tpu.memory_space<vmem>>, vector<1x8x512xf32>
    %136 = vector.shape_cast %135 : vector<1x8x512xf32> to vector<8x512xf32>
    %cst_43 = arith.constant dense<0.000000e+00> : vector<8x512xf32>
    %137 = tpu.matmul %134, %4, %cst_43 {dimension_numbers = #tpu.dot_dimension_numbers<[1], [0], [0], [1], [0, 0, 1, 1], [], []>} : vector<8x128xf32>, vector<128x512xf32>, vector<8x512xf32> -> vector<8x512xf32>
    %138 = arith.addf %136, %137 : vector<8x512xf32>
    %139 = vector.extract_strided_slice %138 {offsets = [0, 0], sizes = [8, 384], strides = [1, 1]} : vector<8x512xf32> to vector<8x384xf32>
    %140 = arith.negf %139 : vector<8x384xf32>
    %141 = math.exp %140 : vector<8x384xf32>
    %cst_44 = arith.constant 1.000000e+00 : f32
    %142 = vector.broadcast %cst_44 : f32 to vector<8x384xf32>
    %143 = arith.addf %142, %141 : vector<8x384xf32>
    %144 = arith.divf %142, %143 : vector<8x384xf32>
    %145 = vector.extract_strided_slice %138 {offsets = [0, 384], sizes = [8, 128], strides = [1, 1]} : vector<8x512xf32> to vector<8x128xf32>
    %146 = math.tanh %145 : vector<8x128xf32>
    %147 = vector.extract_strided_slice %144 {offsets = [0, 0], sizes = [8, 128], strides = [1, 1]} : vector<8x384xf32> to vector<8x128xf32>
    %148 = vector.extract_strided_slice %144 {offsets = [0, 128], sizes = [8, 128], strides = [1, 1]} : vector<8x384xf32> to vector<8x128xf32>
    %149 = vector.extract_strided_slice %144 {offsets = [0, 256], sizes = [8, 128], strides = [1, 1]} : vector<8x384xf32> to vector<8x128xf32>
    %150 = arith.mulf %148, %132 : vector<8x128xf32>
    %151 = arith.mulf %147, %146 : vector<8x128xf32>
    %152 = arith.addf %150, %151 : vector<8x128xf32>
    %153 = math.tanh %152 : vector<8x128xf32>
    %154 = arith.mulf %149, %153 : vector<8x128xf32>
    %c7 = arith.constant 7 : index
    %c0_45 = arith.constant 0 : index
    %c0_46 = arith.constant 0 : index
    %155 = vector.load %arg13[%c7, %c0_45, %c0_46] : memref<8x8x512xf32, #tpu.memory_space<vmem>>, vector<1x8x512xf32>
    %156 = vector.shape_cast %155 : vector<1x8x512xf32> to vector<8x512xf32>
    %cst_47 = arith.constant dense<0.000000e+00> : vector<8x512xf32>
    %157 = tpu.matmul %154, %4, %cst_47 {dimension_numbers = #tpu.dot_dimension_numbers<[1], [0], [0], [1], [0, 0, 1, 1], [], []>} : vector<8x128xf32>, vector<128x512xf32>, vector<8x512xf32> -> vector<8x512xf32>
    %158 = arith.addf %156, %157 : vector<8x512xf32>
    %159 = vector.extract_strided_slice %158 {offsets = [0, 0], sizes = [8, 384], strides = [1, 1]} : vector<8x512xf32> to vector<8x384xf32>
    %160 = arith.negf %159 : vector<8x384xf32>
    %161 = math.exp %160 : vector<8x384xf32>
    %cst_48 = arith.constant 1.000000e+00 : f32
    %162 = vector.broadcast %cst_48 : f32 to vector<8x384xf32>
    %163 = arith.addf %162, %161 : vector<8x384xf32>
    %164 = arith.divf %162, %163 : vector<8x384xf32>
    %165 = vector.extract_strided_slice %158 {offsets = [0, 384], sizes = [8, 128], strides = [1, 1]} : vector<8x512xf32> to vector<8x128xf32>
    %166 = math.tanh %165 : vector<8x128xf32>
    %167 = vector.extract_strided_slice %164 {offsets = [0, 0], sizes = [8, 128], strides = [1, 1]} : vector<8x384xf32> to vector<8x128xf32>
    %168 = vector.extract_strided_slice %164 {offsets = [0, 128], sizes = [8, 128], strides = [1, 1]} : vector<8x384xf32> to vector<8x128xf32>
    %169 = vector.extract_strided_slice %164 {offsets = [0, 256], sizes = [8, 128], strides = [1, 1]} : vector<8x384xf32> to vector<8x128xf32>
    %170 = arith.mulf %168, %152 : vector<8x128xf32>
    %171 = arith.mulf %167, %166 : vector<8x128xf32>
    %172 = arith.addf %170, %171 : vector<8x128xf32>
    %173 = math.tanh %172 : vector<8x128xf32>
    %174 = arith.mulf %169, %173 : vector<8x128xf32>
    %c0_49 = arith.constant 0 : index
    %c0_50 = arith.constant 0 : index
    %175 = vector.load %arg11[%c0_49, %c0_50] : memref<8x128xf32, #tpu.memory_space<vmem>>, vector<8x128xf32>
    tpu.vector_store %arg11[%c0_49, %c0_50], %174 {strides = array<i32>} : memref<8x128xf32, #tpu.memory_space<vmem>>, vector<8x128xf32>,
    %c0_51 = arith.constant 0 : index
    %c0_52 = arith.constant 0 : index
    %176 = vector.load %arg12[%c0_51, %c0_52] : memref<8x128xf32, #tpu.memory_space<vmem>>, vector<8x128xf32>
    tpu.vector_store %arg12[%c0_51, %c0_52], %172 {strides = array<i32>} : memref<8x128xf32, #tpu.memory_space<vmem>>, vector<8x128xf32>,
    %c0_i32_53 = arith.constant 0 : i32
    %177 = arith.cmpi eq, %arg1, %c0_i32_53 : i32
    %178 = arith.extui %177 : i1 to i32
    %c0_i32_54 = arith.constant 0 : i32
    %179 = arith.cmpi ne, %178, %c0_i32_54 : i32
    scf.if %179 {
      %c0_55 = arith.constant 0 : index
      %c0_56 = arith.constant 0 : index
      %180 = vector.load %arg6[%c0_55, %c0_56] : memref<128x32xf32, #tpu.memory_space<vmem>>, vector<128x32xf32>
      %cst_57 = arith.constant dense<0.000000e+00> : vector<8x32xf32>
      %181 = tpu.matmul %174, %180, %cst_57 {dimension_numbers = #tpu.dot_dimension_numbers<[1], [0], [0], [1], [0, 0, 1, 1], [], []>} : vector<8x128xf32>, vector<128x32xf32>, vector<8x32xf32> -> vector<8x32xf32>
      %c0_58 = arith.constant 0 : index
      %c0_59 = arith.constant 0 : index
      %182 = vector.load %arg7[%c0_58, %c0_59] : memref<1x32xf32, #tpu.memory_space<vmem>>, vector<1x32xf32>
      %183 = vector.broadcast %182 : vector<1x32xf32> to vector<8x32xf32>
      %184 = arith.addf %181, %183 : vector<8x32xf32>
      %cst_60 = arith.constant 0.000000e+00 : f32
      %185 = vector.broadcast %cst_60 : f32 to vector<8x32xf32>
      %186 = arith.maximumf %184, %185 : vector<8x32xf32>
      %c0_61 = arith.constant 0 : index
      %c0_62 = arith.constant 0 : index
      %187 = vector.load %arg8[%c0_61, %c0_62] : memref<32x4xf32, #tpu.memory_space<vmem>>, vector<32x4xf32>
      %cst_63 = arith.constant dense<0.000000e+00> : vector<8x4xf32>
      %188 = tpu.matmul %186, %187, %cst_63 {dimension_numbers = #tpu.dot_dimension_numbers<[1], [0], [0], [1], [0, 0, 1, 1], [], []>} : vector<8x32xf32>, vector<32x4xf32>, vector<8x4xf32> -> vector<8x4xf32>
      %c0_64 = arith.constant 0 : index
      %c0_65 = arith.constant 0 : index
      %189 = vector.load %arg9[%c0_64, %c0_65] : memref<1x4xf32, #tpu.memory_space<vmem>>, vector<1x4xf32>
      %190 = vector.broadcast %189 : vector<1x4xf32> to vector<8x4xf32>
      %191 = arith.addf %188, %190 : vector<8x4xf32>
      %cst_66 = arith.constant 0.000000e+00 : f32
      %192 = vector.broadcast %cst_66 : f32 to vector<8x124xf32>
      %193 = tpu.concatenate %191, %192, %174, %172 in 1 : vector<8x4xf32>, vector<8x124xf32>, vector<8x128xf32>, vector<8x128xf32> -> vector<8x384xf32>
      %c0_67 = arith.constant 0 : index
      %c0_68 = arith.constant 0 : index
      %194 = vector.load %arg10[%c0_67, %c0_68] : memref<8x384xf32, #tpu.memory_space<vmem>>, vector<8x384xf32>
      tpu.vector_store %arg10[%c0_67, %c0_68], %193 {strides = array<i32>} : memref<8x384xf32, #tpu.memory_space<vmem>>, vector<8x384xf32>,
    } else {
    }
    return
  }
  func.func @transform_0(%arg0: i32, %arg1: i32) -> (i32, i32, i32) {
    %c0_i32 = arith.constant 0 : i32
    %c0_i32_0 = arith.constant 0 : i32
    return %arg1, %arg0, %c0_i32 : i32, i32, i32
  }
  func.func @transform_1(%arg0: i32, %arg1: i32) -> (i32, i32) {
    %c0_i32 = arith.constant 0 : i32
    %c0_i32_0 = arith.constant 0 : i32
    %c0_i32_1 = arith.constant 0 : i32
    return %c0_i32, %c0_i32_0 : i32, i32
  }
  func.func @transform_2(%arg0: i32, %arg1: i32) -> (i32, i32) {
    %c0_i32 = arith.constant 0 : i32
    %c0_i32_0 = arith.constant 0 : i32
    %c0_i32_1 = arith.constant 0 : i32
    return %c0_i32, %c0_i32_0 : i32, i32
  }
  func.func @transform_3(%arg0: i32, %arg1: i32) -> (i32, i32) {
    %c0_i32 = arith.constant 0 : i32
    %c0_i32_0 = arith.constant 0 : i32
    %c0_i32_1 = arith.constant 0 : i32
    return %c0_i32, %c0_i32_0 : i32, i32
  }
  func.func @transform_4(%arg0: i32, %arg1: i32) -> (i32, i32) {
    %c0_i32 = arith.constant 0 : i32
    %c0_i32_0 = arith.constant 0 : i32
    %c0_i32_1 = arith.constant 0 : i32
    return %c0_i32, %c0_i32_0 : i32, i32
  }
  func.func @transform_5(%arg0: i32, %arg1: i32) -> (i32, i32) {
    %c0_i32 = arith.constant 0 : i32
    %c0_i32_0 = arith.constant 0 : i32
    %c0_i32_1 = arith.constant 0 : i32
    return %c0_i32, %c0_i32_0 : i32, i32
  }
  func.func @transform_6(%arg0: i32, %arg1: i32) -> (i32, i32) {
    %c0_i32 = arith.constant 0 : i32
    %c0_i32_0 = arith.constant 0 : i32
    %c0_i32_1 = arith.constant 0 : i32
    return %c0_i32, %c0_i32_0 : i32, i32
  }
  func.func @transform_7(%arg0: i32, %arg1: i32) -> (i32, i32) {
    %c0_i32 = arith.constant 0 : i32
    %c0_i32_0 = arith.constant 0 : i32
    %c0_i32_1 = arith.constant 0 : i32
    return %c0_i32, %c0_i32_0 : i32, i32
  }
  func.func @transform_8(%arg0: i32, %arg1: i32) -> (i32, i32) {
    %c0_i32 = arith.constant 0 : i32
    %c0_i32_0 = arith.constant 0 : i32
    return %arg0, %c0_i32 : i32, i32
  }
}

</mosaic_0001>

<llo_original>
// kernel: tpu_custom_call.1
$region0: #{tpu_custom_call.1}
  #allocation0 [shape = 'u32[]', space=smem, size = 0x4, offset = 0x4, fixed_abs, tag = 'smem constant byte address 0x4 - core index']
  #allocation1 [shape = 'u32[144,128]{1,0:T(1,128)}', space=vmem, size = 0x12000, scoped, tag = 'internal scratch']
  #allocation2 [shape = 'f32[8,128]{1,0:T(8,128)}', space=vmem, size = 0x1000, scoped, tag = 'scratch operand']
  #allocation3 [shape = 'f32[8,128]{1,0:T(8,128)}', space=vmem, size = 0x1000, scoped, tag = 'scratch operand']
  #allocation4 [shape = 'f32[8,8,512]{2,1,0:T(8,128)}', space=vmem, size = 0x20000, scoped, tag = 'scratch operand']
  %s0 = inlined_call_operand.vmem [shape: f32[8,8,4], index: 0, kind: input, shape index: {}]
  %s1 = inlined_call_operand.vmem [shape: f32[4,512], index: 1, kind: input, shape index: {}]
  %s2 = inlined_call_operand.hbm [shape: f32[128,512], index: 2, kind: input, shape index: {}]
  %s3 = inlined_call_operand.vmem [shape: f32[1,512], index: 3, kind: input, shape index: {}]
  %s4 = inlined_call_operand.vmem [shape: f32[128,32], index: 4, kind: input, shape index: {}]
  %s5 = inlined_call_operand.vmem [shape: f32[1,32], index: 5, kind: input, shape index: {}]
  %s6 = inlined_call_operand.vmem [shape: f32[32,4], index: 6, kind: input, shape index: {}]
  %s7 = inlined_call_operand.vmem [shape: f32[1,4], index: 7, kind: input, shape index: {}]
  %s8 = inlined_call_operand.hbm [shape: f32[8,384], index: 8, kind: output, shape index: {}]
  %s9 = sld [smem:[#allocation0]]
  $region54: #{tpu_custom_call.1} parent=0
    _
  %s11 = ssub.s32 1, %s9
  %s12 = scalar_select 0, %s11, %s9
  $region1: #{tpu_custom_call.1} parent=0
    #allocation5 [shape = 'u8[262144]{0}', space=vmem, size = 0x40000, scoped, tag = 'input window, operand 2, single buffered']
    #allocation6 [shape = 's32[1]{0}', space=sflag, size = 0x4, scoped, tag = 'scoped memory for tpu_custom_call.1']
    #allocation7 [shape = 's32[1]{0}', space=sflag, size = 0x4, scoped, tag = 'scoped memory for tpu_custom_call.1']
    #allocation8 [shape = 'u8[12288]{0}', space=vmem, size = 0x3000, scoped, tag = 'output window, operand 0, single buffered']
    %13 = vsyncpa [#allocation6], 0
    %14 = vsyncpa [#allocation7], 0
    // Predicated region
    $region2: #{tpu_custom_call.1} parent=1 // pred_check
      _
    $region3: #{tpu_custom_call.1} parent=1 // pred_check_branch
      %16 = sbr.rel (0) target = $region5
    $region4: #{tpu_custom_call.1} parent=1 // pred_region
      _
    $region5: #{tpu_custom_call.1} parent=1 // pred_fallthru
      _
    // Predicated region
    $region6: #{tpu_custom_call.1} parent=1 // pred_check
      _
    $region7: #{tpu_custom_call.1} parent=1 // pred_check_branch
      %18 = sbr.rel (0) target = $region9
    $region8: #{tpu_custom_call.1} parent=1 // pred_region
      _
    $region9: #{tpu_custom_call.1} parent=1 // pred_fallthru
      _
    // Predicated region
    $region10: #{tpu_custom_call.1} parent=1 // pred_check
      _
    $region11: #{tpu_custom_call.1} parent=1 // pred_check_branch
      %20 = sbr.rel (0) target = $region13
    $region12: #{tpu_custom_call.1} parent=1 // pred_region
      %s22 = ssub.s32 8192, 8192
      %23 = vsyncadd [#allocation6], %s22
      %s24 = sshll.u32 [#allocation5], 4
      %s25 = int_to_ptr.vmem [resolvable:$true] %s24
      %30 = dma.hbm_to_vmem [thread:$0]  %s2, 8192, %s25, [#allocation6], 512, 512, 32
    $region13: #{tpu_custom_call.1} parent=1 // pred_fallthru
      _
    // Predicated region
    $region14: #{tpu_custom_call.1} parent=1 // pred_check
      _
    $region15: #{tpu_custom_call.1} parent=1 // pred_check_branch
      %32 = sbr.rel (0) target = $region17
    $region16: #{tpu_custom_call.1} parent=1 // pred_region
      _
    $region17: #{tpu_custom_call.1} parent=1 // pred_fallthru
      _
    // Predicated region
    $region18: #{tpu_custom_call.1} parent=1 // pred_check
      _
    $region19: #{tpu_custom_call.1} parent=1 // pred_check_branch
      %34 = sbr.rel (0) target = $region21
    $region20: #{tpu_custom_call.1} parent=1 // pred_region
      _
    $region21: #{tpu_custom_call.1} parent=1 // pred_fallthru
      _
    // Predicated region
    $region22: #{tpu_custom_call.1} parent=1 // pred_check
      _
    $region23: #{tpu_custom_call.1} parent=1 // pred_check_branch
      %36 = sbr.rel (0) target = $region25
    $region24: #{tpu_custom_call.1} parent=1 // pred_region
      _
    $region25: #{tpu_custom_call.1} parent=1 // pred_fallthru
      _
    // Predicated region
    $region26: #{tpu_custom_call.1} parent=1 // pred_check
      _
    $region27: #{tpu_custom_call.1} parent=1 // pred_check_branch
      %38 = sbr.rel (0) target = $region29
    $region28: #{tpu_custom_call.1} parent=1 // pred_region
      _
    $region29: #{tpu_custom_call.1} parent=1 // pred_fallthru
      _
    // Predicated region
    $region30: #{tpu_custom_call.1} parent=1 // pred_check
      _
    $region31: #{tpu_custom_call.1} parent=1 // pred_check_branch
      %40 = sbr.rel (0) target = $region33
    $region32: #{tpu_custom_call.1} parent=1 // pred_region
      _
    $region33: #{tpu_custom_call.1} parent=1 // pred_fallthru
      _
    // Predicated region
    $region34: #{tpu_custom_call.1} parent=1 // pred_check
      _
    $region35: #{tpu_custom_call.1} parent=1 // pred_check_branch
      %42 = sbr.rel (0) target = $region37
    $region36: #{tpu_custom_call.1} parent=1 // pred_region
      %43 = dma.done [#allocation6], 8192
    $region37: #{tpu_custom_call.1} parent=1 // pred_fallthru
      _
    %p44 = scmp.eq.s32.totalorder 0, 0
    // Predicated region
    $region38: #{tpu_custom_call.1} parent=1 // pred_check
      %p45 = pneg %p44
    $region39: #{tpu_custom_call.1} parent=1 // pred_check_branch
      %47 = sbr.rel (%p45) target = $region41
    $region40: #{tpu_custom_call.1} parent=1 // pred_region
      %48 = vst [vmem:[#allocation2] sm:$0xff] 0.0
      %49 = vst [vmem:[#allocation3] sm:$0xff] 0.0
    $region41: #{tpu_custom_call.1} parent=1 // pred_fallthru
      _
    %v50 = vld [vmem:[%s1] sm:$0xff]
    %v51 = vld [vmem:[%s1 + $0x8] sm:$0xff]
    %v52 = vld [vmem:[#allocation5] sm:$0xff]
    %v53 = vld [vmem:[#allocation5 + $0x8] sm:$0xff]
    %v54 = vld [vmem:[#allocation5 + $0x10] sm:$0xff]
    %v55 = vld [vmem:[#allocation5 + $0x18] sm:$0xff]
    %v56 = vld [vmem:[#allocation5 + $0x20] sm:$0xff]
    %v57 = vld [vmem:[#allocation5 + $0x28] sm:$0xff]
    %v58 = vld [vmem:[#allocation5 + $0x30] sm:$0xff]
    %v59 = vld [vmem:[#allocation5 + $0x38] sm:$0xff]
    %v60 = vld [vmem:[#allocation5 + $0x40] sm:$0xff]
    %v61 = vld [vmem:[#allocation5 + $0x48] sm:$0xff]
    %v62 = vld [vmem:[#allocation5 + $0x50] sm:$0xff]
    %v63 = vld [vmem:[#allocation5 + $0x58] sm:$0xff]
    %v64 = vld [vmem:[#allocation5 + $0x60] sm:$0xff]
    %v65 = vld [vmem:[#allocation5 + $0x68] sm:$0xff]
    %v66 = vld [vmem:[#allocation5 + $0x70] sm:$0xff]
    %v67 = vld [vmem:[#allocation5 + $0x78] sm:$0xff]
    %v68 = vld [vmem:[#allocation5 + $0x80] sm:$0xff]
    %v69 = vld [vmem:[#allocation5 + $0x88] sm:$0xff]
    %v70 = vld [vmem:[#allocation5 + $0x90] sm:$0xff]
    %v71 = vld [vmem:[#allocation5 + $0x98] sm:$0xff]
    %v72 = vld [vmem:[#allocation5 + $0xa0] sm:$0xff]
    %v73 = vld [vmem:[#allocation5 + $0xa8] sm:$0xff]
    %v74 = vld [vmem:[#allocation5 + $0xb0] sm:$0xff]
    %v75 = vld [vmem:[#allocation5 + $0xb8] sm:$0xff]
    %v76 = vld [vmem:[#allocation5 + $0xc0] sm:$0xff]
    %v77 = vld [vmem:[#allocation5 + $0xc8] sm:$0xff]
    %v78 = vld [vmem:[#allocation5 + $0xd0] sm:$0xff]
    %v79 = vld [vmem:[#allocation5 + $0xd8] sm:$0xff]
    %v80 = vld [vmem:[#allocation5 + $0xe0] sm:$0xff]
    %v81 = vld [vmem:[#allocation5 + $0xe8] sm:$0xff]
    %v82 = vld [vmem:[#allocation5 + $0xf0] sm:$0xff]
    %v83 = vld [vmem:[#allocation5 + $0xf8] sm:$0xff]
    %v84 = vld [vmem:[#allocation5 + $0x100] sm:$0xff]
    %v85 = vld [vmem:[#allocation5 + $0x108] sm:$0xff]
    %v86 = vld [vmem:[#allocation5 + $0x110] sm:$0xff]
    %v87 = vld [vmem:[#allocation5 + $0x118] sm:$0xff]
    %v88 = vld [vmem:[#allocation5 + $0x120] sm:$0xff]
    %v89 = vld [vmem:[#allocation5 + $0x128] sm:$0xff]
    %v90 = vld [vmem:[#allocation5 + $0x130] sm:$0xff]
    %v91 = vld [vmem:[#allocation5 + $0x138] sm:$0xff]
    %v92 = vld [vmem:[#allocation5 + $0x140] sm:$0xff]
    %v93 = vld [vmem:[#allocation5 + $0x148] sm:$0xff]
    %v94 = vld [vmem:[#allocation5 + $0x150] sm:$0xff]
    %v95 = vld [vmem:[#allocation5 + $0x158] sm:$0xff]
    %v96 = vld [vmem:[#allocation5 + $0x160] sm:$0xff]
    %v97 = vld [vmem:[#allocation5 + $0x168] sm:$0xff]
    %v98 = vld [vmem:[#allocation5 + $0x170] sm:$0xff]
    %v99 = vld [vmem:[#allocation5 + $0x178] sm:$0xff]
    %v100 = vld [vmem:[#allocation5 + $0x180] sm:$0xff]
    %v101 = vld [vmem:[#allocation5 + $0x188] sm:$0xff]
    %v102 = vld [vmem:[#allocation5 + $0x190] sm:$0xff]
    %v103 = vld [vmem:[#allocation5 + $0x198] sm:$0xff]
    %v104 = vld [vmem:[#allocation5 + $0x1a0] sm:$0xff]
    %v105 = vld [vmem:[#allocation5 + $0x1a8] sm:$0xff]
    %v106 = vld [vmem:[#allocation5 + $0x1b0] sm:$0xff]
    %v107 = vld [vmem:[#allocation5 + $0x1b8] sm:$0xff]
    %v108 = vld [vmem:[#allocation5 + $0x1c0] sm:$0xff]
    %v109 = vld [vmem:[#allocation5 + $0x1c8] sm:$0xff]
    %v110 = vld [vmem:[#allocation5 + $0x1d0] sm:$0xff]
    %v111 = vld [vmem:[#allocation5 + $0x1d8] sm:$0xff]
    %v112 = vld [vmem:[#allocation5 + $0x1e0] sm:$0xff]
    %v113 = vld [vmem:[#allocation5 + $0x1e8] sm:$0xff]
    %v114 = vld [vmem:[#allocation5 + $0x1f0] sm:$0xff]
    %v115 = vld [vmem:[#allocation5 + $0x1f8] sm:$0xff]
    %v116 = vld [vmem:[%s3] sm:$0xf]
    %v117 = vld [vmem:[%s0] sm:$0xff]
    %v118 = vld [vmem:[%s0 + $0x8] sm:$0xff]
    %v119 = vld [vmem:[%s0 + $0x10] sm:$0xff]
    %v120 = vld [vmem:[%s0 + $0x18] sm:$0xff]
    %v121 = vld [vmem:[%s0 + $0x20] sm:$0xff]
    %v122 = vld [vmem:[%s0 + $0x28] sm:$0xff]
    %v123 = vld [vmem:[%s0 + $0x30] sm:$0xff]
    %v124 = vld [vmem:[%s0 + $0x38] sm:$0xff]
    %v126 = vlaneseq
    %v127 = vshrl.u32 %v126, 7
    %v128 = vsub.s32 0, %v127
    %v129 = vrot.slane %v116, %v128
    %v130 = vlaneseq
    %v131 = vshrl.u32 %v130, 7
    %v132 = vsub.s32 1, %v131
    %v133 = vrot.slane %v116, %v132
    %v134 = vlaneseq
    %v135 = vshrl.u32 %v134, 7
    %v136 = vsub.s32 2, %v135
    %v137 = vrot.slane %v116, %v136
    %v138 = vlaneseq
    %v139 = vshrl.u32 %v138, 7
    %v140 = vsub.s32 3, %v139
    %v141 = vrot.slane %v116, %v140
    %v148 = vcombine.high %v50, %v50
    %v149 = vcombine.high %v51, %v51
    %vm150 = vcmask 31744
    %v152 = vsel %vm150, %v117, 0
    %v155 = vsel %vm150, %v118, 0
    %v158 = vsel %vm150, %v119, 0
    %v161 = vsel %vm150, %v120, 0
    %v164 = vsel %vm150, %v121, 0
    %v167 = vsel %vm150, %v122, 0
    %v170 = vsel %vm150, %v123, 0
    %v173 = vsel %vm150, %v124, 0
    %vm175 = vcmask 1043456
    %v176 = vsel %vm175, %v50, 0
    %v178 = vsel %vm175, %v148, 0
    %v180 = vsel %vm175, %v51, 0
    %v182 = vsel %vm175, %v149, 0
    %184 = vmatprep.subr.mxu0 %v178
    %185 = vmatpush1.msra.mxu0 %v176
    %186 = vmatprep.subr.mxu0 0.0
    %187 = vmatpush1.msra.mxu0 0.0
    %188 = vmatprep.subr.mxu0 0.0
    %189 = vmatpush1.msra.mxu0 0.0
    %190 = vmatprep.subr.mxu0 0.0
    %191 = vmatpush1.msra.mxu0 0.0
    %192 = vmatprep.subr.mxu0 0.0
    %193 = vmatpush1.msra.mxu0 0.0
    %194 = vmatprep.subr.mxu0 0.0
    %195 = vmatpush1.msra.mxu0 0.0
    %196 = vmatprep.subr.mxu0 0.0
    %197 = vmatpush1.msra.mxu0 0.0
    %198 = vmatprep.subr.mxu0 0.0
    %199 = vmatpush1.msra.mxu0 0.0
    %200 = vmatprep.subr.mxu0 0.0
    %201 = vmatpush1.msra.mxu0 0.0
    %202 = vmatprep.subr.mxu0 0.0
    %203 = vmatpush1.msra.mxu0 0.0
    %204 = vmatprep.subr.mxu0 0.0
    %205 = vmatpush1.msra.mxu0 0.0
    %206 = vmatprep.subr.mxu0 0.0
    %207 = vmatpush1.msra.mxu0 0.0
    %208 = vmatprep.subr.mxu0 0.0
    %209 = vmatpush1.msra.mxu0 0.0
    %210 = vmatprep.subr.mxu0 0.0
    %211 = vmatpush1.msra.mxu0 0.0
    %212 = vmatprep.subr.mxu0 0.0
    %213 = vmatpush1.msra.mxu0 0.0
    %214 = vmatprep.subr.mxu0 0.0
    %215 = vmatpush1.msra.mxu0 0.0
    %216 = vmatprep.subr.mxu0 0.0
    %217 = vmatpush1.msra.mxu0 0.0
    %218 = vmatprep.subr.mxu0 0.0
    %219 = vmatpush1.msra.mxu0 0.0
    %220 = vmatprep.subr.mxu0 0.0
    %221 = vmatpush1.msra.mxu0 0.0
    %222 = vmatprep.subr.mxu0 0.0
    %223 = vmatpush1.msra.mxu0 0.0
    %224 = vmatprep.subr.mxu0 0.0
    %225 = vmatpush1.msra.mxu0 0.0
    %226 = vmatprep.subr.mxu0 0.0
    %227 = vmatpush1.msra.mxu0 0.0
    %228 = vmatprep.subr.mxu0 0.0
    %229 = vmatpush1.msra.mxu0 0.0
    %230 = vmatprep.subr.mxu0 0.0
    %231 = vmatpush1.msra.mxu0 0.0
    %232 = vmatprep.subr.mxu0 0.0
    %233 = vmatpush1.msra.mxu0 0.0
    %234 = vmatprep.subr.mxu0 0.0
    %235 = vmatpush1.msra.mxu0 0.0
    %236 = vmatprep.subr.mxu0 0.0
    %237 = vmatpush1.msra.mxu0 0.0
    %238 = vmatprep.subr.mxu0 0.0
    %239 = vmatpush1.msra.mxu0 0.0
    %240 = vmatprep.subr.mxu0 0.0
    %241 = vmatpush1.msra.mxu0 0.0
    %242 = vmatprep.subr.mxu0 0.0
    %243 = vmatpush1.msra.mxu0 0.0
    %244 = vmatprep.subr.mxu0 0.0
    %245 = vmatpush1.msra.mxu0 0.0
    %246 = vmatprep.subr.mxu0 0.0
    %247 = vmatpush1.msra.mxu0 0.0
    %248 = vmatprep.mubr.f32.mxu0 0.0
    %249 = vmatmul.mubr.f32.gmra.mrb[0].mxu0 %v152
    %v250 = vpop.f32.mrb[0].mxu0
    %v251 = vadd.f32 %v129, %v250
    %v252 = vpop.f32.mrb[0].mxu0
    %v253 = vadd.f32 %v133, %v252
    %254 = vmatprep.mubr.f32.mxu0 0.0
    %255 = vmatmul.mubr.f32.gmra.mrb[0].mxu0 %v155
    %v256 = vpop.f32.mrb[0].mxu0
    %v257 = vadd.f32 %v129, %v256
    %v258 = vpop.f32.mrb[0].mxu0
    %v259 = vadd.f32 %v133, %v258
    %260 = vmatprep.mubr.f32.mxu0 0.0
    %261 = vmatmul.mubr.f32.gmra.mrb[0].mxu0 %v158
    %v262 = vpop.f32.mrb[0].mxu0
    %v263 = vadd.f32 %v129, %v262
    %v264 = vpop.f32.mrb[0].mxu0
    %v265 = vadd.f32 %v133, %v264
    %266 = vmatprep.mubr.f32.mxu0 0.0
    %267 = vmatmul.mubr.f32.gmra.mrb[0].mxu0 %v161
    %v268 = vpop.f32.mrb[0].mxu0
    %v269 = vadd.f32 %v129, %v268
    %v270 = vpop.f32.mrb[0].mxu0
    %v271 = vadd.f32 %v133, %v270
    %272 = vmatprep.mubr.f32.mxu0 0.0
    %273 = vmatmul.mubr.f32.gmra.mrb[0].mxu0 %v164
    %v274 = vpop.f32.mrb[0].mxu0
    %v275 = vadd.f32 %v129, %v274
    %v276 = vpop.f32.mrb[0].mxu0
    %v277 = vadd.f32 %v133, %v276
    %278 = vmatprep.mubr.f32.mxu0 0.0
    %279 = vmatmul.mubr.f32.gmra.mrb[0].mxu0 %v167
    %v280 = vpop.f32.mrb[0].mxu0
    %v281 = vadd.f32 %v129, %v280
    %v282 = vpop.f32.mrb[0].mxu0
    %v283 = vadd.f32 %v133, %v282
    %284 = vmatprep.mubr.f32.mxu0 0.0
    %285 = vmatmul.mubr.f32.gmra.mrb[0].mxu0 %v170
    %v286 = vpop.f32.mrb[0].mxu0
    %v287 = vadd.f32 %v129, %v286
    %v288 = vpop.f32.mrb[0].mxu0
    %v289 = vadd.f32 %v133, %v288
    %290 = vmatprep.mubr.f32.mxu0 0.0
    %291 = vmatmul.mubr.f32.gmra.mrb[0].mxu0 %v173
    %v292 = vpop.f32.mrb[0].mxu0
    %v293 = vadd.f32 %v129, %v292
    %v294 = vpop.f32.mrb[0].mxu0
    %v295 = vadd.f32 %v133, %v294
    %296 = vdwg.mxu0
    %297 = vmatprep.subr.mxu0 %v182
    %298 = vmatpush1.msra.mxu0 %v180
    %299 = vmatprep.subr.mxu0 0.0
    %300 = vmatpush1.msra.mxu0 0.0
    %301 = vmatprep.subr.mxu0 0.0
    %302 = vmatpush1.msra.mxu0 0.0
    %303 = vmatprep.subr.mxu0 0.0
    %304 = vmatpush1.msra.mxu0 0.0
    %305 = vmatprep.subr.mxu0 0.0
    %306 = vmatpush1.msra.mxu0 0.0
    %307 = vmatprep.subr.mxu0 0.0
    %308 = vmatpush1.msra.mxu0 0.0
    %309 = vmatprep.subr.mxu0 0.0
    %310 = vmatpush1.msra.mxu0 0.0
    %311 = vmatprep.subr.mxu0 0.0
    %312 = vmatpush1.msra.mxu0 0.0
    %313 = vmatprep.subr.mxu0 0.0
    %314 = vmatpush1.msra.mxu0 0.0
    %315 = vmatprep.subr.mxu0 0.0
    %316 = vmatpush1.msra.mxu0 0.0
    %317 = vmatprep.subr.mxu0 0.0
    %318 = vmatpush1.msra.mxu0 0.0
    %319 = vmatprep.subr.mxu0 0.0
    %320 = vmatpush1.msra.mxu0 0.0
    %321 = vmatprep.subr.mxu0 0.0
    %322 = vmatpush1.msra.mxu0 0.0
    %323 = vmatprep.subr.mxu0 0.0
    %324 = vmatpush1.msra.mxu0 0.0
    %325 = vmatprep.subr.mxu0 0.0
    %326 = vmatpush1.msra.mxu0 0.0
    %327 = vmatprep.subr.mxu0 0.0
    %328 = vmatpush1.msra.mxu0 0.0
    %329 = vmatprep.subr.mxu0 0.0
    %330 = vmatpush1.msra.mxu0 0.0
    %331 = vmatprep.subr.mxu0 0.0
    %332 = vmatpush1.msra.mxu0 0.0
    %333 = vmatprep.subr.mxu0 0.0
    %334 = vmatpush1.msra.mxu0 0.0
    %335 = vmatprep.subr.mxu0 0.0
    %336 = vmatpush1.msra.mxu0 0.0
    %337 = vmatprep.subr.mxu0 0.0
    %338 = vmatpush1.msra.mxu0 0.0
    %339 = vmatprep.subr.mxu0 0.0
    %340 = vmatpush1.msra.mxu0 0.0
    %341 = vmatprep.subr.mxu0 0.0
    %342 = vmatpush1.msra.mxu0 0.0
    %343 = vmatprep.subr.mxu0 0.0
    %344 = vmatpush1.msra.mxu0 0.0
    %345 = vmatprep.subr.mxu0 0.0
    %346 = vmatpush1.msra.mxu0 0.0
    %347 = vmatprep.subr.mxu0 0.0
    %348 = vmatpush1.msra.mxu0 0.0
    %349 = vmatprep.subr.mxu0 0.0
    %350 = vmatpush1.msra.mxu0 0.0
    %351 = vmatprep.subr.mxu0 0.0
    %352 = vmatpush1.msra.mxu0 0.0
    %353 = vmatprep.subr.mxu0 0.0
    %354 = vmatpush1.msra.mxu0 0.0
    %355 = vmatprep.subr.mxu0 0.0
    %356 = vmatpush1.msra.mxu0 0.0
    %357 = vmatprep.subr.mxu0 0.0
    %358 = vmatpush1.msra.mxu0 0.0
    %359 = vmatprep.subr.mxu0 0.0
    %360 = vmatpush1.msra.mxu0 0.0
    %361 = vmatprep.mubr.f32.mxu0 0.0
    %362 = vmatmul.mubr.f32.gmra.mrb[0].mxu0 %v152
    %v363 = vpop.f32.mrb[0].mxu0
    %v364 = vadd.f32 %v137, %v363
    %v365 = vpop.f32.mrb[0].mxu0
    %v366 = vadd.f32 %v141, %v365
    %367 = vmatprep.mubr.f32.mxu0 0.0
    %368 = vmatmul.mubr.f32.gmra.mrb[0].mxu0 %v155
    %v369 = vpop.f32.mrb[0].mxu0
    %v370 = vadd.f32 %v137, %v369
    %v371 = vpop.f32.mrb[0].mxu0
    %v372 = vadd.f32 %v141, %v371
    %373 = vmatprep.mubr.f32.mxu0 0.0
    %374 = vmatmul.mubr.f32.gmra.mrb[0].mxu0 %v158
    %v375 = vpop.f32.mrb[0].mxu0
    %v376 = vadd.f32 %v137, %v375
    %v377 = vpop.f32.mrb[0].mxu0
    %v378 = vadd.f32 %v141, %v377
    %379 = vmatprep.mubr.f32.mxu0 0.0
    %380 = vmatmul.mubr.f32.gmra.mrb[0].mxu0 %v161
    %v381 = vpop.f32.mrb[0].mxu0
    %v382 = vadd.f32 %v137, %v381
    %v383 = vpop.f32.mrb[0].mxu0
    %v384 = vadd.f32 %v141, %v383
    %385 = vmatprep.mubr.f32.mxu0 0.0
    %386 = vmatmul.mubr.f32.gmra.mrb[0].mxu0 %v164
    %v387 = vpop.f32.mrb[0].mxu0
    %v388 = vadd.f32 %v137, %v387
    %v389 = vpop.f32.mrb[0].mxu0
    %v390 = vadd.f32 %v141, %v389
    %391 = vmatprep.mubr.f32.mxu0 0.0
    %392 = vmatmul.mubr.f32.gmra.mrb[0].mxu0 %v167
    %v393 = vpop.f32.mrb[0].mxu0
    %v394 = vadd.f32 %v137, %v393
    %v395 = vpop.f32.mrb[0].mxu0
    %v396 = vadd.f32 %v141, %v395
    %397 = vmatprep.mubr.f32.mxu0 0.0
    %398 = vmatmul.mubr.f32.gmra.mrb[0].mxu0 %v170
    %v399 = vpop.f32.mrb[0].mxu0
    %v400 = vadd.f32 %v137, %v399
    %v401 = vpop.f32.mrb[0].mxu0
    %v402 = vadd.f32 %v141, %v401
    %403 = vmatprep.mubr.f32.mxu0 0.0
    %404 = vmatmul.mubr.f32.gmra.mrb[0].mxu0 %v173
    %v405 = vpop.f32.mrb[0].mxu0
    %v406 = vadd.f32 %v137, %v405
    %v407 = vpop.f32.mrb[0].mxu0
    %v408 = vadd.f32 %v141, %v407
    %409 = vdwg.mxu0
    %410 = vst [vmem:[#allocation4] sm:$0xff] %v251
    %411 = vst [vmem:[#allocation4 + $0x8] sm:$0xff] %v253
    %412 = vst [vmem:[#allocation4 + $0x10] sm:$0xff] %v364
    %413 = vst [vmem:[#allocation4 + $0x18] sm:$0xff] %v366
    %414 = vst [vmem:[#allocation4 + $0x20] sm:$0xff] %v257
    %415 = vst [vmem:[#allocation4 + $0x28] sm:$0xff] %v259
    %416 = vst [vmem:[#allocation4 + $0x30] sm:$0xff] %v370
    %417 = vst [vmem:[#allocation4 + $0x38] sm:$0xff] %v372
    %418 = vst [vmem:[#allocation4 + $0x40] sm:$0xff] %v263
    %419 = vst [vmem:[#allocation4 + $0x48] sm:$0xff] %v265
    %420 = vst [vmem:[#allocation4 + $0x50] sm:$0xff] %v376
    %421 = vst [vmem:[#allocation4 + $0x58] sm:$0xff] %v378
    %422 = vst [vmem:[#allocation4 + $0x60] sm:$0xff] %v269
    %423 = vst [vmem:[#allocation4 + $0x68] sm:$0xff] %v271
    %424 = vst [vmem:[#allocation4 + $0x70] sm:$0xff] %v382
    %425 = vst [vmem:[#allocation4 + $0x78] sm:$0xff] %v384
    %426 = vst [vmem:[#allocation4 + $0x80] sm:$0xff] %v275
    %427 = vst [vmem:[#allocation4 + $0x88] sm:$0xff] %v277
    %428 = vst [vmem:[#allocation4 + $0x90] sm:$0xff] %v388
    %429 = vst [vmem:[#allocation4 + $0x98] sm:$0xff] %v390
    %430 = vst [vmem:[#allocation4 + $0xa0] sm:$0xff] %v281
    %431 = vst [vmem:[#allocation4 + $0xa8] sm:$0xff] %v283
    %432 = vst [vmem:[#allocation4 + $0xb0] sm:$0xff] %v394
    %433 = vst [vmem:[#allocation4 + $0xb8] sm:$0xff] %v396
    %434 = vst [vmem:[#allocation4 + $0xc0] sm:$0xff] %v287
    %435 = vst [vmem:[#allocation4 + $0xc8] sm:$0xff] %v289
    %436 = vst [vmem:[#allocation4 + $0xd0] sm:$0xff] %v400
    %437 = vst [vmem:[#allocation4 + $0xd8] sm:$0xff] %v402
    %438 = vst [vmem:[#allocation4 + $0xe0] sm:$0xff] %v293
    %439 = vst [vmem:[#allocation4 + $0xe8] sm:$0xff] %v295
    %440 = vst [vmem:[#allocation4 + $0xf0] sm:$0xff] %v406
    %441 = vst [vmem:[#allocation4 + $0xf8] sm:$0xff] %v408
    %v442 = vld [vmem:[#allocation2] sm:$0xff]
    %v443 = vld [vmem:[#allocation3] sm:$0xff]
    %v444 = vld [vmem:[#allocation4] sm:$0xff]
    %v445 = vld [vmem:[#allocation4 + $0x8] sm:$0xff]
    %v446 = vld [vmem:[#allocation4 + $0x10] sm:$0xff]
    %v447 = vld [vmem:[#allocation4 + $0x18] sm:$0xff]
    %448 = vmatprep.subr.mxu0 %v53
    %449 = vmatpush1.msra.mxu0 %v52
    %450 = vmatprep.subr.mxu0 %v57
    %451 = vmatpush1.msra.mxu0 %v56
    %452 = vmatprep.subr.mxu0 %v61
    %453 = vmatpush1.msra.mxu0 %v60
    %454 = vmatprep.subr.mxu0 %v65
    %455 = vmatpush1.msra.mxu0 %v64
    %456 = vmatprep.subr.mxu0 %v69
    %457 = vmatpush1.msra.mxu0 %v68
    %458 = vmatprep.subr.mxu0 %v73
    %459 = vmatpush1.msra.mxu0 %v72
    %460 = vmatprep.subr.mxu0 %v77
    %461 = vmatpush1.msra.mxu0 %v76
    %462 = vmatprep.subr.mxu0 %v81
    %463 = vmatpush1.msra.mxu0 %v80
    %464 = vmatprep.subr.mxu0 %v85
    %465 = vmatpush1.msra.mxu0 %v84
    %466 = vmatprep.subr.mxu0 %v89
    %467 = vmatpush1.msra.mxu0 %v88
    %468 = vmatprep.subr.mxu0 %v93
    %469 = vmatpush1.msra.mxu0 %v92
    %470 = vmatprep.subr.mxu0 %v97
    %471 = vmatpush1.msra.mxu0 %v96
    %472 = vmatprep.subr.mxu0 %v101
    %473 = vmatpush1.msra.mxu0 %v100
    %474 = vmatprep.subr.mxu0 %v105
    %475 = vmatpush1.msra.mxu0 %v104
    %476 = vmatprep.subr.mxu0 %v109
    %477 = vmatpush1.msra.mxu0 %v108
    %478 = vmatprep.subr.mxu0 %v113
    %479 = vmatpush1.msra.mxu0 %v112
    %480 = vmatprep.subr.mxu0 0.0
    %481 = vmatpush1.msra.mxu0 0.0
    %482 = vmatprep.subr.mxu0 0.0
    %483 = vmatpush1.msra.mxu0 0.0
    %484 = vmatprep.subr.mxu0 0.0
    %485 = vmatpush1.msra.mxu0 0.0
    %486 = vmatprep.subr.mxu0 0.0
    %487 = vmatpush1.msra.mxu0 0.0
    %488 = vmatprep.subr.mxu0 0.0
    %489 = vmatpush1.msra.mxu0 0.0
    %490 = vmatprep.subr.mxu0 0.0
    %491 = vmatpush1.msra.mxu0 0.0
    %492 = vmatprep.subr.mxu0 0.0
    %493 = vmatpush1.msra.mxu0 0.0
    %494 = vmatprep.subr.mxu0 0.0
    %495 = vmatpush1.msra.mxu0 0.0
    %496 = vmatprep.subr.mxu0 0.0
    %497 = vmatpush1.msra.mxu0 0.0
    %498 = vmatprep.subr.mxu0 0.0
    %499 = vmatpush1.msra.mxu0 0.0
    %500 = vmatprep.subr.mxu0 0.0
    %501 = vmatpush1.msra.mxu0 0.0
    %502 = vmatprep.subr.mxu0 0.0
    %503 = vmatpush1.msra.mxu0 0.0
    %504 = vmatprep.subr.mxu0 0.0
    %505 = vmatpush1.msra.mxu0 0.0
    %506 = vmatprep.subr.mxu0 0.0
    %507 = vmatpush1.msra.mxu0 0.0
    %508 = vmatprep.subr.mxu0 0.0
    %509 = vmatpush1.msra.mxu0 0.0
    %510 = vmatprep.subr.mxu0 0.0
    %511 = vmatpush1.msra.mxu0 0.0
    %512 = vmatprep.mubr.f32.mxu0 0.0
    %513 = vmatmul.mubr.f32.gmra.mrb[0].mxu0 %v442
    %v514 = vpop.f32.mrb[0].mxu0
    %v515 = vadd.f32 0.0, %v514
    %v516 = vpop.f32.mrb[0].mxu0
    %v517 = vadd.f32 0.0, %v516
    %518 = vdwg.mxu0
    %519 = vmatprep.subr.mxu0 %v55
    %520 = vmatpush1.msra.mxu0 %v54
    %521 = vmatprep.subr.mxu0 %v59
    %522 = vmatpush1.msra.mxu0 %v58
    %523 = vmatprep.subr.mxu0 %v63
    %524 = vmatpush1.msra.mxu0 %v62
    %525 = vmatprep.subr.mxu0 %v67
    %526 = vmatpush1.msra.mxu0 %v66
    %527 = vmatprep.subr.mxu0 %v71
    %528 = vmatpush1.msra.mxu0 %v70
    %529 = vmatprep.subr.mxu0 %v75
    %530 = vmatpush1.msra.mxu0 %v74
    %531 = vmatprep.subr.mxu0 %v79
    %532 = vmatpush1.msra.mxu0 %v78
    %533 = vmatprep.subr.mxu0 %v83
    %534 = vmatpush1.msra.mxu0 %v82
    %535 = vmatprep.subr.mxu0 %v87
    %536 = vmatpush1.msra.mxu0 %v86
    %537 = vmatprep.subr.mxu0 %v91
    %538 = vmatpush1.msra.mxu0 %v90
    %539 = vmatprep.subr.mxu0 %v95
    %540 = vmatpush1.msra.mxu0 %v94
    %541 = vmatprep.subr.mxu0 %v99
    %542 = vmatpush1.msra.mxu0 %v98
    %543 = vmatprep.subr.mxu0 %v103
    %544 = vmatpush1.msra.mxu0 %v102
    %545 = vmatprep.subr.mxu0 %v107
    %546 = vmatpush1.msra.mxu0 %v106
    %547 = vmatprep.subr.mxu0 %v111
    %548 = vmatpush1.msra.mxu0 %v110
    %549 = vmatprep.subr.mxu0 %v115
    %550 = vmatpush1.msra.mxu0 %v114
    %551 = vmatprep.subr.mxu0 0.0
    %552 = vmatpush1.msra.mxu0 0.0
    %553 = vmatprep.subr.mxu0 0.0
    %554 = vmatpush1.msra.mxu0 0.0
    %555 = vmatprep.subr.mxu0 0.0
    %556 = vmatpush1.msra.mxu0 0.0
    %557 = vmatprep.subr.mxu0 0.0
    %558 = vmatpush1.msra.mxu0 0.0
    %559 = vmatprep.subr.mxu0 0.0
    %560 = vmatpush1.msra.mxu0 0.0
    %561 = vmatprep.subr.mxu0 0.0
    %562 = vmatpush1.msra.mxu0 0.0
    %563 = vmatprep.subr.mxu0 0.0
    %564 = vmatpush1.msra.mxu0 0.0
    %565 = vmatprep.subr.mxu0 0.0
    %566 = vmatpush1.msra.mxu0 0.0
    %567 = vmatprep.subr.mxu0 0.0
    %568 = vmatpush1.msra.mxu0 0.0
    %569 = vmatprep.subr.mxu0 0.0
    %570 = vmatpush1.msra.mxu0 0.0
    %571 = vmatprep.subr.mxu0 0.0
    %572 = vmatpush1.msra.mxu0 0.0
    %573 = vmatprep.subr.mxu0 0.0
    %574 = vmatpush1.msra.mxu0 0.0
    %575 = vmatprep.subr.mxu0 0.0
    %576 = vmatpush1.msra.mxu0 0.0
    %577 = vmatprep.subr.mxu0 0.0
    %578 = vmatpush1.msra.mxu0 0.0
    %579 = vmatprep.subr.mxu0 0.0
    %580 = vmatpush1.msra.mxu0 0.0
    %581 = vmatprep.subr.mxu0 0.0
    %582 = vmatpush1.msra.mxu0 0.0
    %583 = vmatprep.mubr.f32.mxu0 0.0
    %584 = vmatmul.mubr.f32.gmra.mrb[0].mxu0 %v442
    %v585 = vpop.f32.mrb[0].mxu0
    %v586 = vadd.f32 0.0, %v585
    %v587 = vpop.f32.mrb[0].mxu0
    %v588 = vadd.f32 0.0, %v587
    %589 = vdwg.mxu0
    %v590 = vadd.f32 %v444, %v515
    %v591 = vadd.f32 %v445, %v517
    %v592 = vadd.f32 %v446, %v586
    %v593 = vadd.f32 %v447, %v588
    %v594 = vxor.u32 %v590, 2147483648
    %v595 = vxor.u32 %v591, 2147483648
    %v596 = vxor.u32 %v592, 2147483648
    %v597 = vmul.f32 %v594, 1.442695
    %v598 = vpow.pop %v597
    %v599 = vmul.f32 %v595, 1.442695
    %v600 = vpow.pop %v599
    %v601 = vmul.f32 %v596, 1.442695
    %v602 = vpow.pop %v601
    %v603 = vadd.f32 %v598, 1.0
    %v604 = vadd.f32 %v600, 1.0
    %v605 = vadd.f32 %v602, 1.0
    %v606 = vrcp.pop %v603
    %v607 = vmul.f32 1.0, %v606
    %v608 = vrcp.pop %v604
    %v609 = vmul.f32 1.0, %v608
    %v610 = vrcp.pop %v605
    %v611 = vmul.f32 1.0, %v610
    %v612 = vtanh.pop %v593
    %v613 = vmul.f32 %v609, %v443
    %v614 = vmul.f32 %v607, %v612
    %v615 = vadd.f32 %v613, %v614
    %v616 = vtanh.pop %v615
    %v617 = vmul.f32 %v611, %v616
    %s618 = scalar_lea.vmem [#allocation4], 32
    %v619 = vld [vmem:[%s618] sm:$0xff]
    %v620 = vld [vmem:[%s618 + $0x8] sm:$0xff]
    %v621 = vld [vmem:[%s618 + $0x10] sm:$0xff]
    %v622 = vld [vmem:[%s618 + $0x18] sm:$0xff]
    %623 = vmatprep.subr.mxu0 %v53
    %624 = vmatpush1.msra.mxu0 %v52
    %625 = vmatprep.subr.mxu0 %v57
    %626 = vmatpush1.msra.mxu0 %v56
    %627 = vmatprep.subr.mxu0 %v61
    %628 = vmatpush1.msra.mxu0 %v60
    %629 = vmatprep.subr.mxu0 %v65
    %630 = vmatpush1.msra.mxu0 %v64
    %631 = vmatprep.subr.mxu0 %v69
    %632 = vmatpush1.msra.mxu0 %v68
    %633 = vmatprep.subr.mxu0 %v73
    %634 = vmatpush1.msra.mxu0 %v72
    %635 = vmatprep.subr.mxu0 %v77
    %636 = vmatpush1.msra.mxu0 %v76
    %637 = vmatprep.subr.mxu0 %v81
    %638 = vmatpush1.msra.mxu0 %v80
    %639 = vmatprep.subr.mxu0 %v85
    %640 = vmatpush1.msra.mxu0 %v84
    %641 = vmatprep.subr.mxu0 %v89
    %642 = vmatpush1.msra.mxu0 %v88
    %643 = vmatprep.subr.mxu0 %v93
    %644 = vmatpush1.msra.mxu0 %v92
    %645 = vmatprep.subr.mxu0 %v97
    %646 = vmatpush1.msra.mxu0 %v96
    %647 = vmatprep.subr.mxu0 %v101
    %648 = vmatpush1.msra.mxu0 %v100
    %649 = vmatprep.subr.mxu0 %v105
    %650 = vmatpush1.msra.mxu0 %v104
    %651 = vmatprep.subr.mxu0 %v109
    %652 = vmatpush1.msra.mxu0 %v108
    %653 = vmatprep.subr.mxu0 %v113
    %654 = vmatpush1.msra.mxu0 %v112
    %655 = vmatprep.subr.mxu0 0.0
    %656 = vmatpush1.msra.mxu0 0.0
    %657 = vmatprep.subr.mxu0 0.0
    %658 = vmatpush1.msra.mxu0 0.0
    %659 = vmatprep.subr.mxu0 0.0
    %660 = vmatpush1.msra.mxu0 0.0
    %661 = vmatprep.subr.mxu0 0.0
    %662 = vmatpush1.msra.mxu0 0.0
    %663 = vmatprep.subr.mxu0 0.0
    %664 = vmatpush1.msra.mxu0 0.0
    %665 = vmatprep.subr.mxu0 0.0
    %666 = vmatpush1.msra.mxu0 0.0
    %667 = vmatprep.subr.mxu0 0.0
    %668 = vmatpush1.msra.mxu0 0.0
    %669 = vmatprep.subr.mxu0 0.0
    %670 = vmatpush1.msra.mxu0 0.0
    %671 = vmatprep.subr.mxu0 0.0
    %672 = vmatpush1.msra.mxu0 0.0
    %673 = vmatprep.subr.mxu0 0.0
    %674 = vmatpush1.msra.mxu0 0.0
    %675 = vmatprep.subr.mxu0 0.0
    %676 = vmatpush1.msra.mxu0 0.0
    %677 = vmatprep.subr.mxu0 0.0
    %678 = vmatpush1.msra.mxu0 0.0
    %679 = vmatprep.subr.mxu0 0.0
    %680 = vmatpush1.msra.mxu0 0.0
    %681 = vmatprep.subr.mxu0 0.0
    %682 = vmatpush1.msra.mxu0 0.0
    %683 = vmatprep.subr.mxu0 0.0
    %684 = vmatpush1.msra.mxu0 0.0
    %685 = vmatprep.subr.mxu0 0.0
    %686 = vmatpush1.msra.mxu0 0.0
    %687 = vmatprep.mubr.f32.mxu0 0.0
    %688 = vmatmul.mubr.f32.gmra.mrb[0].mxu0 %v617
    %v689 = vpop.f32.mrb[0].mxu0
    %v690 = vadd.f32 0.0, %v689
    %v691 = vpop.f32.mrb[0].mxu0
    %v692 = vadd.f32 0.0, %v691
    %693 = vdwg.mxu0
    %694 = vmatprep.subr.mxu0 %v55
    %695 = vmatpush1.msra.mxu0 %v54
    %696 = vmatprep.subr.mxu0 %v59
    %697 = vmatpush1.msra.mxu0 %v58
    %698 = vmatprep.subr.mxu0 %v63
    %699 = vmatpush1.msra.mxu0 %v62
    %700 = vmatprep.subr.mxu0 %v67
    %701 = vmatpush1.msra.mxu0 %v66
    %702 = vmatprep.subr.mxu0 %v71
    %703 = vmatpush1.msra.mxu0 %v70
    %704 = vmatprep.subr.mxu0 %v75
    %705 = vmatpush1.msra.mxu0 %v74
    %706 = vmatprep.subr.mxu0 %v79
    %707 = vmatpush1.msra.mxu0 %v78
    %708 = vmatprep.subr.mxu0 %v83
    %709 = vmatpush1.msra.mxu0 %v82
    %710 = vmatprep.subr.mxu0 %v87
    %711 = vmatpush1.msra.mxu0 %v86
    %712 = vmatprep.subr.mxu0 %v91
    %713 = vmatpush1.msra.mxu0 %v90
    %714 = vmatprep.subr.mxu0 %v95
    %715 = vmatpush1.msra.mxu0 %v94
    %716 = vmatprep.subr.mxu0 %v99
    %717 = vmatpush1.msra.mxu0 %v98
    %718 = vmatprep.subr.mxu0 %v103
    %719 = vmatpush1.msra.mxu0 %v102
    %720 = vmatprep.subr.mxu0 %v107
    %721 = vmatpush1.msra.mxu0 %v106
    %722 = vmatprep.subr.mxu0 %v111
    %723 = vmatpush1.msra.mxu0 %v110
    %724 = vmatprep.subr.mxu0 %v115
    %725 = vmatpush1.msra.mxu0 %v114
    %726 = vmatprep.subr.mxu0 0.0
    %727 = vmatpush1.msra.mxu0 0.0
    %728 = vmatprep.subr.mxu0 0.0
    %729 = vmatpush1.msra.mxu0 0.0
    %730 = vmatprep.subr.mxu0 0.0
    %731 = vmatpush1.msra.mxu0 0.0
    %732 = vmatprep.subr.mxu0 0.0
    %733 = vmatpush1.msra.mxu0 0.0
    %734 = vmatprep.subr.mxu0 0.0
    %735 = vmatpush1.msra.mxu0 0.0
    %736 = vmatprep.subr.mxu0 0.0
    %737 = vmatpush1.msra.mxu0 0.0
    %738 = vmatprep.subr.mxu0 0.0
    %739 = vmatpush1.msra.mxu0 0.0
    %740 = vmatprep.subr.mxu0 0.0
    %741 = vmatpush1.msra.mxu0 0.0
    %742 = vmatprep.subr.mxu0 0.0
    %743 = vmatpush1.msra.mxu0 0.0
    %744 = vmatprep.subr.mxu0 0.0
    %745 = vmatpush1.msra.mxu0 0.0
    %746 = vmatprep.subr.mxu0 0.0
    %747 = vmatpush1.msra.mxu0 0.0
    %748 = vmatprep.subr.mxu0 0.0
    %749 = vmatpush1.msra.mxu0 0.0
    %750 = vmatprep.subr.mxu0 0.0
    %751 = vmatpush1.msra.mxu0 0.0
    %752 = vmatprep.subr.mxu0 0.0
    %753 = vmatpush1.msra.mxu0 0.0
    %754 = vmatprep.subr.mxu0 0.0
    %755 = vmatpush1.msra.mxu0 0.0
    %756 = vmatprep.subr.mxu0 0.0
    %757 = vmatpush1.msra.mxu0 0.0
    %758 = vmatprep.mubr.f32.mxu0 0.0
    %759 = vmatmul.mubr.f32.gmra.mrb[0].mxu0 %v617
    %v760 = vpop.f32.mrb[0].mxu0
    %v761 = vadd.f32 0.0, %v760
    %v762 = vpop.f32.mrb[0].mxu0
    %v763 = vadd.f32 0.0, %v762
    %764 = vdwg.mxu0
    %v765 = vadd.f32 %v619, %v690
    %v766 = vadd.f32 %v620, %v692
    %v767 = vadd.f32 %v621, %v761
    %v768 = vadd.f32 %v622, %v763
    %v769 = vxor.u32 %v765, 2147483648
    %v770 = vxor.u32 %v766, 2147483648
    %v771 = vxor.u32 %v767, 2147483648
    %v772 = vmul.f32 %v769, 1.442695
    %v773 = vpow.pop %v772
    %v774 = vmul.f32 %v770, 1.442695
    %v775 = vpow.pop %v774
    %v776 = vmul.f32 %v771, 1.442695
    %v777 = vpow.pop %v776
    %v778 = vadd.f32 %v773, 1.0
    %v779 = vadd.f32 %v775, 1.0
    %v780 = vadd.f32 %v777, 1.0
    %v781 = vrcp.pop %v778
    %v782 = vmul.f32 1.0, %v781
    %v783 = vrcp.pop %v779
    %v784 = vmul.f32 1.0, %v783
    %v785 = vrcp.pop %v780
    %v786 = vmul.f32 1.0, %v785
    %v787 = vtanh.pop %v768
    %v788 = vmul.f32 %v784, %v615
    %v789 = vmul.f32 %v782, %v787
    %v790 = vadd.f32 %v788, %v789
    %v791 = vtanh.pop %v790
    %v792 = vmul.f32 %v786, %v791
    %s793 = scalar_lea.vmem [#allocation4], 64
    %v794 = vld [vmem:[%s793] sm:$0xff]
    %v795 = vld [vmem:[%s793 + $0x8] sm:$0xff]
    %v796 = vld [vmem:[%s793 + $0x10] sm:$0xff]
    %v797 = vld [vmem:[%s793 + $0x18] sm:$0xff]
    %798 = vmatprep.subr.mxu0 %v53
    %799 = vmatpush1.msra.mxu0 %v52
    %800 = vmatprep.subr.mxu0 %v57
    %801 = vmatpush1.msra.mxu0 %v56
    %802 = vmatprep.subr.mxu0 %v61
    %803 = vmatpush1.msra.mxu0 %v60
    %804 = vmatprep.subr.mxu0 %v65
    %805 = vmatpush1.msra.mxu0 %v64
    %806 = vmatprep.subr.mxu0 %v69
    %807 = vmatpush1.msra.mxu0 %v68
    %808 = vmatprep.subr.mxu0 %v73
    %809 = vmatpush1.msra.mxu0 %v72
    %810 = vmatprep.subr.mxu0 %v77
    %811 = vmatpush1.msra.mxu0 %v76
    %812 = vmatprep.subr.mxu0 %v81
    %813 = vmatpush1.msra.mxu0 %v80
    %814 = vmatprep.subr.mxu0 %v85
    %815 = vmatpush1.msra.mxu0 %v84
    %816 = vmatprep.subr.mxu0 %v89
    %817 = vmatpush1.msra.mxu0 %v88
    %818 = vmatprep.subr.mxu0 %v93
    %819 = vmatpush1.msra.mxu0 %v92
    %820 = vmatprep.subr.mxu0 %v97
    %821 = vmatpush1.msra.mxu0 %v96
    %822 = vmatprep.subr.mxu0 %v101
    %823 = vmatpush1.msra.mxu0 %v100
    %824 = vmatprep.subr.mxu0 %v105
    %825 = vmatpush1.msra.mxu0 %v104
    %826 = vmatprep.subr.mxu0 %v109
    %827 = vmatpush1.msra.mxu0 %v108
    %828 = vmatprep.subr.mxu0 %v113
    %829 = vmatpush1.msra.mxu0 %v112
    %830 = vmatprep.subr.mxu0 0.0
    %831 = vmatpush1.msra.mxu0 0.0
    %832 = vmatprep.subr.mxu0 0.0
    %833 = vmatpush1.msra.mxu0 0.0
    %834 = vmatprep.subr.mxu0 0.0
    %835 = vmatpush1.msra.mxu0 0.0
    %836 = vmatprep.subr.mxu0 0.0
    %837 = vmatpush1.msra.mxu0 0.0
    %838 = vmatprep.subr.mxu0 0.0
    %839 = vmatpush1.msra.mxu0 0.0
    %840 = vmatprep.subr.mxu0 0.0
    %841 = vmatpush1.msra.mxu0 0.0
    %842 = vmatprep.subr.mxu0 0.0
    %843 = vmatpush1.msra.mxu0 0.0
    %844 = vmatprep.subr.mxu0 0.0
    %845 = vmatpush1.msra.mxu0 0.0
    %846 = vmatprep.subr.mxu0 0.0
    %847 = vmatpush1.msra.mxu0 0.0
    %848 = vmatprep.subr.mxu0 0.0
    %849 = vmatpush1.msra.mxu0 0.0
    %850 = vmatprep.subr.mxu0 0.0
    %851 = vmatpush1.msra.mxu0 0.0
    %852 = vmatprep.subr.mxu0 0.0
    %853 = vmatpush1.msra.mxu0 0.0
    %854 = vmatprep.subr.mxu0 0.0
    %855 = vmatpush1.msra.mxu0 0.0
    %856 = vmatprep.subr.mxu0 0.0
    %857 = vmatpush1.msra.mxu0 0.0
    %858 = vmatprep.subr.mxu0 0.0
    %859 = vmatpush1.msra.mxu0 0.0
    %860 = vmatprep.subr.mxu0 0.0
    %861 = vmatpush1.msra.mxu0 0.0
    %862 = vmatprep.mubr.f32.mxu0 0.0
    %863 = vmatmul.mubr.f32.gmra.mrb[0].mxu0 %v792
    %v864 = vpop.f32.mrb[0].mxu0
    %v865 = vadd.f32 0.0, %v864
    %v866 = vpop.f32.mrb[0].mxu0
    %v867 = vadd.f32 0.0, %v866
    %868 = vdwg.mxu0
    %869 = vmatprep.subr.mxu0 %v55
    %870 = vmatpush1.msra.mxu0 %v54
    %871 = vmatprep.subr.mxu0 %v59
    %872 = vmatpush1.msra.mxu0 %v58
    %873 = vmatprep.subr.mxu0 %v63
    %874 = vmatpush1.msra.mxu0 %v62
    %875 = vmatprep.subr.mxu0 %v67
    %876 = vmatpush1.msra.mxu0 %v66
    %877 = vmatprep.subr.mxu0 %v71
    %878 = vmatpush1.msra.mxu0 %v70
    %879 = vmatprep.subr.mxu0 %v75
    %880 = vmatpush1.msra.mxu0 %v74
    %881 = vmatprep.subr.mxu0 %v79
    %882 = vmatpush1.msra.mxu0 %v78
    %883 = vmatprep.subr.mxu0 %v83
    %884 = vmatpush1.msra.mxu0 %v82
    %885 = vmatprep.subr.mxu0 %v87
    %886 = vmatpush1.msra.mxu0 %v86
    %887 = vmatprep.subr.mxu0 %v91
    %888 = vmatpush1.msra.mxu0 %v90
    %889 = vmatprep.subr.mxu0 %v95
    %890 = vmatpush1.msra.mxu0 %v94
    %891 = vmatprep.subr.mxu0 %v99
    %892 = vmatpush1.msra.mxu0 %v98
    %893 = vmatprep.subr.mxu0 %v103
    %894 = vmatpush1.msra.mxu0 %v102
    %895 = vmatprep.subr.mxu0 %v107
    %896 = vmatpush1.msra.mxu0 %v106
    %897 = vmatprep.subr.mxu0 %v111
    %898 = vmatpush1.msra.mxu0 %v110
    %899 = vmatprep.subr.mxu0 %v115
    %900 = vmatpush1.msra.mxu0 %v114
    %901 = vmatprep.subr.mxu0 0.0
    %902 = vmatpush1.msra.mxu0 0.0
    %903 = vmatprep.subr.mxu0 0.0
    %904 = vmatpush1.msra.mxu0 0.0
    %905 = vmatprep.subr.mxu0 0.0
    %906 = vmatpush1.msra.mxu0 0.0
    %907 = vmatprep.subr.mxu0 0.0
    %908 = vmatpush1.msra.mxu0 0.0
    %909 = vmatprep.subr.mxu0 0.0
    %910 = vmatpush1.msra.mxu0 0.0
    %911 = vmatprep.subr.mxu0 0.0
    %912 = vmatpush1.msra.mxu0 0.0
    %913 = vmatprep.subr.mxu0 0.0
    %914 = vmatpush1.msra.mxu0 0.0
    %915 = vmatprep.subr.mxu0 0.0
    %916 = vmatpush1.msra.mxu0 0.0
    %917 = vmatprep.subr.mxu0 0.0
    %918 = vmatpush1.msra.mxu0 0.0
    %919 = vmatprep.subr.mxu0 0.0
    %920 = vmatpush1.msra.mxu0 0.0
    %921 = vmatprep.subr.mxu0 0.0
    %922 = vmatpush1.msra.mxu0 0.0
    %923 = vmatprep.subr.mxu0 0.0
    %924 = vmatpush1.msra.mxu0 0.0
    %925 = vmatprep.subr.mxu0 0.0
    %926 = vmatpush1.msra.mxu0 0.0
    %927 = vmatprep.subr.mxu0 0.0
    %928 = vmatpush1.msra.mxu0 0.0
    %929 = vmatprep.subr.mxu0 0.0
    %930 = vmatpush1.msra.mxu0 0.0
    %931 = vmatprep.subr.mxu0 0.0
    %932 = vmatpush1.msra.mxu0 0.0
    %933 = vmatprep.mubr.f32.mxu0 0.0
    %934 = vmatmul.mubr.f32.gmra.mrb[0].mxu0 %v792
    %v935 = vpop.f32.mrb[0].mxu0
    %v936 = vadd.f32 0.0, %v935
    %v937 = vpop.f32.mrb[0].mxu0
    %v938 = vadd.f32 0.0, %v937
    %939 = vdwg.mxu0
    %v940 = vadd.f32 %v794, %v865
    %v941 = vadd.f32 %v795, %v867
    %v942 = vadd.f32 %v796, %v936
    %v943 = vadd.f32 %v797, %v938
    %v944 = vxor.u32 %v940, 2147483648
    %v945 = vxor.u32 %v941, 2147483648
    %v946 = vxor.u32 %v942, 2147483648
    %v947 = vmul.f32 %v944, 1.442695
    %v948 = vpow.pop %v947
    %v949 = vmul.f32 %v945, 1.442695
    %v950 = vpow.pop %v949
    %v951 = vmul.f32 %v946, 1.442695
    %v952 = vpow.pop %v951
    %v953 = vadd.f32 %v948, 1.0
    %v954 = vadd.f32 %v950, 1.0
    %v955 = vadd.f32 %v952, 1.0
    %v956 = vrcp.pop %v953
    %v957 = vmul.f32 1.0, %v956
    %v958 = vrcp.pop %v954
    %v959 = vmul.f32 1.0, %v958
    %v960 = vrcp.pop %v955
    %v961 = vmul.f32 1.0, %v960
    %v962 = vtanh.pop %v943
    %v963 = vmul.f32 %v959, %v790
    %v964 = vmul.f32 %v957, %v962
    %v965 = vadd.f32 %v963, %v964
    %v966 = vtanh.pop %v965
    %v967 = vmul.f32 %v961, %v966
    %s968 = scalar_lea.vmem [#allocation4], 96
    %v969 = vld [vmem:[%s968] sm:$0xff]
    %v970 = vld [vmem:[%s968 + $0x8] sm:$0xff]
    %v971 = vld [vmem:[%s968 + $0x10] sm:$0xff]
    %v972 = vld [vmem:[%s968 + $0x18] sm:$0xff]
    %973 = vmatprep.subr.mxu0 %v53
    %974 = vmatpush1.msra.mxu0 %v52
    %975 = vmatprep.subr.mxu0 %v57
    %976 = vmatpush1.msra.mxu0 %v56
    %977 = vmatprep.subr.mxu0 %v61
    %978 = vmatpush1.msra.mxu0 %v60
    %979 = vmatprep.subr.mxu0 %v65
    %980 = vmatpush1.msra.mxu0 %v64
    %981 = vmatprep.subr.mxu0 %v69
    %982 = vmatpush1.msra.mxu0 %v68
    %983 = vmatprep.subr.mxu0 %v73
    %984 = vmatpush1.msra.mxu0 %v72
    %985 = vmatprep.subr.mxu0 %v77
    %986 = vmatpush1.msra.mxu0 %v76
    %987 = vmatprep.subr.mxu0 %v81
    %988 = vmatpush1.msra.mxu0 %v80
    %989 = vmatprep.subr.mxu0 %v85
    %990 = vmatpush1.msra.mxu0 %v84
    %991 = vmatprep.subr.mxu0 %v89
    %992 = vmatpush1.msra.mxu0 %v88
    %993 = vmatprep.subr.mxu0 %v93
    %994 = vmatpush1.msra.mxu0 %v92
    %995 = vmatprep.subr.mxu0 %v97
    %996 = vmatpush1.msra.mxu0 %v96
    %997 = vmatprep.subr.mxu0 %v101
    %998 = vmatpush1.msra.mxu0 %v100
    %999 = vmatprep.subr.mxu0 %v105
    %1000 = vmatpush1.msra.mxu0 %v104
    %1001 = vmatprep.subr.mxu0 %v109
    %1002 = vmatpush1.msra.mxu0 %v108
    %1003 = vmatprep.subr.mxu0 %v113
    %1004 = vmatpush1.msra.mxu0 %v112
    %1005 = vmatprep.subr.mxu0 0.0
    %1006 = vmatpush1.msra.mxu0 0.0
    %1007 = vmatprep.subr.mxu0 0.0
    %1008 = vmatpush1.msra.mxu0 0.0
    %1009 = vmatprep.subr.mxu0 0.0
    %1010 = vmatpush1.msra.mxu0 0.0
    %1011 = vmatprep.subr.mxu0 0.0
    %1012 = vmatpush1.msra.mxu0 0.0
    %1013 = vmatprep.subr.mxu0 0.0
    %1014 = vmatpush1.msra.mxu0 0.0
    %1015 = vmatprep.subr.mxu0 0.0
    %1016 = vmatpush1.msra.mxu0 0.0
    %1017 = vmatprep.subr.mxu0 0.0
    %1018 = vmatpush1.msra.mxu0 0.0
    %1019 = vmatprep.subr.mxu0 0.0
    %1020 = vmatpush1.msra.mxu0 0.0
    %1021 = vmatprep.subr.mxu0 0.0
    %1022 = vmatpush1.msra.mxu0 0.0
    %1023 = vmatprep.subr.mxu0 0.0
    %1024 = vmatpush1.msra.mxu0 0.0
    %1025 = vmatprep.subr.mxu0 0.0
    %1026 = vmatpush1.msra.mxu0 0.0
    %1027 = vmatprep.subr.mxu0 0.0
    %1028 = vmatpush1.msra.mxu0 0.0
    %1029 = vmatprep.subr.mxu0 0.0
    %1030 = vmatpush1.msra.mxu0 0.0
    %1031 = vmatprep.subr.mxu0 0.0
    %1032 = vmatpush1.msra.mxu0 0.0
    %1033 = vmatprep.subr.mxu0 0.0
    %1034 = vmatpush1.msra.mxu0 0.0
    %1035 = vmatprep.subr.mxu0 0.0
    %1036 = vmatpush1.msra.mxu0 0.0
    %1037 = vmatprep.mubr.f32.mxu0 0.0
    %1038 = vmatmul.mubr.f32.gmra.mrb[0].mxu0 %v967
    %v1039 = vpop.f32.mrb[0].mxu0
    %v1040 = vadd.f32 0.0, %v1039
    %v1041 = vpop.f32.mrb[0].mxu0
    %v1042 = vadd.f32 0.0, %v1041
    %1043 = vdwg.mxu0
    %1044 = vmatprep.subr.mxu0 %v55
    %1045 = vmatpush1.msra.mxu0 %v54
    %1046 = vmatprep.subr.mxu0 %v59
    %1047 = vmatpush1.msra.mxu0 %v58
    %1048 = vmatprep.subr.mxu0 %v63
    %1049 = vmatpush1.msra.mxu0 %v62
    %1050 = vmatprep.subr.mxu0 %v67
    %1051 = vmatpush1.msra.mxu0 %v66
    %1052 = vmatprep.subr.mxu0 %v71
    %1053 = vmatpush1.msra.mxu0 %v70
    %1054 = vmatprep.subr.mxu0 %v75
    %1055 = vmatpush1.msra.mxu0 %v74
    %1056 = vmatprep.subr.mxu0 %v79
    %1057 = vmatpush1.msra.mxu0 %v78
    %1058 = vmatprep.subr.mxu0 %v83
    %1059 = vmatpush1.msra.mxu0 %v82
    %1060 = vmatprep.subr.mxu0 %v87
    %1061 = vmatpush1.msra.mxu0 %v86
    %1062 = vmatprep.subr.mxu0 %v91
    %1063 = vmatpush1.msra.mxu0 %v90
    %1064 = vmatprep.subr.mxu0 %v95
    %1065 = vmatpush1.msra.mxu0 %v94
    %1066 = vmatprep.subr.mxu0 %v99
    %1067 = vmatpush1.msra.mxu0 %v98
    %1068 = vmatprep.subr.mxu0 %v103
    %1069 = vmatpush1.msra.mxu0 %v102
    %1070 = vmatprep.subr.mxu0 %v107
    %1071 = vmatpush1.msra.mxu0 %v106
    %1072 = vmatprep.subr.mxu0 %v111
    %1073 = vmatpush1.msra.mxu0 %v110
    %1074 = vmatprep.subr.mxu0 %v115
    %1075 = vmatpush1.msra.mxu0 %v114
    %1076 = vmatprep.subr.mxu0 0.0
    %1077 = vmatpush1.msra.mxu0 0.0
    %1078 = vmatprep.subr.mxu0 0.0
    %1079 = vmatpush1.msra.mxu0 0.0
    %1080 = vmatprep.subr.mxu0 0.0
    %1081 = vmatpush1.msra.mxu0 0.0
    %1082 = vmatprep.subr.mxu0 0.0
    %1083 = vmatpush1.msra.mxu0 0.0
    %1084 = vmatprep.subr.mxu0 0.0
    %1085 = vmatpush1.msra.mxu0 0.0
    %1086 = vmatprep.subr.mxu0 0.0
    %1087 = vmatpush1.msra.mxu0 0.0
    %1088 = vmatprep.subr.mxu0 0.0
    %1089 = vmatpush1.msra.mxu0 0.0
    %1090 = vmatprep.subr.mxu0 0.0
    %1091 = vmatpush1.msra.mxu0 0.0
    %1092 = vmatprep.subr.mxu0 0.0
    %1093 = vmatpush1.msra.mxu0 0.0
    %1094 = vmatprep.subr.mxu0 0.0
    %1095 = vmatpush1.msra.mxu0 0.0
    %1096 = vmatprep.subr.mxu0 0.0
    %1097 = vmatpush1.msra.mxu0 0.0
    %1098 = vmatprep.subr.mxu0 0.0
    %1099 = vmatpush1.msra.mxu0 0.0
    %1100 = vmatprep.subr.mxu0 0.0
    %1101 = vmatpush1.msra.mxu0 0.0
    %1102 = vmatprep.subr.mxu0 0.0
    %1103 = vmatpush1.msra.mxu0 0.0
    %1104 = vmatprep.subr.mxu0 0.0
    %1105 = vmatpush1.msra.mxu0 0.0
    %1106 = vmatprep.subr.mxu0 0.0
    %1107 = vmatpush1.msra.mxu0 0.0
    %1108 = vmatprep.mubr.f32.mxu0 0.0
    %1109 = vmatmul.mubr.f32.gmra.mrb[0].mxu0 %v967
    %v1110 = vpop.f32.mrb[0].mxu0
    %v1111 = vadd.f32 0.0, %v1110
    %v1112 = vpop.f32.mrb[0].mxu0
    %v1113 = vadd.f32 0.0, %v1112
    %1114 = vdwg.mxu0
    %v1115 = vadd.f32 %v969, %v1040
    %v1116 = vadd.f32 %v970, %v1042
    %v1117 = vadd.f32 %v971, %v1111
    %v1118 = vadd.f32 %v972, %v1113
    %v1119 = vxor.u32 %v1115, 2147483648
    %v1120 = vxor.u32 %v1116, 2147483648
    %v1121 = vxor.u32 %v1117, 2147483648
    %v1122 = vmul.f32 %v1119, 1.442695
    %v1123 = vpow.pop %v1122
    %v1124 = vmul.f32 %v1120, 1.442695
    %v1125 = vpow.pop %v1124
    %v1126 = vmul.f32 %v1121, 1.442695
    %v1127 = vpow.pop %v1126
    %v1128 = vadd.f32 %v1123, 1.0
    %v1129 = vadd.f32 %v1125, 1.0
    %v1130 = vadd.f32 %v1127, 1.0
    %v1131 = vrcp.pop %v1128
    %v1132 = vmul.f32 1.0, %v1131
    %v1133 = vrcp.pop %v1129
    %v1134 = vmul.f32 1.0, %v1133
    %v1135 = vrcp.pop %v1130
    %v1136 = vmul.f32 1.0, %v1135
    %v1137 = vtanh.pop %v1118
    %v1138 = vmul.f32 %v1134, %v965
    %v1139 = vmul.f32 %v1132, %v1137
    %v1140 = vadd.f32 %v1138, %v1139
    %v1141 = vtanh.pop %v1140
    %v1142 = vmul.f32 %v1136, %v1141
    %s1143 = scalar_lea.vmem [#allocation4], 128
    %v1144 = vld [vmem:[%s1143] sm:$0xff]
    %v1145 = vld [vmem:[%s1143 + $0x8] sm:$0xff]
    %v1146 = vld [vmem:[%s1143 + $0x10] sm:$0xff]
    %v1147 = vld [vmem:[%s1143 + $0x18] sm:$0xff]
    %1148 = vmatprep.subr.mxu0 %v53
    %1149 = vmatpush1.msra.mxu0 %v52
    %1150 = vmatprep.subr.mxu0 %v57
    %1151 = vmatpush1.msra.mxu0 %v56
    %1152 = vmatprep.subr.mxu0 %v61
    %1153 = vmatpush1.msra.mxu0 %v60
    %1154 = vmatprep.subr.mxu0 %v65
    %1155 = vmatpush1.msra.mxu0 %v64
    %1156 = vmatprep.subr.mxu0 %v69
    %1157 = vmatpush1.msra.mxu0 %v68
    %1158 = vmatprep.subr.mxu0 %v73
    %1159 = vmatpush1.msra.mxu0 %v72
    %1160 = vmatprep.subr.mxu0 %v77
    %1161 = vmatpush1.msra.mxu0 %v76
    %1162 = vmatprep.subr.mxu0 %v81
    %1163 = vmatpush1.msra.mxu0 %v80
    %1164 = vmatprep.subr.mxu0 %v85
    %1165 = vmatpush1.msra.mxu0 %v84
    %1166 = vmatprep.subr.mxu0 %v89
    %1167 = vmatpush1.msra.mxu0 %v88
    %1168 = vmatprep.subr.mxu0 %v93
    %1169 = vmatpush1.msra.mxu0 %v92
    %1170 = vmatprep.subr.mxu0 %v97
    %1171 = vmatpush1.msra.mxu0 %v96
    %1172 = vmatprep.subr.mxu0 %v101
    %1173 = vmatpush1.msra.mxu0 %v100
    %1174 = vmatprep.subr.mxu0 %v105
    %1175 = vmatpush1.msra.mxu0 %v104
    %1176 = vmatprep.subr.mxu0 %v109
    %1177 = vmatpush1.msra.mxu0 %v108
    %1178 = vmatprep.subr.mxu0 %v113
    %1179 = vmatpush1.msra.mxu0 %v112
    %1180 = vmatprep.subr.mxu0 0.0
    %1181 = vmatpush1.msra.mxu0 0.0
    %1182 = vmatprep.subr.mxu0 0.0
    %1183 = vmatpush1.msra.mxu0 0.0
    %1184 = vmatprep.subr.mxu0 0.0
    %1185 = vmatpush1.msra.mxu0 0.0
    %1186 = vmatprep.subr.mxu0 0.0
    %1187 = vmatpush1.msra.mxu0 0.0
    %1188 = vmatprep.subr.mxu0 0.0
    %1189 = vmatpush1.msra.mxu0 0.0
    %1190 = vmatprep.subr.mxu0 0.0
    %1191 = vmatpush1.msra.mxu0 0.0
    %1192 = vmatprep.subr.mxu0 0.0
    %1193 = vmatpush1.msra.mxu0 0.0
    %1194 = vmatprep.subr.mxu0 0.0
    %1195 = vmatpush1.msra.mxu0 0.0
    %1196 = vmatprep.subr.mxu0 0.0
    %1197 = vmatpush1.msra.mxu0 0.0
    %1198 = vmatprep.subr.mxu0 0.0
    %1199 = vmatpush1.msra.mxu0 0.0
    %1200 = vmatprep.subr.mxu0 0.0
    %1201 = vmatpush1.msra.mxu0 0.0
    %1202 = vmatprep.subr.mxu0 0.0
    %1203 = vmatpush1.msra.mxu0 0.0
    %1204 = vmatprep.subr.mxu0 0.0
    %1205 = vmatpush1.msra.mxu0 0.0
    %1206 = vmatprep.subr.mxu0 0.0
    %1207 = vmatpush1.msra.mxu0 0.0
    %1208 = vmatprep.subr.mxu0 0.0
    %1209 = vmatpush1.msra.mxu0 0.0
    %1210 = vmatprep.subr.mxu0 0.0
    %1211 = vmatpush1.msra.mxu0 0.0
    %1212 = vmatprep.mubr.f32.mxu0 0.0
    %1213 = vmatmul.mubr.f32.gmra.mrb[0].mxu0 %v1142
    %v1214 = vpop.f32.mrb[0].mxu0
    %v1215 = vadd.f32 0.0, %v1214
    %v1216 = vpop.f32.mrb[0].mxu0
    %v1217 = vadd.f32 0.0, %v1216
    %1218 = vdwg.mxu0
    %1219 = vmatprep.subr.mxu0 %v55
    %1220 = vmatpush1.msra.mxu0 %v54
    %1221 = vmatprep.subr.mxu0 %v59
    %1222 = vmatpush1.msra.mxu0 %v58
    %1223 = vmatprep.subr.mxu0 %v63
    %1224 = vmatpush1.msra.mxu0 %v62
    %1225 = vmatprep.subr.mxu0 %v67
    %1226 = vmatpush1.msra.mxu0 %v66
    %1227 = vmatprep.subr.mxu0 %v71
    %1228 = vmatpush1.msra.mxu0 %v70
    %1229 = vmatprep.subr.mxu0 %v75
    %1230 = vmatpush1.msra.mxu0 %v74
    %1231 = vmatprep.subr.mxu0 %v79
    %1232 = vmatpush1.msra.mxu0 %v78
    %1233 = vmatprep.subr.mxu0 %v83
    %1234 = vmatpush1.msra.mxu0 %v82
    %1235 = vmatprep.subr.mxu0 %v87
    %1236 = vmatpush1.msra.mxu0 %v86
    %1237 = vmatprep.subr.mxu0 %v91
    %1238 = vmatpush1.msra.mxu0 %v90
    %1239 = vmatprep.subr.mxu0 %v95
    %1240 = vmatpush1.msra.mxu0 %v94
    %1241 = vmatprep.subr.mxu0 %v99
    %1242 = vmatpush1.msra.mxu0 %v98
    %1243 = vmatprep.subr.mxu0 %v103
    %1244 = vmatpush1.msra.mxu0 %v102
    %1245 = vmatprep.subr.mxu0 %v107
    %1246 = vmatpush1.msra.mxu0 %v106
    %1247 = vmatprep.subr.mxu0 %v111
    %1248 = vmatpush1.msra.mxu0 %v110
    %1249 = vmatprep.subr.mxu0 %v115
    %1250 = vmatpush1.msra.mxu0 %v114
    %1251 = vmatprep.subr.mxu0 0.0
    %1252 = vmatpush1.msra.mxu0 0.0
    %1253 = vmatprep.subr.mxu0 0.0
    %1254 = vmatpush1.msra.mxu0 0.0
    %1255 = vmatprep.subr.mxu0 0.0
    %1256 = vmatpush1.msra.mxu0 0.0
    %1257 = vmatprep.subr.mxu0 0.0
    %1258 = vmatpush1.msra.mxu0 0.0
    %1259 = vmatprep.subr.mxu0 0.0
    %1260 = vmatpush1.msra.mxu0 0.0
    %1261 = vmatprep.subr.mxu0 0.0
    %1262 = vmatpush1.msra.mxu0 0.0
    %1263 = vmatprep.subr.mxu0 0.0
    %1264 = vmatpush1.msra.mxu0 0.0
    %1265 = vmatprep.subr.mxu0 0.0
    %1266 = vmatpush1.msra.mxu0 0.0
    %1267 = vmatprep.subr.mxu0 0.0
    %1268 = vmatpush1.msra.mxu0 0.0
    %1269 = vmatprep.subr.mxu0 0.0
    %1270 = vmatpush1.msra.mxu0 0.0
    %1271 = vmatprep.subr.mxu0 0.0
    %1272 = vmatpush1.msra.mxu0 0.0
    %1273 = vmatprep.subr.mxu0 0.0
    %1274 = vmatpush1.msra.mxu0 0.0
    %1275 = vmatprep.subr.mxu0 0.0
    %1276 = vmatpush1.msra.mxu0 0.0
    %1277 = vmatprep.subr.mxu0 0.0
    %1278 = vmatpush1.msra.mxu0 0.0
    %1279 = vmatprep.subr.mxu0 0.0
    %1280 = vmatpush1.msra.mxu0 0.0
    %1281 = vmatprep.subr.mxu0 0.0
    %1282 = vmatpush1.msra.mxu0 0.0
    %1283 = vmatprep.mubr.f32.mxu0 0.0
    %1284 = vmatmul.mubr.f32.gmra.mrb[0].mxu0 %v1142
    %v1285 = vpop.f32.mrb[0].mxu0
    %v1286 = vadd.f32 0.0, %v1285
    %v1287 = vpop.f32.mrb[0].mxu0
    %v1288 = vadd.f32 0.0, %v1287
    %1289 = vdwg.mxu0
    %v1290 = vadd.f32 %v1144, %v1215
    %v1291 = vadd.f32 %v1145, %v1217
    %v1292 = vadd.f32 %v1146, %v1286
    %v1293 = vadd.f32 %v1147, %v1288
    %v1294 = vxor.u32 %v1290, 2147483648
    %v1295 = vxor.u32 %v1291, 2147483648
    %v1296 = vxor.u32 %v1292, 2147483648
    %v1297 = vmul.f32 %v1294, 1.442695
    %v1298 = vpow.pop %v1297
    %v1299 = vmul.f32 %v1295, 1.442695
    %v1300 = vpow.pop %v1299
    %v1301 = vmul.f32 %v1296, 1.442695
    %v1302 = vpow.pop %v1301
    %v1303 = vadd.f32 %v1298, 1.0
    %v1304 = vadd.f32 %v1300, 1.0
    %v1305 = vadd.f32 %v1302, 1.0
    %v1306 = vrcp.pop %v1303
    %v1307 = vmul.f32 1.0, %v1306
    %v1308 = vrcp.pop %v1304
    %v1309 = vmul.f32 1.0, %v1308
    %v1310 = vrcp.pop %v1305
    %v1311 = vmul.f32 1.0, %v1310
    %v1312 = vtanh.pop %v1293
    %v1313 = vmul.f32 %v1309, %v1140
    %v1314 = vmul.f32 %v1307, %v1312
    %v1315 = vadd.f32 %v1313, %v1314
    %v1316 = vtanh.pop %v1315
    %v1317 = vmul.f32 %v1311, %v1316
    %s1318 = scalar_lea.vmem [#allocation4], 160
    %v1319 = vld [vmem:[%s1318] sm:$0xff]
    %v1320 = vld [vmem:[%s1318 + $0x8] sm:$0xff]
    %v1321 = vld [vmem:[%s1318 + $0x10] sm:$0xff]
    %v1322 = vld [vmem:[%s1318 + $0x18] sm:$0xff]
    %1323 = vmatprep.subr.mxu0 %v53
    %1324 = vmatpush1.msra.mxu0 %v52
    %1325 = vmatprep.subr.mxu0 %v57
    %1326 = vmatpush1.msra.mxu0 %v56
    %1327 = vmatprep.subr.mxu0 %v61
    %1328 = vmatpush1.msra.mxu0 %v60
    %1329 = vmatprep.subr.mxu0 %v65
    %1330 = vmatpush1.msra.mxu0 %v64
    %1331 = vmatprep.subr.mxu0 %v69
    %1332 = vmatpush1.msra.mxu0 %v68
    %1333 = vmatprep.subr.mxu0 %v73
    %1334 = vmatpush1.msra.mxu0 %v72
    %1335 = vmatprep.subr.mxu0 %v77
    %1336 = vmatpush1.msra.mxu0 %v76
    %1337 = vmatprep.subr.mxu0 %v81
    %1338 = vmatpush1.msra.mxu0 %v80
    %1339 = vmatprep.subr.mxu0 %v85
    %1340 = vmatpush1.msra.mxu0 %v84
    %1341 = vmatprep.subr.mxu0 %v89
    %1342 = vmatpush1.msra.mxu0 %v88
    %1343 = vmatprep.subr.mxu0 %v93
    %1344 = vmatpush1.msra.mxu0 %v92
    %1345 = vmatprep.subr.mxu0 %v97
    %1346 = vmatpush1.msra.mxu0 %v96
    %1347 = vmatprep.subr.mxu0 %v101
    %1348 = vmatpush1.msra.mxu0 %v100
    %1349 = vmatprep.subr.mxu0 %v105
    %1350 = vmatpush1.msra.mxu0 %v104
    %1351 = vmatprep.subr.mxu0 %v109
    %1352 = vmatpush1.msra.mxu0 %v108
    %1353 = vmatprep.subr.mxu0 %v113
    %1354 = vmatpush1.msra.mxu0 %v112
    %1355 = vmatprep.subr.mxu0 0.0
    %1356 = vmatpush1.msra.mxu0 0.0
    %1357 = vmatprep.subr.mxu0 0.0
    %1358 = vmatpush1.msra.mxu0 0.0
    %1359 = vmatprep.subr.mxu0 0.0
    %1360 = vmatpush1.msra.mxu0 0.0
    %1361 = vmatprep.subr.mxu0 0.0
    %1362 = vmatpush1.msra.mxu0 0.0
    %1363 = vmatprep.subr.mxu0 0.0
    %1364 = vmatpush1.msra.mxu0 0.0
    %1365 = vmatprep.subr.mxu0 0.0
    %1366 = vmatpush1.msra.mxu0 0.0
    %1367 = vmatprep.subr.mxu0 0.0
    %1368 = vmatpush1.msra.mxu0 0.0
    %1369 = vmatprep.subr.mxu0 0.0
    %1370 = vmatpush1.msra.mxu0 0.0
    %1371 = vmatprep.subr.mxu0 0.0
    %1372 = vmatpush1.msra.mxu0 0.0
    %1373 = vmatprep.subr.mxu0 0.0
    %1374 = vmatpush1.msra.mxu0 0.0
    %1375 = vmatprep.subr.mxu0 0.0
    %1376 = vmatpush1.msra.mxu0 0.0
    %1377 = vmatprep.subr.mxu0 0.0
    %1378 = vmatpush1.msra.mxu0 0.0
    %1379 = vmatprep.subr.mxu0 0.0
    %1380 = vmatpush1.msra.mxu0 0.0
    %1381 = vmatprep.subr.mxu0 0.0
    %1382 = vmatpush1.msra.mxu0 0.0
    %1383 = vmatprep.subr.mxu0 0.0
    %1384 = vmatpush1.msra.mxu0 0.0
    %1385 = vmatprep.subr.mxu0 0.0
    %1386 = vmatpush1.msra.mxu0 0.0
    %1387 = vmatprep.mubr.f32.mxu0 0.0
    %1388 = vmatmul.mubr.f32.gmra.mrb[0].mxu0 %v1317
    %v1389 = vpop.f32.mrb[0].mxu0
    %v1390 = vadd.f32 0.0, %v1389
    %v1391 = vpop.f32.mrb[0].mxu0
    %v1392 = vadd.f32 0.0, %v1391
    %1393 = vdwg.mxu0
    %1394 = vmatprep.subr.mxu0 %v55
    %1395 = vmatpush1.msra.mxu0 %v54
    %1396 = vmatprep.subr.mxu0 %v59
    %1397 = vmatpush1.msra.mxu0 %v58
    %1398 = vmatprep.subr.mxu0 %v63
    %1399 = vmatpush1.msra.mxu0 %v62
    %1400 = vmatprep.subr.mxu0 %v67
    %1401 = vmatpush1.msra.mxu0 %v66
    %1402 = vmatprep.subr.mxu0 %v71
    %1403 = vmatpush1.msra.mxu0 %v70
    %1404 = vmatprep.subr.mxu0 %v75
    %1405 = vmatpush1.msra.mxu0 %v74
    %1406 = vmatprep.subr.mxu0 %v79
    %1407 = vmatpush1.msra.mxu0 %v78
    %1408 = vmatprep.subr.mxu0 %v83
    %1409 = vmatpush1.msra.mxu0 %v82
    %1410 = vmatprep.subr.mxu0 %v87
    %1411 = vmatpush1.msra.mxu0 %v86
    %1412 = vmatprep.subr.mxu0 %v91
    %1413 = vmatpush1.msra.mxu0 %v90
    %1414 = vmatprep.subr.mxu0 %v95
    %1415 = vmatpush1.msra.mxu0 %v94
    %1416 = vmatprep.subr.mxu0 %v99
    %1417 = vmatpush1.msra.mxu0 %v98
    %1418 = vmatprep.subr.mxu0 %v103
    %1419 = vmatpush1.msra.mxu0 %v102
    %1420 = vmatprep.subr.mxu0 %v107
    %1421 = vmatpush1.msra.mxu0 %v106
    %1422 = vmatprep.subr.mxu0 %v111
    %1423 = vmatpush1.msra.mxu0 %v110
    %1424 = vmatprep.subr.mxu0 %v115
    %1425 = vmatpush1.msra.mxu0 %v114
    %1426 = vmatprep.subr.mxu0 0.0
    %1427 = vmatpush1.msra.mxu0 0.0
    %1428 = vmatprep.subr.mxu0 0.0
    %1429 = vmatpush1.msra.mxu0 0.0
    %1430 = vmatprep.subr.mxu0 0.0
    %1431 = vmatpush1.msra.mxu0 0.0
    %1432 = vmatprep.subr.mxu0 0.0
    %1433 = vmatpush1.msra.mxu0 0.0
    %1434 = vmatprep.subr.mxu0 0.0
    %1435 = vmatpush1.msra.mxu0 0.0
    %1436 = vmatprep.subr.mxu0 0.0
    %1437 = vmatpush1.msra.mxu0 0.0
    %1438 = vmatprep.subr.mxu0 0.0
    %1439 = vmatpush1.msra.mxu0 0.0
    %1440 = vmatprep.subr.mxu0 0.0
    %1441 = vmatpush1.msra.mxu0 0.0
    %1442 = vmatprep.subr.mxu0 0.0
    %1443 = vmatpush1.msra.mxu0 0.0
    %1444 = vmatprep.subr.mxu0 0.0
    %1445 = vmatpush1.msra.mxu0 0.0
    %1446 = vmatprep.subr.mxu0 0.0
    %1447 = vmatpush1.msra.mxu0 0.0
    %1448 = vmatprep.subr.mxu0 0.0
    %1449 = vmatpush1.msra.mxu0 0.0
    %1450 = vmatprep.subr.mxu0 0.0
    %1451 = vmatpush1.msra.mxu0 0.0
    %1452 = vmatprep.subr.mxu0 0.0
    %1453 = vmatpush1.msra.mxu0 0.0
    %1454 = vmatprep.subr.mxu0 0.0
    %1455 = vmatpush1.msra.mxu0 0.0
    %1456 = vmatprep.subr.mxu0 0.0
    %1457 = vmatpush1.msra.mxu0 0.0
    %1458 = vmatprep.mubr.f32.mxu0 0.0
    %1459 = vmatmul.mubr.f32.gmra.mrb[0].mxu0 %v1317
    %v1460 = vpop.f32.mrb[0].mxu0
    %v1461 = vadd.f32 0.0, %v1460
    %v1462 = vpop.f32.mrb[0].mxu0
    %v1463 = vadd.f32 0.0, %v1462
    %1464 = vdwg.mxu0
    %v1465 = vadd.f32 %v1319, %v1390
    %v1466 = vadd.f32 %v1320, %v1392
    %v1467 = vadd.f32 %v1321, %v1461
    %v1468 = vadd.f32 %v1322, %v1463
    %v1469 = vxor.u32 %v1465, 2147483648
    %v1470 = vxor.u32 %v1466, 2147483648
    %v1471 = vxor.u32 %v1467, 2147483648
    %v1472 = vmul.f32 %v1469, 1.442695
    %v1473 = vpow.pop %v1472
    %v1474 = vmul.f32 %v1470, 1.442695
    %v1475 = vpow.pop %v1474
    %v1476 = vmul.f32 %v1471, 1.442695
    %v1477 = vpow.pop %v1476
    %v1478 = vadd.f32 %v1473, 1.0
    %v1479 = vadd.f32 %v1475, 1.0
    %v1480 = vadd.f32 %v1477, 1.0
    %v1481 = vrcp.pop %v1478
    %v1482 = vmul.f32 1.0, %v1481
    %v1483 = vrcp.pop %v1479
    %v1484 = vmul.f32 1.0, %v1483
    %v1485 = vrcp.pop %v1480
    %v1486 = vmul.f32 1.0, %v1485
    %v1487 = vtanh.pop %v1468
    %v1488 = vmul.f32 %v1484, %v1315
    %v1489 = vmul.f32 %v1482, %v1487
    %v1490 = vadd.f32 %v1488, %v1489
    %v1491 = vtanh.pop %v1490
    %v1492 = vmul.f32 %v1486, %v1491
    %s1493 = scalar_lea.vmem [#allocation4], 192
    %v1494 = vld [vmem:[%s1493] sm:$0xff]
    %v1495 = vld [vmem:[%s1493 + $0x8] sm:$0xff]
    %v1496 = vld [vmem:[%s1493 + $0x10] sm:$0xff]
    %v1497 = vld [vmem:[%s1493 + $0x18] sm:$0xff]
    %1498 = vmatprep.subr.mxu0 %v53
    %1499 = vmatpush1.msra.mxu0 %v52
    %1500 = vmatprep.subr.mxu0 %v57
    %1501 = vmatpush1.msra.mxu0 %v56
    %1502 = vmatprep.subr.mxu0 %v61
    %1503 = vmatpush1.msra.mxu0 %v60
    %1504 = vmatprep.subr.mxu0 %v65
    %1505 = vmatpush1.msra.mxu0 %v64
    %1506 = vmatprep.subr.mxu0 %v69
    %1507 = vmatpush1.msra.mxu0 %v68
    %1508 = vmatprep.subr.mxu0 %v73
    %1509 = vmatpush1.msra.mxu0 %v72
    %1510 = vmatprep.subr.mxu0 %v77
    %1511 = vmatpush1.msra.mxu0 %v76
    %1512 = vmatprep.subr.mxu0 %v81
    %1513 = vmatpush1.msra.mxu0 %v80
    %1514 = vmatprep.subr.mxu0 %v85
    %1515 = vmatpush1.msra.mxu0 %v84
    %1516 = vmatprep.subr.mxu0 %v89
    %1517 = vmatpush1.msra.mxu0 %v88
    %1518 = vmatprep.subr.mxu0 %v93
    %1519 = vmatpush1.msra.mxu0 %v92
    %1520 = vmatprep.subr.mxu0 %v97
    %1521 = vmatpush1.msra.mxu0 %v96
    %1522 = vmatprep.subr.mxu0 %v101
    %1523 = vmatpush1.msra.mxu0 %v100
    %1524 = vmatprep.subr.mxu0 %v105
    %1525 = vmatpush1.msra.mxu0 %v104
    %1526 = vmatprep.subr.mxu0 %v109
    %1527 = vmatpush1.msra.mxu0 %v108
    %1528 = vmatprep.subr.mxu0 %v113
    %1529 = vmatpush1.msra.mxu0 %v112
    %1530 = vmatprep.subr.mxu0 0.0
    %1531 = vmatpush1.msra.mxu0 0.0
    %1532 = vmatprep.subr.mxu0 0.0
    %1533 = vmatpush1.msra.mxu0 0.0
    %1534 = vmatprep.subr.mxu0 0.0
    %1535 = vmatpush1.msra.mxu0 0.0
    %1536 = vmatprep.subr.mxu0 0.0
    %1537 = vmatpush1.msra.mxu0 0.0
    %1538 = vmatprep.subr.mxu0 0.0
    %1539 = vmatpush1.msra.mxu0 0.0
    %1540 = vmatprep.subr.mxu0 0.0
    %1541 = vmatpush1.msra.mxu0 0.0
    %1542 = vmatprep.subr.mxu0 0.0
    %1543 = vmatpush1.msra.mxu0 0.0
    %1544 = vmatprep.subr.mxu0 0.0
    %1545 = vmatpush1.msra.mxu0 0.0
    %1546 = vmatprep.subr.mxu0 0.0
    %1547 = vmatpush1.msra.mxu0 0.0
    %1548 = vmatprep.subr.mxu0 0.0
    %1549 = vmatpush1.msra.mxu0 0.0
    %1550 = vmatprep.subr.mxu0 0.0
    %1551 = vmatpush1.msra.mxu0 0.0
    %1552 = vmatprep.subr.mxu0 0.0
    %1553 = vmatpush1.msra.mxu0 0.0
    %1554 = vmatprep.subr.mxu0 0.0
    %1555 = vmatpush1.msra.mxu0 0.0
    %1556 = vmatprep.subr.mxu0 0.0
    %1557 = vmatpush1.msra.mxu0 0.0
    %1558 = vmatprep.subr.mxu0 0.0
    %1559 = vmatpush1.msra.mxu0 0.0
    %1560 = vmatprep.subr.mxu0 0.0
    %1561 = vmatpush1.msra.mxu0 0.0
    %1562 = vmatprep.mubr.f32.mxu0 0.0
    %1563 = vmatmul.mubr.f32.gmra.mrb[0].mxu0 %v1492
    %v1564 = vpop.f32.mrb[0].mxu0
    %v1565 = vadd.f32 0.0, %v1564
    %v1566 = vpop.f32.mrb[0].mxu0
    %v1567 = vadd.f32 0.0, %v1566
    %1568 = vdwg.mxu0
    %1569 = vmatprep.subr.mxu0 %v55
    %1570 = vmatpush1.msra.mxu0 %v54
    %1571 = vmatprep.subr.mxu0 %v59
    %1572 = vmatpush1.msra.mxu0 %v58
    %1573 = vmatprep.subr.mxu0 %v63
    %1574 = vmatpush1.msra.mxu0 %v62
    %1575 = vmatprep.subr.mxu0 %v67
    %1576 = vmatpush1.msra.mxu0 %v66
    %1577 = vmatprep.subr.mxu0 %v71
    %1578 = vmatpush1.msra.mxu0 %v70
    %1579 = vmatprep.subr.mxu0 %v75
    %1580 = vmatpush1.msra.mxu0 %v74
    %1581 = vmatprep.subr.mxu0 %v79
    %1582 = vmatpush1.msra.mxu0 %v78
    %1583 = vmatprep.subr.mxu0 %v83
    %1584 = vmatpush1.msra.mxu0 %v82
    %1585 = vmatprep.subr.mxu0 %v87
    %1586 = vmatpush1.msra.mxu0 %v86
    %1587 = vmatprep.subr.mxu0 %v91
    %1588 = vmatpush1.msra.mxu0 %v90
    %1589 = vmatprep.subr.mxu0 %v95
    %1590 = vmatpush1.msra.mxu0 %v94
    %1591 = vmatprep.subr.mxu0 %v99
    %1592 = vmatpush1.msra.mxu0 %v98
    %1593 = vmatprep.subr.mxu0 %v103
    %1594 = vmatpush1.msra.mxu0 %v102
    %1595 = vmatprep.subr.mxu0 %v107
    %1596 = vmatpush1.msra.mxu0 %v106
    %1597 = vmatprep.subr.mxu0 %v111
    %1598 = vmatpush1.msra.mxu0 %v110
    %1599 = vmatprep.subr.mxu0 %v115
    %1600 = vmatpush1.msra.mxu0 %v114
    %1601 = vmatprep.subr.mxu0 0.0
    %1602 = vmatpush1.msra.mxu0 0.0
    %1603 = vmatprep.subr.mxu0 0.0
    %1604 = vmatpush1.msra.mxu0 0.0
    %1605 = vmatprep.subr.mxu0 0.0
    %1606 = vmatpush1.msra.mxu0 0.0
    %1607 = vmatprep.subr.mxu0 0.0
    %1608 = vmatpush1.msra.mxu0 0.0
    %1609 = vmatprep.subr.mxu0 0.0
    %1610 = vmatpush1.msra.mxu0 0.0
    %1611 = vmatprep.subr.mxu0 0.0
    %1612 = vmatpush1.msra.mxu0 0.0
    %1613 = vmatprep.subr.mxu0 0.0
    %1614 = vmatpush1.msra.mxu0 0.0
    %1615 = vmatprep.subr.mxu0 0.0
    %1616 = vmatpush1.msra.mxu0 0.0
    %1617 = vmatprep.subr.mxu0 0.0
    %1618 = vmatpush1.msra.mxu0 0.0
    %1619 = vmatprep.subr.mxu0 0.0
    %1620 = vmatpush1.msra.mxu0 0.0
    %1621 = vmatprep.subr.mxu0 0.0
    %1622 = vmatpush1.msra.mxu0 0.0
    %1623 = vmatprep.subr.mxu0 0.0
    %1624 = vmatpush1.msra.mxu0 0.0
    %1625 = vmatprep.subr.mxu0 0.0
    %1626 = vmatpush1.msra.mxu0 0.0
    %1627 = vmatprep.subr.mxu0 0.0
    %1628 = vmatpush1.msra.mxu0 0.0
    %1629 = vmatprep.subr.mxu0 0.0
    %1630 = vmatpush1.msra.mxu0 0.0
    %1631 = vmatprep.subr.mxu0 0.0
    %1632 = vmatpush1.msra.mxu0 0.0
    %1633 = vmatprep.mubr.f32.mxu0 0.0
    %1634 = vmatmul.mubr.f32.gmra.mrb[0].mxu0 %v1492
    %v1635 = vpop.f32.mrb[0].mxu0
    %v1636 = vadd.f32 0.0, %v1635
    %v1637 = vpop.f32.mrb[0].mxu0
    %v1638 = vadd.f32 0.0, %v1637
    %1639 = vdwg.mxu0
    %v1640 = vadd.f32 %v1494, %v1565
    %v1641 = vadd.f32 %v1495, %v1567
    %v1642 = vadd.f32 %v1496, %v1636
    %v1643 = vadd.f32 %v1497, %v1638
    %v1644 = vxor.u32 %v1640, 2147483648
    %v1645 = vxor.u32 %v1641, 2147483648
    %v1646 = vxor.u32 %v1642, 2147483648
    %v1647 = vmul.f32 %v1644, 1.442695
    %v1648 = vpow.pop %v1647
    %v1649 = vmul.f32 %v1645, 1.442695
    %v1650 = vpow.pop %v1649
    %v1651 = vmul.f32 %v1646, 1.442695
    %v1652 = vpow.pop %v1651
    %v1653 = vadd.f32 %v1648, 1.0
    %v1654 = vadd.f32 %v1650, 1.0
    %v1655 = vadd.f32 %v1652, 1.0
    %v1656 = vrcp.pop %v1653
    %v1657 = vmul.f32 1.0, %v1656
    %v1658 = vrcp.pop %v1654
    %v1659 = vmul.f32 1.0, %v1658
    %v1660 = vrcp.pop %v1655
    %v1661 = vmul.f32 1.0, %v1660
    %v1662 = vtanh.pop %v1643
    %v1663 = vmul.f32 %v1659, %v1490
    %v1664 = vmul.f32 %v1657, %v1662
    %v1665 = vadd.f32 %v1663, %v1664
    %v1666 = vtanh.pop %v1665
    %v1667 = vmul.f32 %v1661, %v1666
    %s1668 = scalar_lea.vmem [#allocation4], 224
    %v1669 = vld [vmem:[%s1668] sm:$0xff]
    %v1670 = vld [vmem:[%s1668 + $0x8] sm:$0xff]
    %v1671 = vld [vmem:[%s1668 + $0x10] sm:$0xff]
    %v1672 = vld [vmem:[%s1668 + $0x18] sm:$0xff]
    %1673 = vmatprep.subr.mxu0 %v53
    %1674 = vmatpush1.msra.mxu0 %v52
    %1675 = vmatprep.subr.mxu0 %v57
    %1676 = vmatpush1.msra.mxu0 %v56
    %1677 = vmatprep.subr.mxu0 %v61
    %1678 = vmatpush1.msra.mxu0 %v60
    %1679 = vmatprep.subr.mxu0 %v65
    %1680 = vmatpush1.msra.mxu0 %v64
    %1681 = vmatprep.subr.mxu0 %v69
    %1682 = vmatpush1.msra.mxu0 %v68
    %1683 = vmatprep.subr.mxu0 %v73
    %1684 = vmatpush1.msra.mxu0 %v72
    %1685 = vmatprep.subr.mxu0 %v77
    %1686 = vmatpush1.msra.mxu0 %v76
    %1687 = vmatprep.subr.mxu0 %v81
    %1688 = vmatpush1.msra.mxu0 %v80
    %1689 = vmatprep.subr.mxu0 %v85
    %1690 = vmatpush1.msra.mxu0 %v84
    %1691 = vmatprep.subr.mxu0 %v89
    %1692 = vmatpush1.msra.mxu0 %v88
    %1693 = vmatprep.subr.mxu0 %v93
    %1694 = vmatpush1.msra.mxu0 %v92
    %1695 = vmatprep.subr.mxu0 %v97
    %1696 = vmatpush1.msra.mxu0 %v96
    %1697 = vmatprep.subr.mxu0 %v101
    %1698 = vmatpush1.msra.mxu0 %v100
    %1699 = vmatprep.subr.mxu0 %v105
    %1700 = vmatpush1.msra.mxu0 %v104
    %1701 = vmatprep.subr.mxu0 %v109
    %1702 = vmatpush1.msra.mxu0 %v108
    %1703 = vmatprep.subr.mxu0 %v113
    %1704 = vmatpush1.msra.mxu0 %v112
    %1705 = vmatprep.subr.mxu0 0.0
    %1706 = vmatpush1.msra.mxu0 0.0
    %1707 = vmatprep.subr.mxu0 0.0
    %1708 = vmatpush1.msra.mxu0 0.0
    %1709 = vmatprep.subr.mxu0 0.0
    %1710 = vmatpush1.msra.mxu0 0.0
    %1711 = vmatprep.subr.mxu0 0.0
    %1712 = vmatpush1.msra.mxu0 0.0
    %1713 = vmatprep.subr.mxu0 0.0
    %1714 = vmatpush1.msra.mxu0 0.0
    %1715 = vmatprep.subr.mxu0 0.0
    %1716 = vmatpush1.msra.mxu0 0.0
    %1717 = vmatprep.subr.mxu0 0.0
    %1718 = vmatpush1.msra.mxu0 0.0
    %1719 = vmatprep.subr.mxu0 0.0
    %1720 = vmatpush1.msra.mxu0 0.0
    %1721 = vmatprep.subr.mxu0 0.0
    %1722 = vmatpush1.msra.mxu0 0.0
    %1723 = vmatprep.subr.mxu0 0.0
    %1724 = vmatpush1.msra.mxu0 0.0
    %1725 = vmatprep.subr.mxu0 0.0
    %1726 = vmatpush1.msra.mxu0 0.0
    %1727 = vmatprep.subr.mxu0 0.0
    %1728 = vmatpush1.msra.mxu0 0.0
    %1729 = vmatprep.subr.mxu0 0.0
    %1730 = vmatpush1.msra.mxu0 0.0
    %1731 = vmatprep.subr.mxu0 0.0
    %1732 = vmatpush1.msra.mxu0 0.0
    %1733 = vmatprep.subr.mxu0 0.0
    %1734 = vmatpush1.msra.mxu0 0.0
    %1735 = vmatprep.subr.mxu0 0.0
    %1736 = vmatpush1.msra.mxu0 0.0
    %1737 = vmatprep.mubr.f32.mxu0 0.0
    %1738 = vmatmul.mubr.f32.gmra.mrb[0].mxu0 %v1667
    %v1739 = vpop.f32.mrb[0].mxu0
    %v1740 = vadd.f32 0.0, %v1739
    %v1741 = vpop.f32.mrb[0].mxu0
    %v1742 = vadd.f32 0.0, %v1741
    %1743 = vdwg.mxu0
    %1744 = vmatprep.subr.mxu0 %v55
    %1745 = vmatpush1.msra.mxu0 %v54
    %1746 = vmatprep.subr.mxu0 %v59
    %1747 = vmatpush1.msra.mxu0 %v58
    %1748 = vmatprep.subr.mxu0 %v63
    %1749 = vmatpush1.msra.mxu0 %v62
    %1750 = vmatprep.subr.mxu0 %v67
    %1751 = vmatpush1.msra.mxu0 %v66
    %1752 = vmatprep.subr.mxu0 %v71
    %1753 = vmatpush1.msra.mxu0 %v70
    %1754 = vmatprep.subr.mxu0 %v75
    %1755 = vmatpush1.msra.mxu0 %v74
    %1756 = vmatprep.subr.mxu0 %v79
    %1757 = vmatpush1.msra.mxu0 %v78
    %1758 = vmatprep.subr.mxu0 %v83
    %1759 = vmatpush1.msra.mxu0 %v82
    %1760 = vmatprep.subr.mxu0 %v87
    %1761 = vmatpush1.msra.mxu0 %v86
    %1762 = vmatprep.subr.mxu0 %v91
    %1763 = vmatpush1.msra.mxu0 %v90
    %1764 = vmatprep.subr.mxu0 %v95
    %1765 = vmatpush1.msra.mxu0 %v94
    %1766 = vmatprep.subr.mxu0 %v99
    %1767 = vmatpush1.msra.mxu0 %v98
    %1768 = vmatprep.subr.mxu0 %v103
    %1769 = vmatpush1.msra.mxu0 %v102
    %1770 = vmatprep.subr.mxu0 %v107
    %1771 = vmatpush1.msra.mxu0 %v106
    %1772 = vmatprep.subr.mxu0 %v111
    %1773 = vmatpush1.msra.mxu0 %v110
    %1774 = vmatprep.subr.mxu0 %v115
    %1775 = vmatpush1.msra.mxu0 %v114
    %1776 = vmatprep.subr.mxu0 0.0
    %1777 = vmatpush1.msra.mxu0 0.0
    %1778 = vmatprep.subr.mxu0 0.0
    %1779 = vmatpush1.msra.mxu0 0.0
    %1780 = vmatprep.subr.mxu0 0.0
    %1781 = vmatpush1.msra.mxu0 0.0
    %1782 = vmatprep.subr.mxu0 0.0
    %1783 = vmatpush1.msra.mxu0 0.0
    %1784 = vmatprep.subr.mxu0 0.0
    %1785 = vmatpush1.msra.mxu0 0.0
    %1786 = vmatprep.subr.mxu0 0.0
    %1787 = vmatpush1.msra.mxu0 0.0
    %1788 = vmatprep.subr.mxu0 0.0
    %1789 = vmatpush1.msra.mxu0 0.0
    %1790 = vmatprep.subr.mxu0 0.0
    %1791 = vmatpush1.msra.mxu0 0.0
    %1792 = vmatprep.subr.mxu0 0.0
    %1793 = vmatpush1.msra.mxu0 0.0
    %1794 = vmatprep.subr.mxu0 0.0
    %1795 = vmatpush1.msra.mxu0 0.0
    %1796 = vmatprep.subr.mxu0 0.0
    %1797 = vmatpush1.msra.mxu0 0.0
    %1798 = vmatprep.subr.mxu0 0.0
    %1799 = vmatpush1.msra.mxu0 0.0
    %1800 = vmatprep.subr.mxu0 0.0
    %1801 = vmatpush1.msra.mxu0 0.0
    %1802 = vmatprep.subr.mxu0 0.0
    %1803 = vmatpush1.msra.mxu0 0.0
    %1804 = vmatprep.subr.mxu0 0.0
    %1805 = vmatpush1.msra.mxu0 0.0
    %1806 = vmatprep.subr.mxu0 0.0
    %1807 = vmatpush1.msra.mxu0 0.0
    %1808 = vmatprep.mubr.f32.mxu0 0.0
    %1809 = vmatmul.mubr.f32.gmra.mrb[0].mxu0 %v1667
    %v1810 = vpop.f32.mrb[0].mxu0
    %v1811 = vadd.f32 0.0, %v1810
    %v1812 = vpop.f32.mrb[0].mxu0
    %v1813 = vadd.f32 0.0, %v1812
    %1814 = vdwg.mxu0
    %v1815 = vadd.f32 %v1669, %v1740
    %v1816 = vadd.f32 %v1670, %v1742
    %v1817 = vadd.f32 %v1671, %v1811
    %v1818 = vadd.f32 %v1672, %v1813
    %v1819 = vxor.u32 %v1815, 2147483648
    %v1820 = vxor.u32 %v1816, 2147483648
    %v1821 = vxor.u32 %v1817, 2147483648
    %v1822 = vmul.f32 %v1819, 1.442695
    %v1823 = vpow.pop %v1822
    %v1824 = vmul.f32 %v1820, 1.442695
    %v1825 = vpow.pop %v1824
    %v1826 = vmul.f32 %v1821, 1.442695
    %v1827 = vpow.pop %v1826
    %v1828 = vadd.f32 %v1823, 1.0
    %v1829 = vadd.f32 %v1825, 1.0
    %v1830 = vadd.f32 %v1827, 1.0
    %v1831 = vrcp.pop %v1828
    %v1832 = vmul.f32 1.0, %v1831
    %v1833 = vrcp.pop %v1829
    %v1834 = vmul.f32 1.0, %v1833
    %v1835 = vrcp.pop %v1830
    %v1836 = vmul.f32 1.0, %v1835
    %v1837 = vtanh.pop %v1818
    %v1838 = vmul.f32 %v1834, %v1665
    %v1839 = vmul.f32 %v1832, %v1837
    %v1840 = vadd.f32 %v1838, %v1839
    %v1841 = vtanh.pop %v1840
    %v1842 = vmul.f32 %v1836, %v1841
    %1843 = vst [vmem:[#allocation2] sm:$0xff] %v1842
    %1844 = vst [vmem:[#allocation3] sm:$0xff] %v1840
    // Predicated region
    $region42: #{tpu_custom_call.1} parent=1 // pred_check
      %p1845 = pneg %p44
    $region43: #{tpu_custom_call.1} parent=1 // pred_check_branch
      %1847 = sbr.rel (%p1845) target = $region45
    $region44: #{tpu_custom_call.1} parent=1 // pred_region
      %v1848 = vld [vmem:[%s4] sm:$0xff]
      %v1849 = vld [vmem:[%s4 + $0x8] sm:$0xff]
      %v1850 = vld [vmem:[%s4 + $0x10] sm:$0xff]
      %v1851 = vld [vmem:[%s4 + $0x18] sm:$0xff]
      %v1852 = vld [vmem:[%s4 + $0x20] sm:$0xff]
      %v1853 = vld [vmem:[%s4 + $0x28] sm:$0xff]
      %v1854 = vld [vmem:[%s4 + $0x30] sm:$0xff]
      %v1855 = vld [vmem:[%s4 + $0x38] sm:$0xff]
      %v1856 = vld [vmem:[%s4 + $0x40] sm:$0xff]
      %v1857 = vld [vmem:[%s4 + $0x48] sm:$0xff]
      %v1858 = vld [vmem:[%s4 + $0x50] sm:$0xff]
      %v1859 = vld [vmem:[%s4 + $0x58] sm:$0xff]
      %v1860 = vld [vmem:[%s4 + $0x60] sm:$0xff]
      %v1861 = vld [vmem:[%s4 + $0x68] sm:$0xff]
      %v1862 = vld [vmem:[%s4 + $0x70] sm:$0xff]
      %v1863 = vld [vmem:[%s4 + $0x78] sm:$0xff]
      %v1864 = vld [vmem:[%s5] sm:$0x1]
      %v1866 = vlaneseq
      %v1867 = vshrl.u32 %v1866, 7
      %v1868 = vsub.s32 0, %v1867
      %v1869 = vrot.slane %v1864, %v1868
      %1871 = vmatprep.subr.mxu0 0.0
      %1872 = vmatpush1.msra.mxu0 %v1848
      %1873 = vmatprep.subr.mxu0 0.0
      %1874 = vmatpush1.msra.mxu0 %v1849
      %1875 = vmatprep.subr.mxu0 0.0
      %1876 = vmatpush1.msra.mxu0 %v1850
      %1877 = vmatprep.subr.mxu0 0.0
      %1878 = vmatpush1.msra.mxu0 %v1851
      %1879 = vmatprep.subr.mxu0 0.0
      %1880 = vmatpush1.msra.mxu0 %v1852
      %1881 = vmatprep.subr.mxu0 0.0
      %1882 = vmatpush1.msra.mxu0 %v1853
      %1883 = vmatprep.subr.mxu0 0.0
      %1884 = vmatpush1.msra.mxu0 %v1854
      %1885 = vmatprep.subr.mxu0 0.0
      %1886 = vmatpush1.msra.mxu0 %v1855
      %1887 = vmatprep.subr.mxu0 0.0
      %1888 = vmatpush1.msra.mxu0 %v1856
      %1889 = vmatprep.subr.mxu0 0.0
      %1890 = vmatpush1.msra.mxu0 %v1857
      %1891 = vmatprep.subr.mxu0 0.0
      %1892 = vmatpush1.msra.mxu0 %v1858
      %1893 = vmatprep.subr.mxu0 0.0
      %1894 = vmatpush1.msra.mxu0 %v1859
      %1895 = vmatprep.subr.mxu0 0.0
      %1896 = vmatpush1.msra.mxu0 %v1860
      %1897 = vmatprep.subr.mxu0 0.0
      %1898 = vmatpush1.msra.mxu0 %v1861
      %1899 = vmatprep.subr.mxu0 0.0
      %1900 = vmatpush1.msra.mxu0 %v1862
      %1901 = vmatprep.subr.mxu0 0.0
      %1902 = vmatpush1.msra.mxu0 %v1863
      %1903 = vmatprep.subr.mxu0 0.0
      %1904 = vmatpush1.msra.mxu0 0.0
      %1905 = vmatprep.subr.mxu0 0.0
      %1906 = vmatpush1.msra.mxu0 0.0
      %1907 = vmatprep.subr.mxu0 0.0
      %1908 = vmatpush1.msra.mxu0 0.0
      %1909 = vmatprep.subr.mxu0 0.0
      %1910 = vmatpush1.msra.mxu0 0.0
      %1911 = vmatprep.subr.mxu0 0.0
      %1912 = vmatpush1.msra.mxu0 0.0
      %1913 = vmatprep.subr.mxu0 0.0
      %1914 = vmatpush1.msra.mxu0 0.0
      %1915 = vmatprep.subr.mxu0 0.0
      %1916 = vmatpush1.msra.mxu0 0.0
      %1917 = vmatprep.subr.mxu0 0.0
      %1918 = vmatpush1.msra.mxu0 0.0
      %1919 = vmatprep.subr.mxu0 0.0
      %1920 = vmatpush1.msra.mxu0 0.0
      %1921 = vmatprep.subr.mxu0 0.0
      %1922 = vmatpush1.msra.mxu0 0.0
      %1923 = vmatprep.subr.mxu0 0.0
      %1924 = vmatpush1.msra.mxu0 0.0
      %1925 = vmatprep.subr.mxu0 0.0
      %1926 = vmatpush1.msra.mxu0 0.0
      %1927 = vmatprep.subr.mxu0 0.0
      %1928 = vmatpush1.msra.mxu0 0.0
      %1929 = vmatprep.subr.mxu0 0.0
      %1930 = vmatpush1.msra.mxu0 0.0
      %1931 = vmatprep.subr.mxu0 0.0
      %1932 = vmatpush1.msra.mxu0 0.0
      %1933 = vmatprep.subr.mxu0 0.0
      %1934 = vmatpush1.msra.mxu0 0.0
      %1935 = vmatprep.mubr.f32.mxu0 0.0
      %1936 = vmatmul.mubr.f32.gmra.mrb[0].mxu0 %v1842
      %v1937 = vpop.f32.mrb[0].mxu0
      %v1938 = vadd.f32 %v1869, %v1937
      %v1939 = vpop.f32.mrb[0].mxu0
      %1940 = vdwg.mxu0
      %v1941 = vmax.f32 %v1938, 0.0
      %v1942 = vld [vmem:[%s6] sm:$0xff]
      %v1943 = vld [vmem:[%s6 + $0x8] sm:$0xff]
      %v1944 = vld [vmem:[%s6 + $0x10] sm:$0xff]
      %v1945 = vld [vmem:[%s6 + $0x18] sm:$0xff]
      %v1946 = vld [vmem:[%s7] sm:$0x1]
      %v1948 = vlaneseq
      %v1949 = vshrl.u32 %v1948, 7
      %v1950 = vsub.s32 0, %v1949
      %v1951 = vrot.slane %v1946, %v1950
      %vm1953 = vcmask 261120
      %v1955 = vsel %vm1953, %v1941, 0
      %1957 = vmatprep.subr.mxu0 0.0
      %1958 = vmatpush1.msra.mxu0 %v1942
      %1959 = vmatprep.subr.mxu0 0.0
      %1960 = vmatpush1.msra.mxu0 %v1943
      %1961 = vmatprep.subr.mxu0 0.0
      %1962 = vmatpush1.msra.mxu0 %v1944
      %1963 = vmatprep.subr.mxu0 0.0
      %1964 = vmatpush1.msra.mxu0 %v1945
      %1965 = vmatprep.subr.mxu0 0.0
      %1966 = vmatpush1.msra.mxu0 0.0
      %1967 = vmatprep.subr.mxu0 0.0
      %1968 = vmatpush1.msra.mxu0 0.0
      %1969 = vmatprep.subr.mxu0 0.0
      %1970 = vmatpush1.msra.mxu0 0.0
      %1971 = vmatprep.subr.mxu0 0.0
      %1972 = vmatpush1.msra.mxu0 0.0
      %1973 = vmatprep.subr.mxu0 0.0
      %1974 = vmatpush1.msra.mxu0 0.0
      %1975 = vmatprep.subr.mxu0 0.0
      %1976 = vmatpush1.msra.mxu0 0.0
      %1977 = vmatprep.subr.mxu0 0.0
      %1978 = vmatpush1.msra.mxu0 0.0
      %1979 = vmatprep.subr.mxu0 0.0
      %1980 = vmatpush1.msra.mxu0 0.0
      %1981 = vmatprep.subr.mxu0 0.0
      %1982 = vmatpush1.msra.mxu0 0.0
      %1983 = vmatprep.subr.mxu0 0.0
      %1984 = vmatpush1.msra.mxu0 0.0
      %1985 = vmatprep.subr.mxu0 0.0
      %1986 = vmatpush1.msra.mxu0 0.0
      %1987 = vmatprep.subr.mxu0 0.0
      %1988 = vmatpush1.msra.mxu0 0.0
      %1989 = vmatprep.subr.mxu0 0.0
      %1990 = vmatpush1.msra.mxu0 0.0
      %1991 = vmatprep.subr.mxu0 0.0
      %1992 = vmatpush1.msra.mxu0 0.0
      %1993 = vmatprep.subr.mxu0 0.0
      %1994 = vmatpush1.msra.mxu0 0.0
      %1995 = vmatprep.subr.mxu0 0.0
      %1996 = vmatpush1.msra.mxu0 0.0
      %1997 = vmatprep.subr.mxu0 0.0
      %1998 = vmatpush1.msra.mxu0 0.0
      %1999 = vmatprep.subr.mxu0 0.0
      %2000 = vmatpush1.msra.mxu0 0.0
      %2001 = vmatprep.subr.mxu0 0.0
      %2002 = vmatpush1.msra.mxu0 0.0
      %2003 = vmatprep.subr.mxu0 0.0
      %2004 = vmatpush1.msra.mxu0 0.0
      %2005 = vmatprep.subr.mxu0 0.0
      %2006 = vmatpush1.msra.mxu0 0.0
      %2007 = vmatprep.subr.mxu0 0.0
      %2008 = vmatpush1.msra.mxu0 0.0
      %2009 = vmatprep.subr.mxu0 0.0
      %2010 = vmatpush1.msra.mxu0 0.0
      %2011 = vmatprep.subr.mxu0 0.0
      %2012 = vmatpush1.msra.mxu0 0.0
      %2013 = vmatprep.subr.mxu0 0.0
      %2014 = vmatpush1.msra.mxu0 0.0
      %2015 = vmatprep.subr.mxu0 0.0
      %2016 = vmatpush1.msra.mxu0 0.0
      %2017 = vmatprep.subr.mxu0 0.0
      %2018 = vmatpush1.msra.mxu0 0.0
      %2019 = vmatprep.subr.mxu0 0.0
      %2020 = vmatpush1.msra.mxu0 0.0
      %2021 = vmatprep.mubr.f32.mxu0 0.0
      %2022 = vmatmul.mubr.f32.gmra.mrb[0].mxu0 %v1955
      %v2023 = vpop.f32.mrb[0].mxu0
      %v2024 = vadd.f32 %v1951, %v2023
      %v2025 = vpop.f32.mrb[0].mxu0
      %2026 = vdwg.mxu0
      %v2027 = vsel %vm150, %v2024, 0.0
      %2028 = vst [vmem:[#allocation8] sm:$0xff] %v2027
      %2029 = vst [vmem:[#allocation8 + $0x8] sm:$0xff] %v1842
      %2030 = vst [vmem:[#allocation8 + $0x10] sm:$0xff] %v1840
    $region45: #{tpu_custom_call.1} parent=1 // pred_fallthru
      _
    // Predicated region
    $region46: #{tpu_custom_call.1} parent=1 // pred_check
      _
    $region47: #{tpu_custom_call.1} parent=1 // pred_check_branch
      %2032 = sbr.rel (0) target = $region49
    $region48: #{tpu_custom_call.1} parent=1 // pred_region
      %s2034 = ssub.s32 384, 384
      %2035 = vsyncadd [#allocation7], %s2034
      %s2037 = sshll.u32 [#allocation8], 4
      %s2038 = int_to_ptr.vmem [resolvable:$true] %s2037
      %2040 = dma.vmem_to_hbm [thread:$0]  %s2038, 384, %s8, [#allocation7]
    $region49: #{tpu_custom_call.1} parent=1 // pred_fallthru
      _
    // Predicated region
    $region50: #{tpu_custom_call.1} parent=1 // pred_check
      _
    $region51: #{tpu_custom_call.1} parent=1 // pred_check_branch
      %2042 = sbr.rel (0) target = $region53
    $region52: #{tpu_custom_call.1} parent=1 // pred_region
      %2043 = dma.done [#allocation7], 384
    $region53: #{tpu_custom_call.1} parent=1 // pred_fallthru
      _
    %2044 = vsyncpa [#allocation6], 1
    %2045 = vsyncpa [#allocation7], 1

// kernel: tpu_custom_call.1
$region0: #{tpu_custom_call.1}
  #allocation0 [shape = 'u32[]', space=smem, size = 0x4, offset = 0x4, fixed_abs, tag = 'smem constant byte address 0x4 - core index']
  #allocation1 [shape = 'u32[144,128]{1,0:T(1,128)}', space=vmem, size = 0x12000, scoped, tag = 'internal scratch']
  #allocation2 [shape = 'f32[8,128]{1,0:T(8,128)}', space=vmem, size = 0x1000, scoped, tag = 'scratch operand']
  #allocation3 [shape = 'f32[8,128]{1,0:T(8,128)}', space=vmem, size = 0x1000, scoped, tag = 'scratch operand']
  #allocation4 [shape = 'f32[8,8,512]{2,1,0:T(8,128)}', space=vmem, size = 0x20000, scoped, tag = 'scratch operand']
  %s0 = inlined_call_operand.vmem [shape: f32[8,8,4], index: 0, kind: input, shape index: {}]
  %s1 = inlined_call_operand.vmem [shape: f32[4,512], index: 1, kind: input, shape index: {}]
  %s2 = inlined_call_operand.hbm [shape: f32[128,512], index: 2, kind: input, shape index: {}]
  %s3 = inlined_call_operand.vmem [shape: f32[1,512], index: 3, kind: input, shape index: {}]
  %s4 = inlined_call_operand.vmem [shape: f32[128,32], index: 4, kind: input, shape index: {}]
  %s5 = inlined_call_operand.vmem [shape: f32[1,32], index: 5, kind: input, shape index: {}]
  %s6 = inlined_call_operand.vmem [shape: f32[32,4], index: 6, kind: input, shape index: {}]
  %s7 = inlined_call_operand.vmem [shape: f32[1,4], index: 7, kind: input, shape index: {}]
  %s8 = inlined_call_operand.hbm [shape: f32[8,384], index: 8, kind: output, shape index: {}]
  %s9 = sld [smem:[#allocation0]]
  $region54: #{tpu_custom_call.1} parent=0
    _
  %s11 = ssub.s32 1, %s9
  %s12 = scalar_select 0, %s11, %s9
  $region1: #{tpu_custom_call.1} parent=0
    #allocation5 [shape = 'u8[262144]{0}', space=vmem, size = 0x40000, scoped, tag = 'input window, operand 2, single buffered']
    #allocation6 [shape = 's32[1]{0}', space=sflag, size = 0x4, scoped, tag = 'scoped memory for tpu_custom_call.1']
    #allocation7 [shape = 's32[1]{0}', space=sflag, size = 0x4, scoped, tag = 'scoped memory for tpu_custom_call.1']
    #allocation8 [shape = 'u8[12288]{0}', space=vmem, size = 0x3000, scoped, tag = 'output window, operand 0, single buffered']
    %13 = vsyncpa [#allocation6], 0
    %14 = vsyncpa [#allocation7], 0
    // Predicated region
    $region2: #{tpu_custom_call.1} parent=1 // pred_check
      _
    $region3: #{tpu_custom_call.1} parent=1 // pred_check_branch
      %16 = sbr.rel (0) target = $region5
    $region4: #{tpu_custom_call.1} parent=1 // pred_region
      _
    $region5: #{tpu_custom_call.1} parent=1 // pred_fallthru
      _
    // Predicated region
    $region6: #{tpu_custom_call.1} parent=1 // pred_check
      _
    $region7: #{tpu_custom_call.1} parent=1 // pred_check_branch
      %18 = sbr.rel (0) target = $region9
    $region8: #{tpu_custom_call.1} parent=1 // pred_region
      _
    $region9: #{tpu_custom_call.1} parent=1 // pred_fallthru
      _
    // Predicated region
    $region10: #{tpu_custom_call.1} parent=1 // pred_check
      _
    $region11: #{tpu_custom_call.1} parent=1 // pred_check_branch
      %20 = sbr.rel (0) target = $region13
    $region12: #{tpu_custom_call.1} parent=1 // pred_region
      %s22 = ssub.s32 8192, 8192
      %23 = vsyncadd [#allocation6], %s22
      %s24 = sshll.u32 [#allocation5], 4
      %s25 = int_to_ptr.vmem [resolvable:$true] %s24
      %30 = dma.hbm_to_vmem [thread:$0]  %s2, 8192, %s25, [#allocation6], 512, 512, 32
    $region13: #{tpu_custom_call.1} parent=1 // pred_fallthru
      _
    // Predicated region
    $region14: #{tpu_custom_call.1} parent=1 // pred_check
      _
    $region15: #{tpu_custom_call.1} parent=1 // pred_check_branch
      %32 = sbr.rel (0) target = $region17
    $region16: #{tpu_custom_call.1} parent=1 // pred_region
      _
    $region17: #{tpu_custom_call.1} parent=1 // pred_fallthru
      _
    // Predicated region
    $region18: #{tpu_custom_call.1} parent=1 // pred_check
      _
    $region19: #{tpu_custom_call.1} parent=1 // pred_check_branch
      %34 = sbr.rel (0) target = $region21
    $region20: #{tpu_custom_call.1} parent=1 // pred_region
      _
    $region21: #{tpu_custom_call.1} parent=1 // pred_fallthru
      _
    // Predicated region
    $region22: #{tpu_custom_call.1} parent=1 // pred_check
      _
    $region23: #{tpu_custom_call.1} parent=1 // pred_check_branch
      %36 = sbr.rel (0) target = $region25
    $region24: #{tpu_custom_call.1} parent=1 // pred_region
      _
    $region25: #{tpu_custom_call.1} parent=1 // pred_fallthru
      _
    // Predicated region
    $region26: #{tpu_custom_call.1} parent=1 // pred_check
      _
    $region27: #{tpu_custom_call.1} parent=1 // pred_check_branch
      %38 = sbr.rel (0) target = $region29
    $region28: #{tpu_custom_call.1} parent=1 // pred_region
      _
    $region29: #{tpu_custom_call.1} parent=1 // pred_fallthru
      _
    // Predicated region
    $region30: #{tpu_custom_call.1} parent=1 // pred_check
      _
    $region31: #{tpu_custom_call.1} parent=1 // pred_check_branch
      %40 = sbr.rel (0) target = $region33
    $region32: #{tpu_custom_call.1} parent=1 // pred_region
      _
    $region33: #{tpu_custom_call.1} parent=1 // pred_fallthru
      _
    // Predicated region
    $region34: #{tpu_custom_call.1} parent=1 // pred_check
      _
    $region35: #{tpu_custom_call.1} parent=1 // pred_check_branch
      %42 = sbr.rel (0) target = $region37
    $region36: #{tpu_custom_call.1} parent=1 // pred_region
      %43 = dma.done [#allocation6], 8192
    $region37: #{tpu_custom_call.1} parent=1 // pred_fallthru
      _
    %p44 = scmp.eq.s32.totalorder 0, 0
    // Predicated region
    $region38: #{tpu_custom_call.1} parent=1 // pred_check
      %p45 = pneg %p44
    $region39: #{tpu_custom_call.1} parent=1 // pred_check_branch
      %47 = sbr.rel (%p45) target = $region41
    $region40: #{tpu_custom_call.1} parent=1 // pred_region
      %48 = vst [vmem:[#allocation2] sm:$0xff] 0.0
      %49 = vst [vmem:[#allocation3] sm:$0xff] 0.0
    $region41: #{tpu_custom_call.1} parent=1 // pred_fallthru
      _
    %v50 = vld [vmem:[%s1] sm:$0xff]
    %v51 = vld [vmem:[%s1 + $0x8] sm:$0xff]
    %v52 = vld [vmem:[#allocation5] sm:$0xff]
    %v53 = vld [vmem:[#allocation5 + $0x8] sm:$0xff]
    %v54 = vld [vmem:[#allocation5 + $0x10] sm:$0xff]
    %v55 = vld [vmem:[#allocation5 + $0x18] sm:$0xff]
    %v56 = vld [vmem:[#allocation5 + $0x20] sm:$0xff]
    %v57 = vld [vmem:[#allocation5 + $0x28] sm:$0xff]
    %v58 = vld [vmem:[#allocation5 + $0x30] sm:$0xff]
    %v59 = vld [vmem:[#allocation5 + $0x38] sm:$0xff]
    %v60 = vld [vmem:[#allocation5 + $0x40] sm:$0xff]
    %v61 = vld [vmem:[#allocation5 + $0x48] sm:$0xff]
    %v62 = vld [vmem:[#allocation5 + $0x50] sm:$0xff]
    %v63 = vld [vmem:[#allocation5 + $0x58] sm:$0xff]
    %v64 = vld [vmem:[#allocation5 + $0x60] sm:$0xff]
    %v65 = vld [vmem:[#allocation5 + $0x68] sm:$0xff]
    %v66 = vld [vmem:[#allocation5 + $0x70] sm:$0xff]
    %v67 = vld [vmem:[#allocation5 + $0x78] sm:$0xff]
    %v68 = vld [vmem:[#allocation5 + $0x80] sm:$0xff]
    %v69 = vld [vmem:[#allocation5 + $0x88] sm:$0xff]
    %v70 = vld [vmem:[#allocation5 + $0x90] sm:$0xff]
    %v71 = vld [vmem:[#allocation5 + $0x98] sm:$0xff]
    %v72 = vld [vmem:[#allocation5 + $0xa0] sm:$0xff]
    %v73 = vld [vmem:[#allocation5 + $0xa8] sm:$0xff]
    %v74 = vld [vmem:[#allocation5 + $0xb0] sm:$0xff]
    %v75 = vld [vmem:[#allocation5 + $0xb8] sm:$0xff]
    %v76 = vld [vmem:[#allocation5 + $0xc0] sm:$0xff]
    %v77 = vld [vmem:[#allocation5 + $0xc8] sm:$0xff]
    %v78 = vld [vmem:[#allocation5 + $0xd0] sm:$0xff]
    %v79 = vld [vmem:[#allocation5 + $0xd8] sm:$0xff]
    %v80 = vld [vmem:[#allocation5 + $0xe0] sm:$0xff]
    %v81 = vld [vmem:[#allocation5 + $0xe8] sm:$0xff]
    %v82 = vld [vmem:[#allocation5 + $0xf0] sm:$0xff]
    %v83 = vld [vmem:[#allocation5 + $0xf8] sm:$0xff]
    %v84 = vld [vmem:[#allocation5 + $0x100] sm:$0xff]
    %v85 = vld [vmem:[#allocation5 + $0x108] sm:$0xff]
    %v86 = vld [vmem:[#allocation5 + $0x110] sm:$0xff]
    %v87 = vld [vmem:[#allocation5 + $0x118] sm:$0xff]
    %v88 = vld [vmem:[#allocation5 + $0x120] sm:$0xff]
    %v89 = vld [vmem:[#allocation5 + $0x128] sm:$0xff]
    %v90 = vld [vmem:[#allocation5 + $0x130] sm:$0xff]
    %v91 = vld [vmem:[#allocation5 + $0x138] sm:$0xff]
    %v92 = vld [vmem:[#allocation5 + $0x140] sm:$0xff]
    %v93 = vld [vmem:[#allocation5 + $0x148] sm:$0xff]
    %v94 = vld [vmem:[#allocation5 + $0x150] sm:$0xff]
    %v95 = vld [vmem:[#allocation5 + $0x158] sm:$0xff]
    %v96 = vld [vmem:[#allocation5 + $0x160] sm:$0xff]
    %v97 = vld [vmem:[#allocation5 + $0x168] sm:$0xff]
    %v98 = vld [vmem:[#allocation5 + $0x170] sm:$0xff]
    %v99 = vld [vmem:[#allocation5 + $0x178] sm:$0xff]
    %v100 = vld [vmem:[#allocation5 + $0x180] sm:$0xff]
    %v101 = vld [vmem:[#allocation5 + $0x188] sm:$0xff]
    %v102 = vld [vmem:[#allocation5 + $0x190] sm:$0xff]
    %v103 = vld [vmem:[#allocation5 + $0x198] sm:$0xff]
    %v104 = vld [vmem:[#allocation5 + $0x1a0] sm:$0xff]
    %v105 = vld [vmem:[#allocation5 + $0x1a8] sm:$0xff]
    %v106 = vld [vmem:[#allocation5 + $0x1b0] sm:$0xff]
    %v107 = vld [vmem:[#allocation5 + $0x1b8] sm:$0xff]
    %v108 = vld [vmem:[#allocation5 + $0x1c0] sm:$0xff]
    %v109 = vld [vmem:[#allocation5 + $0x1c8] sm:$0xff]
    %v110 = vld [vmem:[#allocation5 + $0x1d0] sm:$0xff]
    %v111 = vld [vmem:[#allocation5 + $0x1d8] sm:$0xff]
    %v112 = vld [vmem:[#allocation5 + $0x1e0] sm:$0xff]
    %v113 = vld [vmem:[#allocation5 + $0x1e8] sm:$0xff]
    %v114 = vld [vmem:[#allocation5 + $0x1f0] sm:$0xff]
    %v115 = vld [vmem:[#allocation5 + $0x1f8] sm:$0xff]
    %v116 = vld [vmem:[%s3] sm:$0xf]
    %v117 = vld [vmem:[%s0] sm:$0xff]
    %v118 = vld [vmem:[%s0 + $0x8] sm:$0xff]
    %v119 = vld [vmem:[%s0 + $0x10] sm:$0xff]
    %v120 = vld [vmem:[%s0 + $0x18] sm:$0xff]
    %v121 = vld [vmem:[%s0 + $0x20] sm:$0xff]
    %v122 = vld [vmem:[%s0 + $0x28] sm:$0xff]
    %v123 = vld [vmem:[%s0 + $0x30] sm:$0xff]
    %v124 = vld [vmem:[%s0 + $0x38] sm:$0xff]
    %v126 = vlaneseq
    %v127 = vshrl.u32 %v126, 7
    %v128 = vsub.s32 0, %v127
    %v129 = vrot.slane %v116, %v128
    %v130 = vlaneseq
    %v131 = vshrl.u32 %v130, 7
    %v132 = vsub.s32 1, %v131
    %v133 = vrot.slane %v116, %v132
    %v134 = vlaneseq
    %v135 = vshrl.u32 %v134, 7
    %v136 = vsub.s32 2, %v135
    %v137 = vrot.slane %v116, %v136
    %v138 = vlaneseq
    %v139 = vshrl.u32 %v138, 7
    %v140 = vsub.s32 3, %v139
    %v141 = vrot.slane %v116, %v140
    %v148 = vcombine.high %v50, %v50
    %v149 = vcombine.high %v51, %v51
    %vm150 = vcmask 31744
    %v152 = vsel %vm150, %v117, 0
    %v155 = vsel %vm150, %v118, 0
    %v158 = vsel %vm150, %v119, 0
    %v161 = vsel %vm150, %v120, 0
    %v164 = vsel %vm150, %v121, 0
    %v167 = vsel %vm150, %v122, 0
    %v170 = vsel %vm150, %v123, 0
    %v173 = vsel %vm150, %v124, 0
    %vm175 = vcmask 1043456
    %v176 = vsel %vm175, %v50, 0
    %v178 = vsel %vm175, %v148, 0
    %v180 = vsel %vm175, %v51, 0
    %v182 = vsel %vm175, %v149, 0
    %184 = vmatprep.subr.mxu0 %v178
    %185 = vmatpush1.msra.mxu0 %v176
    %186 = vmatprep.subr.mxu0 0.0
    %187 = vmatpush1.msra.mxu0 0.0
    %188 = vmatprep.subr.mxu0 0.0
    %189 = vmatpush1.msra.mxu0 0.0
    %190 = vmatprep.subr.mxu0 0.0
    %191 = vmatpush1.msra.mxu0 0.0
    %192 = vmatprep.subr.mxu0 0.0
    %193 = vmatpush1.msra.mxu0 0.0
    %194 = vmatprep.subr.mxu0 0.0
    %195 = vmatpush1.msra.mxu0 0.0
    %196 = vmatprep.subr.mxu0 0.0
    %197 = vmatpush1.msra.mxu0 0.0
    %198 = vmatprep.subr.mxu0 0.0
    %199 = vmatpush1.msra.mxu0 0.0
    %200 = vmatprep.subr.mxu0 0.0
    %201 = vmatpush1.msra.mxu0 0.0
    %202 = vmatprep.subr.mxu0 0.0
    %203 = vmatpush1.msra.mxu0 0.0
    %204 = vmatprep.subr.mxu0 0.0
    %205 = vmatpush1.msra.mxu0 0.0
    %206 = vmatprep.subr.mxu0 0.0
    %207 = vmatpush1.msra.mxu0 0.0
    %208 = vmatprep.subr.mxu0 0.0
    %209 = vmatpush1.msra.mxu0 0.0
    %210 = vmatprep.subr.mxu0 0.0
    %211 = vmatpush1.msra.mxu0 0.0
    %212 = vmatprep.subr.mxu0 0.0
    %213 = vmatpush1.msra.mxu0 0.0
    %214 = vmatprep.subr.mxu0 0.0
    %215 = vmatpush1.msra.mxu0 0.0
    %216 = vmatprep.subr.mxu0 0.0
    %217 = vmatpush1.msra.mxu0 0.0
    %218 = vmatprep.subr.mxu0 0.0
    %219 = vmatpush1.msra.mxu0 0.0
    %220 = vmatprep.subr.mxu0 0.0
    %221 = vmatpush1.msra.mxu0 0.0
    %222 = vmatprep.subr.mxu0 0.0
    %223 = vmatpush1.msra.mxu0 0.0
    %224 = vmatprep.subr.mxu0 0.0
    %225 = vmatpush1.msra.mxu0 0.0
    %226 = vmatprep.subr.mxu0 0.0
    %227 = vmatpush1.msra.mxu0 0.0
    %228 = vmatprep.subr.mxu0 0.0
    %229 = vmatpush1.msra.mxu0 0.0
    %230 = vmatprep.subr.mxu0 0.0
    %231 = vmatpush1.msra.mxu0 0.0
    %232 = vmatprep.subr.mxu0 0.0
    %233 = vmatpush1.msra.mxu0 0.0
    %234 = vmatprep.subr.mxu0 0.0
    %235 = vmatpush1.msra.mxu0 0.0
    %236 = vmatprep.subr.mxu0 0.0
    %237 = vmatpush1.msra.mxu0 0.0
    %238 = vmatprep.subr.mxu0 0.0
    %239 = vmatpush1.msra.mxu0 0.0
    %240 = vmatprep.subr.mxu0 0.0
    %241 = vmatpush1.msra.mxu0 0.0
    %242 = vmatprep.subr.mxu0 0.0
    %243 = vmatpush1.msra.mxu0 0.0
    %244 = vmatprep.subr.mxu0 0.0
    %245 = vmatpush1.msra.mxu0 0.0
    %246 = vmatprep.subr.mxu0 0.0
    %247 = vmatpush1.msra.mxu0 0.0
    %248 = vmatprep.mubr.f32.mxu0 0.0
    %249 = vmatmul.mubr.f32.gmra.mrb[0].mxu0 %v152
    %v250 = vpop.f32.mrb[0].mxu0
    %v251 = vadd.f32 %v129, %v250
    %v252 = vpop.f32.mrb[0].mxu0
    %v253 = vadd.f32 %v133, %v252
    %254 = vmatprep.mubr.f32.mxu0 0.0
    %255 = vmatmul.mubr.f32.gmra.mrb[0].mxu0 %v155
    %v256 = vpop.f32.mrb[0].mxu0
    %v257 = vadd.f32 %v129, %v256
    %v258 = vpop.f32.mrb[0].mxu0
    %v259 = vadd.f32 %v133, %v258
    %260 = vmatprep.mubr.f32.mxu0 0.0
    %261 = vmatmul.mubr.f32.gmra.mrb[0].mxu0 %v158
    %v262 = vpop.f32.mrb[0].mxu0
    %v263 = vadd.f32 %v129, %v262
    %v264 = vpop.f32.mrb[0].mxu0
    %v265 = vadd.f32 %v133, %v264
    %266 = vmatprep.mubr.f32.mxu0 0.0
    %267 = vmatmul.mubr.f32.gmra.mrb[0].mxu0 %v161
    %v268 = vpop.f32.mrb[0].mxu0
    %v269 = vadd.f32 %v129, %v268
    %v270 = vpop.f32.mrb[0].mxu0
    %v271 = vadd.f32 %v133, %v270
    %272 = vmatprep.mubr.f32.mxu0 0.0
    %273 = vmatmul.mubr.f32.gmra.mrb[0].mxu0 %v164
    %v274 = vpop.f32.mrb[0].mxu0
    %v275 = vadd.f32 %v129, %v274
    %v276 = vpop.f32.mrb[0].mxu0
    %v277 = vadd.f32 %v133, %v276
    %278 = vmatprep.mubr.f32.mxu0 0.0
    %279 = vmatmul.mubr.f32.gmra.mrb[0].mxu0 %v167
    %v280 = vpop.f32.mrb[0].mxu0
    %v281 = vadd.f32 %v129, %v280
    %v282 = vpop.f32.mrb[0].mxu0
    %v283 = vadd.f32 %v133, %v282
    %284 = vmatprep.mubr.f32.mxu0 0.0
    %285 = vmatmul.mubr.f32.gmra.mrb[0].mxu0 %v170
    %v286 = vpop.f32.mrb[0].mxu0
    %v287 = vadd.f32 %v129, %v286
    %v288 = vpop.f32.mrb[0].mxu0
    %v289 = vadd.f32 %v133, %v288
    %290 = vmatprep.mubr.f32.mxu0 0.0
    %291 = vmatmul.mubr.f32.gmra.mrb[0].mxu0 %v173
    %v292 = vpop.f32.mrb[0].mxu0
    %v293 = vadd.f32 %v129, %v292
    %v294 = vpop.f32.mrb[0].mxu0
    %v295 = vadd.f32 %v133, %v294
    %296 = vdwg.mxu0
    %297 = vmatprep.subr.mxu0 %v182
    %298 = vmatpush1.msra.mxu0 %v180
    %299 = vmatprep.subr.mxu0 0.0
    %300 = vmatpush1.msra.mxu0 0.0
    %301 = vmatprep.subr.mxu0 0.0
    %302 = vmatpush1.msra.mxu0 0.0
    %303 = vmatprep.subr.mxu0 0.0
    %304 = vmatpush1.msra.mxu0 0.0
    %305 = vmatprep.subr.mxu0 0.0
    %306 = vmatpush1.msra.mxu0 0.0
    %307 = vmatprep.subr.mxu0 0.0
    %308 = vmatpush1.msra.mxu0 0.0
    %309 = vmatprep.subr.mxu0 0.0
    %310 = vmatpush1.msra.mxu0 0.0
    %311 = vmatprep.subr.mxu0 0.0
    %312 = vmatpush1.msra.mxu0 0.0
    %313 = vmatprep.subr.mxu0 0.0
    %314 = vmatpush1.msra.mxu0 0.0
    %315 = vmatprep.subr.mxu0 0.0
    %316 = vmatpush1.msra.mxu0 0.0
    %317 = vmatprep.subr.mxu0 0.0
    %318 = vmatpush1.msra.mxu0 0.0
    %319 = vmatprep.subr.mxu0 0.0
    %320 = vmatpush1.msra.mxu0 0.0
    %321 = vmatprep.subr.mxu0 0.0
    %322 = vmatpush1.msra.mxu0 0.0
    %323 = vmatprep.subr.mxu0 0.0
    %324 = vmatpush1.msra.mxu0 0.0
    %325 = vmatprep.subr.mxu0 0.0
    %326 = vmatpush1.msra.mxu0 0.0
    %327 = vmatprep.subr.mxu0 0.0
    %328 = vmatpush1.msra.mxu0 0.0
    %329 = vmatprep.subr.mxu0 0.0
    %330 = vmatpush1.msra.mxu0 0.0
    %331 = vmatprep.subr.mxu0 0.0
    %332 = vmatpush1.msra.mxu0 0.0
    %333 = vmatprep.subr.mxu0 0.0
    %334 = vmatpush1.msra.mxu0 0.0
    %335 = vmatprep.subr.mxu0 0.0
    %336 = vmatpush1.msra.mxu0 0.0
    %337 = vmatprep.subr.mxu0 0.0
    %338 = vmatpush1.msra.mxu0 0.0
    %339 = vmatprep.subr.mxu0 0.0
    %340 = vmatpush1.msra.mxu0 0.0
    %341 = vmatprep.subr.mxu0 0.0
    %342 = vmatpush1.msra.mxu0 0.0
    %343 = vmatprep.subr.mxu0 0.0
    %344 = vmatpush1.msra.mxu0 0.0
    %345 = vmatprep.subr.mxu0 0.0
    %346 = vmatpush1.msra.mxu0 0.0
    %347 = vmatprep.subr.mxu0 0.0
    %348 = vmatpush1.msra.mxu0 0.0
    %349 = vmatprep.subr.mxu0 0.0
    %350 = vmatpush1.msra.mxu0 0.0
    %351 = vmatprep.subr.mxu0 0.0
    %352 = vmatpush1.msra.mxu0 0.0
    %353 = vmatprep.subr.mxu0 0.0
    %354 = vmatpush1.msra.mxu0 0.0
    %355 = vmatprep.subr.mxu0 0.0
    %356 = vmatpush1.msra.mxu0 0.0
    %357 = vmatprep.subr.mxu0 0.0
    %358 = vmatpush1.msra.mxu0 0.0
    %359 = vmatprep.subr.mxu0 0.0
    %360 = vmatpush1.msra.mxu0 0.0
    %361 = vmatprep.mubr.f32.mxu0 0.0
    %362 = vmatmul.mubr.f32.gmra.mrb[0].mxu0 %v152
    %v363 = vpop.f32.mrb[0].mxu0
    %v364 = vadd.f32 %v137, %v363
    %v365 = vpop.f32.mrb[0].mxu0
    %v366 = vadd.f32 %v141, %v365
    %367 = vmatprep.mubr.f32.mxu0 0.0
    %368 = vmatmul.mubr.f32.gmra.mrb[0].mxu0 %v155
    %v369 = vpop.f32.mrb[0].mxu0
    %v370 = vadd.f32 %v137, %v369
    %v371 = vpop.f32.mrb[0].mxu0
    %v372 = vadd.f32 %v141, %v371
    %373 = vmatprep.mubr.f32.mxu0 0.0
    %374 = vmatmul.mubr.f32.gmra.mrb[0].mxu0 %v158
    %v375 = vpop.f32.mrb[0].mxu0
    %v376 = vadd.f32 %v137, %v375
    %v377 = vpop.f32.mrb[0].mxu0
    %v378 = vadd.f32 %v141, %v377
    %379 = vmatprep.mubr.f32.mxu0 0.0
    %380 = vmatmul.mubr.f32.gmra.mrb[0].mxu0 %v161
    %v381 = vpop.f32.mrb[0].mxu0
    %v382 = vadd.f32 %v137, %v381
    %v383 = vpop.f32.mrb[0].mxu0
    %v384 = vadd.f32 %v141, %v383
    %385 = vmatprep.mubr.f32.mxu0 0.0
    %386 = vmatmul.mubr.f32.gmra.mrb[0].mxu0 %v164
    %v387 = vpop.f32.mrb[0].mxu0
    %v388 = vadd.f32 %v137, %v387
    %v389 = vpop.f32.mrb[0].mxu0
    %v390 = vadd.f32 %v141, %v389
    %391 = vmatprep.mubr.f32.mxu0 0.0
    %392 = vmatmul.mubr.f32.gmra.mrb[0].mxu0 %v167
    %v393 = vpop.f32.mrb[0].mxu0
    %v394 = vadd.f32 %v137, %v393
    %v395 = vpop.f32.mrb[0].mxu0
    %v396 = vadd.f32 %v141, %v395
    %397 = vmatprep.mubr.f32.mxu0 0.0
    %398 = vmatmul.mubr.f32.gmra.mrb[0].mxu0 %v170
    %v399 = vpop.f32.mrb[0].mxu0
    %v400 = vadd.f32 %v137, %v399
    %v401 = vpop.f32.mrb[0].mxu0
    %v402 = vadd.f32 %v141, %v401
    %403 = vmatprep.mubr.f32.mxu0 0.0
    %404 = vmatmul.mubr.f32.gmra.mrb[0].mxu0 %v173
    %v405 = vpop.f32.mrb[0].mxu0
    %v406 = vadd.f32 %v137, %v405
    %v407 = vpop.f32.mrb[0].mxu0
    %v408 = vadd.f32 %v141, %v407
    %409 = vdwg.mxu0
    %410 = vst [vmem:[#allocation4] sm:$0xff] %v251
    %411 = vst [vmem:[#allocation4 + $0x8] sm:$0xff] %v253
    %412 = vst [vmem:[#allocation4 + $0x10] sm:$0xff] %v364
    %413 = vst [vmem:[#allocation4 + $0x18] sm:$0xff] %v366
    %414 = vst [vmem:[#allocation4 + $0x20] sm:$0xff] %v257
    %415 = vst [vmem:[#allocation4 + $0x28] sm:$0xff] %v259
    %416 = vst [vmem:[#allocation4 + $0x30] sm:$0xff] %v370
    %417 = vst [vmem:[#allocation4 + $0x38] sm:$0xff] %v372
    %418 = vst [vmem:[#allocation4 + $0x40] sm:$0xff] %v263
    %419 = vst [vmem:[#allocation4 + $0x48] sm:$0xff] %v265
    %420 = vst [vmem:[#allocation4 + $0x50] sm:$0xff] %v376
    %421 = vst [vmem:[#allocation4 + $0x58] sm:$0xff] %v378
    %422 = vst [vmem:[#allocation4 + $0x60] sm:$0xff] %v269
    %423 = vst [vmem:[#allocation4 + $0x68] sm:$0xff] %v271
    %424 = vst [vmem:[#allocation4 + $0x70] sm:$0xff] %v382
    %425 = vst [vmem:[#allocation4 + $0x78] sm:$0xff] %v384
    %426 = vst [vmem:[#allocation4 + $0x80] sm:$0xff] %v275
    %427 = vst [vmem:[#allocation4 + $0x88] sm:$0xff] %v277
    %428 = vst [vmem:[#allocation4 + $0x90] sm:$0xff] %v388
    %429 = vst [vmem:[#allocation4 + $0x98] sm:$0xff] %v390
    %430 = vst [vmem:[#allocation4 + $0xa0] sm:$0xff] %v281
    %431 = vst [vmem:[#allocation4 + $0xa8] sm:$0xff] %v283
    %432 = vst [vmem:[#allocation4 + $0xb0] sm:$0xff] %v394
    %433 = vst [vmem:[#allocation4 + $0xb8] sm:$0xff] %v396
    %434 = vst [vmem:[#allocation4 + $0xc0] sm:$0xff] %v287
    %435 = vst [vmem:[#allocation4 + $0xc8] sm:$0xff] %v289
    %436 = vst [vmem:[#allocation4 + $0xd0] sm:$0xff] %v400
    %437 = vst [vmem:[#allocation4 + $0xd8] sm:$0xff] %v402
    %438 = vst [vmem:[#allocation4 + $0xe0] sm:$0xff] %v293
    %439 = vst [vmem:[#allocation4 + $0xe8] sm:$0xff] %v295
    %440 = vst [vmem:[#allocation4 + $0xf0] sm:$0xff] %v406
    %441 = vst [vmem:[#allocation4 + $0xf8] sm:$0xff] %v408
    %v442 = vld [vmem:[#allocation2] sm:$0xff]
    %v443 = vld [vmem:[#allocation3] sm:$0xff]
    %v444 = vld [vmem:[#allocation4] sm:$0xff]
    %v445 = vld [vmem:[#allocation4 + $0x8] sm:$0xff]
    %v446 = vld [vmem:[#allocation4 + $0x10] sm:$0xff]
    %v447 = vld [vmem:[#allocation4 + $0x18] sm:$0xff]
    %448 = vmatprep.subr.mxu0 %v53
    %449 = vmatpush1.msra.mxu0 %v52
    %450 = vmatprep.subr.mxu0 %v57
    %451 = vmatpush1.msra.mxu0 %v56
    %452 = vmatprep.subr.mxu0 %v61
    %453 = vmatpush1.msra.mxu0 %v60
    %454 = vmatprep.subr.mxu0 %v65
    %455 = vmatpush1.msra.mxu0 %v64
    %456 = vmatprep.subr.mxu0 %v69
    %457 = vmatpush1.msra.mxu0 %v68
    %458 = vmatprep.subr.mxu0 %v73
    %459 = vmatpush1.msra.mxu0 %v72
    %460 = vmatprep.subr.mxu0 %v77
    %461 = vmatpush1.msra.mxu0 %v76
    %462 = vmatprep.subr.mxu0 %v81
    %463 = vmatpush1.msra.mxu0 %v80
    %464 = vmatprep.subr.mxu0 %v85
    %465 = vmatpush1.msra.mxu0 %v84
    %466 = vmatprep.subr.mxu0 %v89
    %467 = vmatpush1.msra.mxu0 %v88
    %468 = vmatprep.subr.mxu0 %v93
    %469 = vmatpush1.msra.mxu0 %v92
    %470 = vmatprep.subr.mxu0 %v97
    %471 = vmatpush1.msra.mxu0 %v96
    %472 = vmatprep.subr.mxu0 %v101
    %473 = vmatpush1.msra.mxu0 %v100
    %474 = vmatprep.subr.mxu0 %v105
    %475 = vmatpush1.msra.mxu0 %v104
    %476 = vmatprep.subr.mxu0 %v109
    %477 = vmatpush1.msra.mxu0 %v108
    %478 = vmatprep.subr.mxu0 %v113
    %479 = vmatpush1.msra.mxu0 %v112
    %480 = vmatprep.subr.mxu0 0.0
    %481 = vmatpush1.msra.mxu0 0.0
    %482 = vmatprep.subr.mxu0 0.0
    %483 = vmatpush1.msra.mxu0 0.0
    %484 = vmatprep.subr.mxu0 0.0
    %485 = vmatpush1.msra.mxu0 0.0
    %486 = vmatprep.subr.mxu0 0.0
    %487 = vmatpush1.msra.mxu0 0.0
    %488 = vmatprep.subr.mxu0 0.0
    %489 = vmatpush1.msra.mxu0 0.0
    %490 = vmatprep.subr.mxu0 0.0
    %491 = vmatpush1.msra.mxu0 0.0
    %492 = vmatprep.subr.mxu0 0.0
    %493 = vmatpush1.msra.mxu0 0.0
    %494 = vmatprep.subr.mxu0 0.0
    %495 = vmatpush1.msra.mxu0 0.0
    %496 = vmatprep.subr.mxu0 0.0
    %497 = vmatpush1.msra.mxu0 0.0
    %498 = vmatprep.subr.mxu0 0.0
    %499 = vmatpush1.msra.mxu0 0.0
    %500 = vmatprep.subr.mxu0 0.0
    %501 = vmatpush1.msra.mxu0 0.0
    %502 = vmatprep.subr.mxu0 0.0
    %503 = vmatpush1.msra.mxu0 0.0
    %504 = vmatprep.subr.mxu0 0.0
    %505 = vmatpush1.msra.mxu0 0.0
    %506 = vmatprep.subr.mxu0 0.0
    %507 = vmatpush1.msra.mxu0 0.0
    %508 = vmatprep.subr.mxu0 0.0
    %509 = vmatpush1.msra.mxu0 0.0
    %510 = vmatprep.subr.mxu0 0.0
    %511 = vmatpush1.msra.mxu0 0.0
    %512 = vmatprep.mubr.f32.mxu0 0.0
    %513 = vmatmul.mubr.f32.gmra.mrb[0].mxu0 %v442
    %v514 = vpop.f32.mrb[0].mxu0
    %v515 = vadd.f32 0.0, %v514
    %v516 = vpop.f32.mrb[0].mxu0
    %v517 = vadd.f32 0.0, %v516
    %518 = vdwg.mxu0
    %519 = vmatprep.subr.mxu0 %v55
    %520 = vmatpush1.msra.mxu0 %v54
    %521 = vmatprep.subr.mxu0 %v59
    %522 = vmatpush1.msra.mxu0 %v58
    %523 = vmatprep.subr.mxu0 %v63
    %524 = vmatpush1.msra.mxu0 %v62
    %525 = vmatprep.subr.mxu0 %v67
    %526 = vmatpush1.msra.mxu0 %v66
    %527 = vmatprep.subr.mxu0 %v71
    %528 = vmatpush1.msra.mxu0 %v70
    %529 = vmatprep.subr.mxu0 %v75
    %530 = vmatpush1.msra.mxu0 %v74
    %531 = vmatprep.subr.mxu0 %v79
    %532 = vmatpush1.msra.mxu0 %v78
    %533 = vmatprep.subr.mxu0 %v83
    %534 = vmatpush1.msra.mxu0 %v82
    %535 = vmatprep.subr.mxu0 %v87
    %536 = vmatpush1.msra.mxu0 %v86
    %537 = vmatprep.subr.mxu0 %v91
    %538 = vmatpush1.msra.mxu0 %v90
    %539 = vmatprep.subr.mxu0 %v95
    %540 = vmatpush1.msra.mxu0 %v94
    %541 = vmatprep.subr.mxu0 %v99
    %542 = vmatpush1.msra.mxu0 %v98
    %543 = vmatprep.subr.mxu0 %v103
    %544 = vmatpush1.msra.mxu0 %v102
    %545 = vmatprep.subr.mxu0 %v107
    %546 = vmatpush1.msra.mxu0 %v106
    %547 = vmatprep.subr.mxu0 %v111
    %548 = vmatpush1.msra.mxu0 %v110
    %549 = vmatprep.subr.mxu0 %v115
    %550 = vmatpush1.msra.mxu0 %v114
    %551 = vmatprep.subr.mxu0 0.0
    %552 = vmatpush1.msra.mxu0 0.0
    %553 = vmatprep.subr.mxu0 0.0
    %554 = vmatpush1.msra.mxu0 0.0
    %555 = vmatprep.subr.mxu0 0.0
    %556 = vmatpush1.msra.mxu0 0.0
    %557 = vmatprep.subr.mxu0 0.0
    %558 = vmatpush1.msra.mxu0 0.0
    %559 = vmatprep.subr.mxu0 0.0
    %560 = vmatpush1.msra.mxu0 0.0
    %561 = vmatprep.subr.mxu0 0.0
    %562 = vmatpush1.msra.mxu0 0.0
    %563 = vmatprep.subr.mxu0 0.0
    %564 = vmatpush1.msra.mxu0 0.0
    %565 = vmatprep.subr.mxu0 0.0
    %566 = vmatpush1.msra.mxu0 0.0
    %567 = vmatprep.subr.mxu0 0.0
    %568 = vmatpush1.msra.mxu0 0.0
    %569 = vmatprep.subr.mxu0 0.0
    %570 = vmatpush1.msra.mxu0 0.0
    %571 = vmatprep.subr.mxu0 0.0
    %572 = vmatpush1.msra.mxu0 0.0
    %573 = vmatprep.subr.mxu0 0.0
    %574 = vmatpush1.msra.mxu0 0.0
    %575 = vmatprep.subr.mxu0 0.0
    %576 = vmatpush1.msra.mxu0 0.0
    %577 = vmatprep.subr.mxu0 0.0
    %578 = vmatpush1.msra.mxu0 0.0
    %579 = vmatprep.subr.mxu0 0.0
    %580 = vmatpush1.msra.mxu0 0.0
    %581 = vmatprep.subr.mxu0 0.0
    %582 = vmatpush1.msra.mxu0 0.0
    %583 = vmatprep.mubr.f32.mxu0 0.0
    %584 = vmatmul.mubr.f32.gmra.mrb[0].mxu0 %v442
    %v585 = vpop.f32.mrb[0].mxu0
    %v586 = vadd.f32 0.0, %v585
    %v587 = vpop.f32.mrb[0].mxu0
    %v588 = vadd.f32 0.0, %v587
    %589 = vdwg.mxu0
    %v590 = vadd.f32 %v444, %v515
    %v591 = vadd.f32 %v445, %v517
    %v592 = vadd.f32 %v446, %v586
    %v593 = vadd.f32 %v447, %v588
    %v594 = vxor.u32 %v590, 2147483648
    %v595 = vxor.u32 %v591, 2147483648
    %v596 = vxor.u32 %v592, 2147483648
    %v597 = vmul.f32 %v594, 1.442695
    %v598 = vpow.pop %v597
    %v599 = vmul.f32 %v595, 1.442695
    %v600 = vpow.pop %v599
    %v601 = vmul.f32 %v596, 1.442695
    %v602 = vpow.pop %v601
    %v603 = vadd.f32 %v598, 1.0
    %v604 = vadd.f32 %v600, 1.0
    %v605 = vadd.f32 %v602, 1.0
    %v606 = vrcp.pop %v603
    %v607 = vmul.f32 1.0, %v606
    %v608 = vrcp.pop %v604
    %v609 = vmul.f32 1.0, %v608
    %v610 = vrcp.pop %v605
    %v611 = vmul.f32 1.0, %v610
    %v612 = vtanh.pop %v593
    %v613 = vmul.f32 %v609, %v443
    %v614 = vmul.f32 %v607, %v612
    %v615 = vadd.f32 %v613, %v614
    %v616 = vtanh.pop %v615
    %v617 = vmul.f32 %v611, %v616
    %s618 = scalar_lea.vmem [#allocation4], 32
    %v619 = vld [vmem:[%s618] sm:$0xff]
    %v620 = vld [vmem:[%s618 + $0x8] sm:$0xff]
    %v621 = vld [vmem:[%s618 + $0x10] sm:$0xff]
    %v622 = vld [vmem:[%s618 + $0x18] sm:$0xff]
    %623 = vmatprep.subr.mxu0 %v53
    %624 = vmatpush1.msra.mxu0 %v52
    %625 = vmatprep.subr.mxu0 %v57
    %626 = vmatpush1.msra.mxu0 %v56
    %627 = vmatprep.subr.mxu0 %v61
    %628 = vmatpush1.msra.mxu0 %v60
    %629 = vmatprep.subr.mxu0 %v65
    %630 = vmatpush1.msra.mxu0 %v64
    %631 = vmatprep.subr.mxu0 %v69
    %632 = vmatpush1.msra.mxu0 %v68
    %633 = vmatprep.subr.mxu0 %v73
    %634 = vmatpush1.msra.mxu0 %v72
    %635 = vmatprep.subr.mxu0 %v77
    %636 = vmatpush1.msra.mxu0 %v76
    %637 = vmatprep.subr.mxu0 %v81
    %638 = vmatpush1.msra.mxu0 %v80
    %639 = vmatprep.subr.mxu0 %v85
    %640 = vmatpush1.msra.mxu0 %v84
    %641 = vmatprep.subr.mxu0 %v89
    %642 = vmatpush1.msra.mxu0 %v88
    %643 = vmatprep.subr.mxu0 %v93
    %644 = vmatpush1.msra.mxu0 %v92
    %645 = vmatprep.subr.mxu0 %v97
    %646 = vmatpush1.msra.mxu0 %v96
    %647 = vmatprep.subr.mxu0 %v101
    %648 = vmatpush1.msra.mxu0 %v100
    %649 = vmatprep.subr.mxu0 %v105
    %650 = vmatpush1.msra.mxu0 %v104
    %651 = vmatprep.subr.mxu0 %v109
    %652 = vmatpush1.msra.mxu0 %v108
    %653 = vmatprep.subr.mxu0 %v113
    %654 = vmatpush1.msra.mxu0 %v112
    %655 = vmatprep.subr.mxu0 0.0
    %656 = vmatpush1.msra.mxu0 0.0
    %657 = vmatprep.subr.mxu0 0.0
    %658 = vmatpush1.msra.mxu0 0.0
    %659 = vmatprep.subr.mxu0 0.0
    %660 = vmatpush1.msra.mxu0 0.0
    %661 = vmatprep.subr.mxu0 0.0
    %662 = vmatpush1.msra.mxu0 0.0
    %663 = vmatprep.subr.mxu0 0.0
    %664 = vmatpush1.msra.mxu0 0.0
    %665 = vmatprep.subr.mxu0 0.0
    %666 = vmatpush1.msra.mxu0 0.0
    %667 = vmatprep.subr.mxu0 0.0
    %668 = vmatpush1.msra.mxu0 0.0
    %669 = vmatprep.subr.mxu0 0.0
    %670 = vmatpush1.msra.mxu0 0.0
    %671 = vmatprep.subr.mxu0 0.0
    %672 = vmatpush1.msra.mxu0 0.0
    %673 = vmatprep.subr.mxu0 0.0
    %674 = vmatpush1.msra.mxu0 0.0
    %675 = vmatprep.subr.mxu0 0.0
    %676 = vmatpush1.msra.mxu0 0.0
    %677 = vmatprep.subr.mxu0 0.0
    %678 = vmatpush1.msra.mxu0 0.0
    %679 = vmatprep.subr.mxu0 0.0
    %680 = vmatpush1.msra.mxu0 0.0
    %681 = vmatprep.subr.mxu0 0.0
    %682 = vmatpush1.msra.mxu0 0.0
    %683 = vmatprep.subr.mxu0 0.0
    %684 = vmatpush1.msra.mxu0 0.0
    %685 = vmatprep.subr.mxu0 0.0
    %686 = vmatpush1.msra.mxu0 0.0
    %687 = vmatprep.mubr.f32.mxu0 0.0
    %688 = vmatmul.mubr.f32.gmra.mrb[0].mxu0 %v617
    %v689 = vpop.f32.mrb[0].mxu0
    %v690 = vadd.f32 0.0, %v689
    %v691 = vpop.f32.mrb[0].mxu0
    %v692 = vadd.f32 0.0, %v691
    %693 = vdwg.mxu0
    %694 = vmatprep.subr.mxu0 %v55
    %695 = vmatpush1.msra.mxu0 %v54
    %696 = vmatprep.subr.mxu0 %v59
    %697 = vmatpush1.msra.mxu0 %v58
    %698 = vmatprep.subr.mxu0 %v63
    %699 = vmatpush1.msra.mxu0 %v62
    %700 = vmatprep.subr.mxu0 %v67
    %701 = vmatpush1.msra.mxu0 %v66
    %702 = vmatprep.subr.mxu0 %v71
    %703 = vmatpush1.msra.mxu0 %v70
    %704 = vmatprep.subr.mxu0 %v75
    %705 = vmatpush1.msra.mxu0 %v74
    %706 = vmatprep.subr.mxu0 %v79
    %707 = vmatpush1.msra.mxu0 %v78
    %708 = vmatprep.subr.mxu0 %v83
    %709 = vmatpush1.msra.mxu0 %v82
    %710 = vmatprep.subr.mxu0 %v87
    %711 = vmatpush1.msra.mxu0 %v86
    %712 = vmatprep.subr.mxu0 %v91
    %713 = vmatpush1.msra.mxu0 %v90
    %714 = vmatprep.subr.mxu0 %v95
    %715 = vmatpush1.msra.mxu0 %v94
    %716 = vmatprep.subr.mxu0 %v99
    %717 = vmatpush1.msra.mxu0 %v98
    %718 = vmatprep.subr.mxu0 %v103
    %719 = vmatpush1.msra.mxu0 %v102
    %720 = vmatprep.subr.mxu0 %v107
    %721 = vmatpush1.msra.mxu0 %v106
    %722 = vmatprep.subr.mxu0 %v111
    %723 = vmatpush1.msra.mxu0 %v110
    %724 = vmatprep.subr.mxu0 %v115
    %725 = vmatpush1.msra.mxu0 %v114
    %726 = vmatprep.subr.mxu0 0.0
    %727 = vmatpush1.msra.mxu0 0.0
    %728 = vmatprep.subr.mxu0 0.0
    %729 = vmatpush1.msra.mxu0 0.0
    %730 = vmatprep.subr.mxu0 0.0
    %731 = vmatpush1.msra.mxu0 0.0
    %732 = vmatprep.subr.mxu0 0.0
    %733 = vmatpush1.msra.mxu0 0.0
    %734 = vmatprep.subr.mxu0 0.0
    %735 = vmatpush1.msra.mxu0 0.0
    %736 = vmatprep.subr.mxu0 0.0
    %737 = vmatpush1.msra.mxu0 0.0
    %738 = vmatprep.subr.mxu0 0.0
    %739 = vmatpush1.msra.mxu0 0.0
    %740 = vmatprep.subr.mxu0 0.0
    %741 = vmatpush1.msra.mxu0 0.0
    %742 = vmatprep.subr.mxu0 0.0
    %743 = vmatpush1.msra.mxu0 0.0
    %744 = vmatprep.subr.mxu0 0.0
    %745 = vmatpush1.msra.mxu0 0.0
    %746 = vmatprep.subr.mxu0 0.0
    %747 = vmatpush1.msra.mxu0 0.0
    %748 = vmatprep.subr.mxu0 0.0
    %749 = vmatpush1.msra.mxu0 0.0
    %750 = vmatprep.subr.mxu0 0.0
    %751 = vmatpush1.msra.mxu0 0.0
    %752 = vmatprep.subr.mxu0 0.0
    %753 = vmatpush1.msra.mxu0 0.0
    %754 = vmatprep.subr.mxu0 0.0
    %755 = vmatpush1.msra.mxu0 0.0
    %756 = vmatprep.subr.mxu0 0.0
    %757 = vmatpush1.msra.mxu0 0.0
    %758 = vmatprep.mubr.f32.mxu0 0.0
    %759 = vmatmul.mubr.f32.gmra.mrb[0].mxu0 %v617
    %v760 = vpop.f32.mrb[0].mxu0
    %v761 = vadd.f32 0.0, %v760
    %v762 = vpop.f32.mrb[0].mxu0
    %v763 = vadd.f32 0.0, %v762
    %764 = vdwg.mxu0
    %v765 = vadd.f32 %v619, %v690
    %v766 = vadd.f32 %v620, %v692
    %v767 = vadd.f32 %v621, %v761
    %v768 = vadd.f32 %v622, %v763
    %v769 = vxor.u32 %v765, 2147483648
    %v770 = vxor.u32 %v766, 2147483648
    %v771 = vxor.u32 %v767, 2147483648
    %v772 = vmul.f32 %v769, 1.442695
    %v773 = vpow.pop %v772
    %v774 = vmul.f32 %v770, 1.442695
    %v775 = vpow.pop %v774
    %v776 = vmul.f32 %v771, 1.442695
    %v777 = vpow.pop %v776
    %v778 = vadd.f32 %v773, 1.0
    %v779 = vadd.f32 %v775, 1.0
    %v780 = vadd.f32 %v777, 1.0
    %v781 = vrcp.pop %v778
    %v782 = vmul.f32 1.0, %v781
    %v783 = vrcp.pop %v779
    %v784 = vmul.f32 1.0, %v783
    %v785 = vrcp.pop %v780
    %v786 = vmul.f32 1.0, %v785
    %v787 = vtanh.pop %v768
    %v788 = vmul.f32 %v784, %v615
    %v789 = vmul.f32 %v782, %v787
    %v790 = vadd.f32 %v788, %v789
    %v791 = vtanh.pop %v790
    %v792 = vmul.f32 %v786, %v791
    %s793 = scalar_lea.vmem [#allocation4], 64
    %v794 = vld [vmem:[%s793] sm:$0xff]
    %v795 = vld [vmem:[%s793 + $0x8] sm:$0xff]
    %v796 = vld [vmem:[%s793 + $0x10] sm:$0xff]
    %v797 = vld [vmem:[%s793 + $0x18] sm:$0xff]
    %798 = vmatprep.subr.mxu0 %v53
    %799 = vmatpush1.msra.mxu0 %v52
    %800 = vmatprep.subr.mxu0 %v57
    %801 = vmatpush1.msra.mxu0 %v56
    %802 = vmatprep.subr.mxu0 %v61
    %803 = vmatpush1.msra.mxu0 %v60
    %804 = vmatprep.subr.mxu0 %v65
    %805 = vmatpush1.msra.mxu0 %v64
    %806 = vmatprep.subr.mxu0 %v69
    %807 = vmatpush1.msra.mxu0 %v68
    %808 = vmatprep.subr.mxu0 %v73
    %809 = vmatpush1.msra.mxu0 %v72
    %810 = vmatprep.subr.mxu0 %v77
    %811 = vmatpush1.msra.mxu0 %v76
    %812 = vmatprep.subr.mxu0 %v81
    %813 = vmatpush1.msra.mxu0 %v80
    %814 = vmatprep.subr.mxu0 %v85
    %815 = vmatpush1.msra.mxu0 %v84
    %816 = vmatprep.subr.mxu0 %v89
    %817 = vmatpush1.msra.mxu0 %v88
    %818 = vmatprep.subr.mxu0 %v93
    %819 = vmatpush1.msra.mxu0 %v92
    %820 = vmatprep.subr.mxu0 %v97
    %821 = vmatpush1.msra.mxu0 %v96
    %822 = vmatprep.subr.mxu0 %v101
    %823 = vmatpush1.msra.mxu0 %v100
    %824 = vmatprep.subr.mxu0 %v105
    %825 = vmatpush1.msra.mxu0 %v104
    %826 = vmatprep.subr.mxu0 %v109
    %827 = vmatpush1.msra.mxu0 %v108
    %828 = vmatprep.subr.mxu0 %v113
    %829 = vmatpush1.msra.mxu0 %v112
    %830 = vmatprep.subr.mxu0 0.0
    %831 = vmatpush1.msra.mxu0 0.0
    %832 = vmatprep.subr.mxu0 0.0
    %833 = vmatpush1.msra.mxu0 0.0
    %834 = vmatprep.subr.mxu0 0.0
    %835 = vmatpush1.msra.mxu0 0.0
    %836 = vmatprep.subr.mxu0 0.0
    %837 = vmatpush1.msra.mxu0 0.0
    %838 = vmatprep.subr.mxu0 0.0
    %839 = vmatpush1.msra.mxu0 0.0
    %840 = vmatprep.subr.mxu0 0.0
    %841 = vmatpush1.msra.mxu0 0.0
    %842 = vmatprep.subr.mxu0 0.0
    %843 = vmatpush1.msra.mxu0 0.0
    %844 = vmatprep.subr.mxu0 0.0
    %845 = vmatpush1.msra.mxu0 0.0
    %846 = vmatprep.subr.mxu0 0.0
    %847 = vmatpush1.msra.mxu0 0.0
    %848 = vmatprep.subr.mxu0 0.0
    %849 = vmatpush1.msra.mxu0 0.0
    %850 = vmatprep.subr.mxu0 0.0
    %851 = vmatpush1.msra.mxu0 0.0
    %852 = vmatprep.subr.mxu0 0.0
    %853 = vmatpush1.msra.mxu0 0.0
    %854 = vmatprep.subr.mxu0 0.0
    %855 = vmatpush1.msra.mxu0 0.0
    %856 = vmatprep.subr.mxu0 0.0
    %857 = vmatpush1.msra.mxu0 0.0
    %858 = vmatprep.subr.mxu0 0.0
    %859 = vmatpush1.msra.mxu0 0.0
    %860 = vmatprep.subr.mxu0 0.0
    %861 = vmatpush1.msra.mxu0 0.0
    %862 = vmatprep.mubr.f32.mxu0 0.0
    %863 = vmatmul.mubr.f32.gmra.mrb[0].mxu0 %v792
    %v864 = vpop.f32.mrb[0].mxu0
    %v865 = vadd.f32 0.0, %v864
    %v866 = vpop.f32.mrb[0].mxu0
    %v867 = vadd.f32 0.0, %v866
    %868 = vdwg.mxu0
    %869 = vmatprep.subr.mxu0 %v55
    %870 = vmatpush1.msra.mxu0 %v54
    %871 = vmatprep.subr.mxu0 %v59
    %872 = vmatpush1.msra.mxu0 %v58
    %873 = vmatprep.subr.mxu0 %v63
    %874 = vmatpush1.msra.mxu0 %v62
    %875 = vmatprep.subr.mxu0 %v67
    %876 = vmatpush1.msra.mxu0 %v66
    %877 = vmatprep.subr.mxu0 %v71
    %878 = vmatpush1.msra.mxu0 %v70
    %879 = vmatprep.subr.mxu0 %v75
    %880 = vmatpush1.msra.mxu0 %v74
    %881 = vmatprep.subr.mxu0 %v79
    %882 = vmatpush1.msra.mxu0 %v78
    %883 = vmatprep.subr.mxu0 %v83
    %884 = vmatpush1.msra.mxu0 %v82
    %885 = vmatprep.subr.mxu0 %v87
    %886 = vmatpush1.msra.mxu0 %v86
    %887 = vmatprep.subr.mxu0 %v91
    %888 = vmatpush1.msra.mxu0 %v90
    %889 = vmatprep.subr.mxu0 %v95
    %890 = vmatpush1.msra.mxu0 %v94
    %891 = vmatprep.subr.mxu0 %v99
    %892 = vmatpush1.msra.mxu0 %v98
    %893 = vmatprep.subr.mxu0 %v103
    %894 = vmatpush1.msra.mxu0 %v102
    %895 = vmatprep.subr.mxu0 %v107
    %896 = vmatpush1.msra.mxu0 %v106
    %897 = vmatprep.subr.mxu0 %v111
    %898 = vmatpush1.msra.mxu0 %v110
    %899 = vmatprep.subr.mxu0 %v115
    %900 = vmatpush1.msra.mxu0 %v114
    %901 = vmatprep.subr.mxu0 0.0
    %902 = vmatpush1.msra.mxu0 0.0
    %903 = vmatprep.subr.mxu0 0.0
    %904 = vmatpush1.msra.mxu0 0.0
    %905 = vmatprep.subr.mxu0 0.0
    %906 = vmatpush1.msra.mxu0 0.0
    %907 = vmatprep.subr.mxu0 0.0
    %908 = vmatpush1.msra.mxu0 0.0
    %909 = vmatprep.subr.mxu0 0.0
    %910 = vmatpush1.msra.mxu0 0.0
    %911 = vmatprep.subr.mxu0 0.0
    %912 = vmatpush1.msra.mxu0 0.0
    %913 = vmatprep.subr.mxu0 0.0
    %914 = vmatpush1.msra.mxu0 0.0
    %915 = vmatprep.subr.mxu0 0.0
    %916 = vmatpush1.msra.mxu0 0.0
    %917 = vmatprep.subr.mxu0 0.0
    %918 = vmatpush1.msra.mxu0 0.0
    %919 = vmatprep.subr.mxu0 0.0
    %920 = vmatpush1.msra.mxu0 0.0
    %921 = vmatprep.subr.mxu0 0.0
    %922 = vmatpush1.msra.mxu0 0.0
    %923 = vmatprep.subr.mxu0 0.0
    %924 = vmatpush1.msra.mxu0 0.0
    %925 = vmatprep.subr.mxu0 0.0
    %926 = vmatpush1.msra.mxu0 0.0
    %927 = vmatprep.subr.mxu0 0.0
    %928 = vmatpush1.msra.mxu0 0.0
    %929 = vmatprep.subr.mxu0 0.0
    %930 = vmatpush1.msra.mxu0 0.0
    %931 = vmatprep.subr.mxu0 0.0
    %932 = vmatpush1.msra.mxu0 0.0
    %933 = vmatprep.mubr.f32.mxu0 0.0
    %934 = vmatmul.mubr.f32.gmra.mrb[0].mxu0 %v792
    %v935 = vpop.f32.mrb[0].mxu0
    %v936 = vadd.f32 0.0, %v935
    %v937 = vpop.f32.mrb[0].mxu0
    %v938 = vadd.f32 0.0, %v937
    %939 = vdwg.mxu0
    %v940 = vadd.f32 %v794, %v865
    %v941 = vadd.f32 %v795, %v867
    %v942 = vadd.f32 %v796, %v936
    %v943 = vadd.f32 %v797, %v938
    %v944 = vxor.u32 %v940, 2147483648
    %v945 = vxor.u32 %v941, 2147483648
    %v946 = vxor.u32 %v942, 2147483648
    %v947 = vmul.f32 %v944, 1.442695
    %v948 = vpow.pop %v947
    %v949 = vmul.f32 %v945, 1.442695
    %v950 = vpow.pop %v949
    %v951 = vmul.f32 %v946, 1.442695
    %v952 = vpow.pop %v951
    %v953 = vadd.f32 %v948, 1.0
    %v954 = vadd.f32 %v950, 1.0
    %v955 = vadd.f32 %v952, 1.0
    %v956 = vrcp.pop %v953
    %v957 = vmul.f32 1.0, %v956
    %v958 = vrcp.pop %v954
    %v959 = vmul.f32 1.0, %v958
    %v960 = vrcp.pop %v955
    %v961 = vmul.f32 1.0, %v960
    %v962 = vtanh.pop %v943
    %v963 = vmul.f32 %v959, %v790
    %v964 = vmul.f32 %v957, %v962
    %v965 = vadd.f32 %v963, %v964
    %v966 = vtanh.pop %v965
    %v967 = vmul.f32 %v961, %v966
    %s968 = scalar_lea.vmem [#allocation4], 96
    %v969 = vld [vmem:[%s968] sm:$0xff]
    %v970 = vld [vmem:[%s968 + $0x8] sm:$0xff]
    %v971 = vld [vmem:[%s968 + $0x10] sm:$0xff]
    %v972 = vld [vmem:[%s968 + $0x18] sm:$0xff]
    %973 = vmatprep.subr.mxu0 %v53
    %974 = vmatpush1.msra.mxu0 %v52
    %975 = vmatprep.subr.mxu0 %v57
    %976 = vmatpush1.msra.mxu0 %v56
    %977 = vmatprep.subr.mxu0 %v61
    %978 = vmatpush1.msra.mxu0 %v60
    %979 = vmatprep.subr.mxu0 %v65
    %980 = vmatpush1.msra.mxu0 %v64
    %981 = vmatprep.subr.mxu0 %v69
    %982 = vmatpush1.msra.mxu0 %v68
    %983 = vmatprep.subr.mxu0 %v73
    %984 = vmatpush1.msra.mxu0 %v72
    %985 = vmatprep.subr.mxu0 %v77
    %986 = vmatpush1.msra.mxu0 %v76
    %987 = vmatprep.subr.mxu0 %v81
    %988 = vmatpush1.msra.mxu0 %v80
    %989 = vmatprep.subr.mxu0 %v85
    %990 = vmatpush1.msra.mxu0 %v84
    %991 = vmatprep.subr.mxu0 %v89
    %992 = vmatpush1.msra.mxu0 %v88
    %993 = vmatprep.subr.mxu0 %v93
    %994 = vmatpush1.msra.mxu0 %v92
    %995 = vmatprep.subr.mxu0 %v97
    %996 = vmatpush1.msra.mxu0 %v96
    %997 = vmatprep.subr.mxu0 %v101
    %998 = vmatpush1.msra.mxu0 %v100
    %999 = vmatprep.subr.mxu0 %v105
    %1000 = vmatpush1.msra.mxu0 %v104
    %1001 = vmatprep.subr.mxu0 %v109
    %1002 = vmatpush1.msra.mxu0 %v108
    %1003 = vmatprep.subr.mxu0 %v113
    %1004 = vmatpush1.msra.mxu0 %v112
    %1005 = vmatprep.subr.mxu0 0.0
    %1006 = vmatpush1.msra.mxu0 0.0
    %1007 = vmatprep.subr.mxu0 0.0
    %1008 = vmatpush1.msra.mxu0 0.0
    %1009 = vmatprep.subr.mxu0 0.0
    %1010 = vmatpush1.msra.mxu0 0.0
    %1011 = vmatprep.subr.mxu0 0.0
    %1012 = vmatpush1.msra.mxu0 0.0
    %1013 = vmatprep.subr.mxu0 0.0
    %1014 = vmatpush1.msra.mxu0 0.0
    %1015 = vmatprep.subr.mxu0 0.0
    %1016 = vmatpush1.msra.mxu0 0.0
    %1017 = vmatprep.subr.mxu0 0.0
    %1018 = vmatpush1.msra.mxu0 0.0
    %1019 = vmatprep.subr.mxu0 0.0
    %1020 = vmatpush1.msra.mxu0 0.0
    %1021 = vmatprep.subr.mxu0 0.0
    %1022 = vmatpush1.msra.mxu0 0.0
    %1023 = vmatprep.subr.mxu0 0.0
    %1024 = vmatpush1.msra.mxu0 0.0
    %1025 = vmatprep.subr.mxu0 0.0
    %1026 = vmatpush1.msra.mxu0 0.0
    %1027 = vmatprep.subr.mxu0 0.0
    %1028 = vmatpush1.msra.mxu0 0.0
    %1029 = vmatprep.subr.mxu0 0.0
    %1030 = vmatpush1.msra.mxu0 0.0
    %1031 = vmatprep.subr.mxu0 0.0
    %1032 = vmatpush1.msra.mxu0 0.0
    %1033 = vmatprep.subr.mxu0 0.0
    %1034 = vmatpush1.msra.mxu0 0.0
    %1035 = vmatprep.subr.mxu0 0.0
    %1036 = vmatpush1.msra.mxu0 0.0
    %1037 = vmatprep.mubr.f32.mxu0 0.0
    %1038 = vmatmul.mubr.f32.gmra.mrb[0].mxu0 %v967
    %v1039 = vpop.f32.mrb[0].mxu0
    %v1040 = vadd.f32 0.0, %v1039
    %v1041 = vpop.f32.mrb[0].mxu0
    %v1042 = vadd.f32 0.0, %v1041
    %1043 = vdwg.mxu0
    %1044 = vmatprep.subr.mxu0 %v55
    %1045 = vmatpush1.msra.mxu0 %v54
    %1046 = vmatprep.subr.mxu0 %v59
    %1047 = vmatpush1.msra.mxu0 %v58
    %1048 = vmatprep.subr.mxu0 %v63
    %1049 = vmatpush1.msra.mxu0 %v62
    %1050 = vmatprep.subr.mxu0 %v67
    %1051 = vmatpush1.msra.mxu0 %v66
    %1052 = vmatprep.subr.mxu0 %v71
    %1053 = vmatpush1.msra.mxu0 %v70
    %1054 = vmatprep.subr.mxu0 %v75
    %1055 = vmatpush1.msra.mxu0 %v74
    %1056 = vmatprep.subr.mxu0 %v79
    %1057 = vmatpush1.msra.mxu0 %v78
    %1058 = vmatprep.subr.mxu0 %v83
    %1059 = vmatpush1.msra.mxu0 %v82
    %1060 = vmatprep.subr.mxu0 %v87
    %1061 = vmatpush1.msra.mxu0 %v86
    %1062 = vmatprep.subr.mxu0 %v91
    %1063 = vmatpush1.msra.mxu0 %v90
    %1064 = vmatprep.subr.mxu0 %v95
    %1065 = vmatpush1.msra.mxu0 %v94
    %1066 = vmatprep.subr.mxu0 %v99
    %1067 = vmatpush1.msra.mxu0 %v98
    %1068 = vmatprep.subr.mxu0 %v103
    %1069 = vmatpush1.msra.mxu0 %v102
    %1070 = vmatprep.subr.mxu0 %v107
    %1071 = vmatpush1.msra.mxu0 %v106
    %1072 = vmatprep.subr.mxu0 %v111
    %1073 = vmatpush1.msra.mxu0 %v110
    %1074 = vmatprep.subr.mxu0 %v115
    %1075 = vmatpush1.msra.mxu0 %v114
    %1076 = vmatprep.subr.mxu0 0.0
    %1077 = vmatpush1.msra.mxu0 0.0
    %1078 = vmatprep.subr.mxu0 0.0
    %1079 = vmatpush1.msra.mxu0 0.0
    %1080 = vmatprep.subr.mxu0 0.0
    %1081 = vmatpush1.msra.mxu0 0.0
    %1082 = vmatprep.subr.mxu0 0.0
    %1083 = vmatpush1.msra.mxu0 0.0
    %1084 = vmatprep.subr.mxu0 0.0
    %1085 = vmatpush1.msra.mxu0 0.0
    %1086 = vmatprep.subr.mxu0 0.0
    %1087 = vmatpush1.msra.mxu0 0.0
    %1088 = vmatprep.subr.mxu0 0.0
    %1089 = vmatpush1.msra.mxu0 0.0
    %1090 = vmatprep.subr.mxu0 0.0
    %1091 = vmatpush1.msra.mxu0 0.0
    %1092 = vmatprep.subr.mxu0 0.0
    %1093 = vmatpush1.msra.mxu0 0.0
    %1094 = vmatprep.subr.mxu0 0.0
    %1095 = vmatpush1.msra.mxu0 0.0
    %1096 = vmatprep.subr.mxu0 0.0
    %1097 = vmatpush1.msra.mxu0 0.0
    %1098 = vmatprep.subr.mxu0 0.0
    %1099 = vmatpush1.msra.mxu0 0.0
    %1100 = vmatprep.subr.mxu0 0.0
    %1101 = vmatpush1.msra.mxu0 0.0
    %1102 = vmatprep.subr.mxu0 0.0
    %1103 = vmatpush1.msra.mxu0 0.0
    %1104 = vmatprep.subr.mxu0 0.0
    %1105 = vmatpush1.msra.mxu0 0.0
    %1106 = vmatprep.subr.mxu0 0.0
    %1107 = vmatpush1.msra.mxu0 0.0
    %1108 = vmatprep.mubr.f32.mxu0 0.0
    %1109 = vmatmul.mubr.f32.gmra.mrb[0].mxu0 %v967
    %v1110 = vpop.f32.mrb[0].mxu0
    %v1111 = vadd.f32 0.0, %v1110
    %v1112 = vpop.f32.mrb[0].mxu0
    %v1113 = vadd.f32 0.0, %v1112
    %1114 = vdwg.mxu0
    %v1115 = vadd.f32 %v969, %v1040
    %v1116 = vadd.f32 %v970, %v1042
    %v1117 = vadd.f32 %v971, %v1111
    %v1118 = vadd.f32 %v972, %v1113
    %v1119 = vxor.u32 %v1115, 2147483648
    %v1120 = vxor.u32 %v1116, 2147483648
    %v1121 = vxor.u32 %v1117, 2147483648
    %v1122 = vmul.f32 %v1119, 1.442695
    %v1123 = vpow.pop %v1122
    %v1124 = vmul.f32 %v1120, 1.442695
    %v1125 = vpow.pop %v1124
    %v1126 = vmul.f32 %v1121, 1.442695
    %v1127 = vpow.pop %v1126
    %v1128 = vadd.f32 %v1123, 1.0
    %v1129 = vadd.f32 %v1125, 1.0
    %v1130 = vadd.f32 %v1127, 1.0
    %v1131 = vrcp.pop %v1128
    %v1132 = vmul.f32 1.0, %v1131
    %v1133 = vrcp.pop %v1129
    %v1134 = vmul.f32 1.0, %v1133
    %v1135 = vrcp.pop %v1130
    %v1136 = vmul.f32 1.0, %v1135
    %v1137 = vtanh.pop %v1118
    %v1138 = vmul.f32 %v1134, %v965
    %v1139 = vmul.f32 %v1132, %v1137
    %v1140 = vadd.f32 %v1138, %v1139
    %v1141 = vtanh.pop %v1140
    %v1142 = vmul.f32 %v1136, %v1141
    %s1143 = scalar_lea.vmem [#allocation4], 128
    %v1144 = vld [vmem:[%s1143] sm:$0xff]
    %v1145 = vld [vmem:[%s1143 + $0x8] sm:$0xff]
    %v1146 = vld [vmem:[%s1143 + $0x10] sm:$0xff]
    %v1147 = vld [vmem:[%s1143 + $0x18] sm:$0xff]
    %1148 = vmatprep.subr.mxu0 %v53
    %1149 = vmatpush1.msra.mxu0 %v52
    %1150 = vmatprep.subr.mxu0 %v57
    %1151 = vmatpush1.msra.mxu0 %v56
    %1152 = vmatprep.subr.mxu0 %v61
    %1153 = vmatpush1.msra.mxu0 %v60
    %1154 = vmatprep.subr.mxu0 %v65
    %1155 = vmatpush1.msra.mxu0 %v64
    %1156 = vmatprep.subr.mxu0 %v69
    %1157 = vmatpush1.msra.mxu0 %v68
    %1158 = vmatprep.subr.mxu0 %v73
    %1159 = vmatpush1.msra.mxu0 %v72
    %1160 = vmatprep.subr.mxu0 %v77
    %1161 = vmatpush1.msra.mxu0 %v76
    %1162 = vmatprep.subr.mxu0 %v81
    %1163 = vmatpush1.msra.mxu0 %v80
    %1164 = vmatprep.subr.mxu0 %v85
    %1165 = vmatpush1.msra.mxu0 %v84
    %1166 = vmatprep.subr.mxu0 %v89
    %1167 = vmatpush1.msra.mxu0 %v88
    %1168 = vmatprep.subr.mxu0 %v93
    %1169 = vmatpush1.msra.mxu0 %v92
    %1170 = vmatprep.subr.mxu0 %v97
    %1171 = vmatpush1.msra.mxu0 %v96
    %1172 = vmatprep.subr.mxu0 %v101
    %1173 = vmatpush1.msra.mxu0 %v100
    %1174 = vmatprep.subr.mxu0 %v105
    %1175 = vmatpush1.msra.mxu0 %v104
    %1176 = vmatprep.subr.mxu0 %v109
    %1177 = vmatpush1.msra.mxu0 %v108
    %1178 = vmatprep.subr.mxu0 %v113
    %1179 = vmatpush1.msra.mxu0 %v112
    %1180 = vmatprep.subr.mxu0 0.0
    %1181 = vmatpush1.msra.mxu0 0.0
    %1182 = vmatprep.subr.mxu0 0.0
    %1183 = vmatpush1.msra.mxu0 0.0
    %1184 = vmatprep.subr.mxu0 0.0
    %1185 = vmatpush1.msra.mxu0 0.0
    %1186 = vmatprep.subr.mxu0 0.0
    %1187 = vmatpush1.msra.mxu0 0.0
    %1188 = vmatprep.subr.mxu0 0.0
    %1189 = vmatpush1.msra.mxu0 0.0
    %1190 = vmatprep.subr.mxu0 0.0
    %1191 = vmatpush1.msra.mxu0 0.0
    %1192 = vmatprep.subr.mxu0 0.0
    %1193 = vmatpush1.msra.mxu0 0.0
    %1194 = vmatprep.subr.mxu0 0.0
    %1195 = vmatpush1.msra.mxu0 0.0
    %1196 = vmatprep.subr.mxu0 0.0
    %1197 = vmatpush1.msra.mxu0 0.0
    %1198 = vmatprep.subr.mxu0 0.0
    %1199 = vmatpush1.msra.mxu0 0.0
    %1200 = vmatprep.subr.mxu0 0.0
    %1201 = vmatpush1.msra.mxu0 0.0
    %1202 = vmatprep.subr.mxu0 0.0
    %1203 = vmatpush1.msra.mxu0 0.0
    %1204 = vmatprep.subr.mxu0 0.0
    %1205 = vmatpush1.msra.mxu0 0.0
    %1206 = vmatprep.subr.mxu0 0.0
    %1207 = vmatpush1.msra.mxu0 0.0
    %1208 = vmatprep.subr.mxu0 0.0
    %1209 = vmatpush1.msra.mxu0 0.0
    %1210 = vmatprep.subr.mxu0 0.0
    %1211 = vmatpush1.msra.mxu0 0.0
    %1212 = vmatprep.mubr.f32.mxu0 0.0
    %1213 = vmatmul.mubr.f32.gmra.mrb[0].mxu0 %v1142
    %v1214 = vpop.f32.mrb[0].mxu0
    %v1215 = vadd.f32 0.0, %v1214
    %v1216 = vpop.f32.mrb[0].mxu0
    %v1217 = vadd.f32 0.0, %v1216
    %1218 = vdwg.mxu0
    %1219 = vmatprep.subr.mxu0 %v55
    %1220 = vmatpush1.msra.mxu0 %v54
    %1221 = vmatprep.subr.mxu0 %v59
    %1222 = vmatpush1.msra.mxu0 %v58
    %1223 = vmatprep.subr.mxu0 %v63
    %1224 = vmatpush1.msra.mxu0 %v62
    %1225 = vmatprep.subr.mxu0 %v67
    %1226 = vmatpush1.msra.mxu0 %v66
    %1227 = vmatprep.subr.mxu0 %v71
    %1228 = vmatpush1.msra.mxu0 %v70
    %1229 = vmatprep.subr.mxu0 %v75
    %1230 = vmatpush1.msra.mxu0 %v74
    %1231 = vmatprep.subr.mxu0 %v79
    %1232 = vmatpush1.msra.mxu0 %v78
    %1233 = vmatprep.subr.mxu0 %v83
    %1234 = vmatpush1.msra.mxu0 %v82
    %1235 = vmatprep.subr.mxu0 %v87
    %1236 = vmatpush1.msra.mxu0 %v86
    %1237 = vmatprep.subr.mxu0 %v91
    %1238 = vmatpush1.msra.mxu0 %v90
    %1239 = vmatprep.subr.mxu0 %v95
    %1240 = vmatpush1.msra.mxu0 %v94
    %1241 = vmatprep.subr.mxu0 %v99
    %1242 = vmatpush1.msra.mxu0 %v98
    %1243 = vmatprep.subr.mxu0 %v103
    %1244 = vmatpush1.msra.mxu0 %v102
    %1245 = vmatprep.subr.mxu0 %v107
    %1246 = vmatpush1.msra.mxu0 %v106
    %1247 = vmatprep.subr.mxu0 %v111
    %1248 = vmatpush1.msra.mxu0 %v110
    %1249 = vmatprep.subr.mxu0 %v115
    %1250 = vmatpush1.msra.mxu0 %v114
    %1251 = vmatprep.subr.mxu0 0.0
    %1252 = vmatpush1.msra.mxu0 0.0
    %1253 = vmatprep.subr.mxu0 0.0
    %1254 = vmatpush1.msra.mxu0 0.0
    %1255 = vmatprep.subr.mxu0 0.0
    %1256 = vmatpush1.msra.mxu0 0.0
    %1257 = vmatprep.subr.mxu0 0.0
    %1258 = vmatpush1.msra.mxu0 0.0
    %1259 = vmatprep.subr.mxu0 0.0
    %1260 = vmatpush1.msra.mxu0 0.0
    %1261 = vmatprep.subr.mxu0 0.0
    %1262 = vmatpush1.msra.mxu0 0.0
    %1263 = vmatprep.subr.mxu0 0.0
    %1264 = vmatpush1.msra.mxu0 0.0
    %1265 = vmatprep.subr.mxu0 0.0
    %1266 = vmatpush1.msra.mxu0 0.0
    %1267 = vmatprep.subr.mxu0 0.0
    %1268 = vmatpush1.msra.mxu0 0.0
    %1269 = vmatprep.subr.mxu0 0.0
    %1270 = vmatpush1.msra.mxu0 0.0
    %1271 = vmatprep.subr.mxu0 0.0
    %1272 = vmatpush1.msra.mxu0 0.0
    %1273 = vmatprep.subr.mxu0 0.0
    %1274 = vmatpush1.msra.mxu0 0.0
    %1275 = vmatprep.subr.mxu0 0.0
    %1276 = vmatpush1.msra.mxu0 0.0
    %1277 = vmatprep.subr.mxu0 0.0
    %1278 = vmatpush1.msra.mxu0 0.0
    %1279 = vmatprep.subr.mxu0 0.0
    %1280 = vmatpush1.msra.mxu0 0.0
    %1281 = vmatprep.subr.mxu0 0.0
    %1282 = vmatpush1.msra.mxu0 0.0
    %1283 = vmatprep.mubr.f32.mxu0 0.0
    %1284 = vmatmul.mubr.f32.gmra.mrb[0].mxu0 %v1142
    %v1285 = vpop.f32.mrb[0].mxu0
    %v1286 = vadd.f32 0.0, %v1285
    %v1287 = vpop.f32.mrb[0].mxu0
    %v1288 = vadd.f32 0.0, %v1287
    %1289 = vdwg.mxu0
    %v1290 = vadd.f32 %v1144, %v1215
    %v1291 = vadd.f32 %v1145, %v1217
    %v1292 = vadd.f32 %v1146, %v1286
    %v1293 = vadd.f32 %v1147, %v1288
    %v1294 = vxor.u32 %v1290, 2147483648
    %v1295 = vxor.u32 %v1291, 2147483648
    %v1296 = vxor.u32 %v1292, 2147483648
    %v1297 = vmul.f32 %v1294, 1.442695
    %v1298 = vpow.pop %v1297
    %v1299 = vmul.f32 %v1295, 1.442695
    %v1300 = vpow.pop %v1299
    %v1301 = vmul.f32 %v1296, 1.442695
    %v1302 = vpow.pop %v1301
    %v1303 = vadd.f32 %v1298, 1.0
    %v1304 = vadd.f32 %v1300, 1.0
    %v1305 = vadd.f32 %v1302, 1.0
    %v1306 = vrcp.pop %v1303
    %v1307 = vmul.f32 1.0, %v1306
    %v1308 = vrcp.pop %v1304
    %v1309 = vmul.f32 1.0, %v1308
    %v1310 = vrcp.pop %v1305
    %v1311 = vmul.f32 1.0, %v1310
    %v1312 = vtanh.pop %v1293
    %v1313 = vmul.f32 %v1309, %v1140
    %v1314 = vmul.f32 %v1307, %v1312
    %v1315 = vadd.f32 %v1313, %v1314
    %v1316 = vtanh.pop %v1315
    %v1317 = vmul.f32 %v1311, %v1316
    %s1318 = scalar_lea.vmem [#allocation4], 160
    %v1319 = vld [vmem:[%s1318] sm:$0xff]
    %v1320 = vld [vmem:[%s1318 + $0x8] sm:$0xff]
    %v1321 = vld [vmem:[%s1318 + $0x10] sm:$0xff]
    %v1322 = vld [vmem:[%s1318 + $0x18] sm:$0xff]
    %1323 = vmatprep.subr.mxu0 %v53
    %1324 = vmatpush1.msra.mxu0 %v52
    %1325 = vmatprep.subr.mxu0 %v57
    %1326 = vmatpush1.msra.mxu0 %v56
    %1327 = vmatprep.subr.mxu0 %v61
    %1328 = vmatpush1.msra.mxu0 %v60
    %1329 = vmatprep.subr.mxu0 %v65
    %1330 = vmatpush1.msra.mxu0 %v64
    %1331 = vmatprep.subr.mxu0 %v69
    %1332 = vmatpush1.msra.mxu0 %v68
    %1333 = vmatprep.subr.mxu0 %v73
    %1334 = vmatpush1.msra.mxu0 %v72
    %1335 = vmatprep.subr.mxu0 %v77
    %1336 = vmatpush1.msra.mxu0 %v76
    %1337 = vmatprep.subr.mxu0 %v81
    %1338 = vmatpush1.msra.mxu0 %v80
    %1339 = vmatprep.subr.mxu0 %v85
    %1340 = vmatpush1.msra.mxu0 %v84
    %1341 = vmatprep.subr.mxu0 %v89
    %1342 = vmatpush1.msra.mxu0 %v88
    %1343 = vmatprep.subr.mxu0 %v93
    %1344 = vmatpush1.msra.mxu0 %v92
    %1345 = vmatprep.subr.mxu0 %v97
    %1346 = vmatpush1.msra.mxu0 %v96
    %1347 = vmatprep.subr.mxu0 %v101
    %1348 = vmatpush1.msra.mxu0 %v100
    %1349 = vmatprep.subr.mxu0 %v105
    %1350 = vmatpush1.msra.mxu0 %v104
    %1351 = vmatprep.subr.mxu0 %v109
    %1352 = vmatpush1.msra.mxu0 %v108
    %1353 = vmatprep.subr.mxu0 %v113
    %1354 = vmatpush1.msra.mxu0 %v112
    %1355 = vmatprep.subr.mxu0 0.0
    %1356 = vmatpush1.msra.mxu0 0.0
    %1357 = vmatprep.subr.mxu0 0.0
    %1358 = vmatpush1.msra.mxu0 0.0
    %1359 = vmatprep.subr.mxu0 0.0
    %1360 = vmatpush1.msra.mxu0 0.0
    %1361 = vmatprep.subr.mxu0 0.0
    %1362 = vmatpush1.msra.mxu0 0.0
    %1363 = vmatprep.subr.mxu0 0.0
    %1364 = vmatpush1.msra.mxu0 0.0
    %1365 = vmatprep.subr.mxu0 0.0
    %1366 = vmatpush1.msra.mxu0 0.0
    %1367 = vmatprep.subr.mxu0 0.0
    %1368 = vmatpush1.msra.mxu0 0.0
    %1369 = vmatprep.subr.mxu0 0.0
    %1370 = vmatpush1.msra.mxu0 0.0
    %1371 = vmatprep.subr.mxu0 0.0
    %1372 = vmatpush1.msra.mxu0 0.0
    %1373 = vmatprep.subr.mxu0 0.0
    %1374 = vmatpush1.msra.mxu0 0.0
    %1375 = vmatprep.subr.mxu0 0.0
    %1376 = vmatpush1.msra.mxu0 0.0
    %1377 = vmatprep.subr.mxu0 0.0
    %1378 = vmatpush1.msra.mxu0 0.0
    %1379 = vmatprep.subr.mxu0 0.0
    %1380 = vmatpush1.msra.mxu0 0.0
    %1381 = vmatprep.subr.mxu0 0.0
    %1382 = vmatpush1.msra.mxu0 0.0
    %1383 = vmatprep.subr.mxu0 0.0
    %1384 = vmatpush1.msra.mxu0 0.0
    %1385 = vmatprep.subr.mxu0 0.0
    %1386 = vmatpush1.msra.mxu0 0.0
    %1387 = vmatprep.mubr.f32.mxu0 0.0
    %1388 = vmatmul.mubr.f32.gmra.mrb[0].mxu0 %v1317
    %v1389 = vpop.f32.mrb[0].mxu0
    %v1390 = vadd.f32 0.0, %v1389
    %v1391 = vpop.f32.mrb[0].mxu0
    %v1392 = vadd.f32 0.0, %v1391
    %1393 = vdwg.mxu0
    %1394 = vmatprep.subr.mxu0 %v55
    %1395 = vmatpush1.msra.mxu0 %v54
    %1396 = vmatprep.subr.mxu0 %v59
    %1397 = vmatpush1.msra.mxu0 %v58
    %1398 = vmatprep.subr.mxu0 %v63
    %1399 = vmatpush1.msra.mxu0 %v62
    %1400 = vmatprep.subr.mxu0 %v67
    %1401 = vmatpush1.msra.mxu0 %v66
    %1402 = vmatprep.subr.mxu0 %v71
    %1403 = vmatpush1.msra.mxu0 %v70
    %1404 = vmatprep.subr.mxu0 %v75
    %1405 = vmatpush1.msra.mxu0 %v74
    %1406 = vmatprep.subr.mxu0 %v79
    %1407 = vmatpush1.msra.mxu0 %v78
    %1408 = vmatprep.subr.mxu0 %v83
    %1409 = vmatpush1.msra.mxu0 %v82
    %1410 = vmatprep.subr.mxu0 %v87
    %1411 = vmatpush1.msra.mxu0 %v86
    %1412 = vmatprep.subr.mxu0 %v91
    %1413 = vmatpush1.msra.mxu0 %v90
    %1414 = vmatprep.subr.mxu0 %v95
    %1415 = vmatpush1.msra.mxu0 %v94
    %1416 = vmatprep.subr.mxu0 %v99
    %1417 = vmatpush1.msra.mxu0 %v98
    %1418 = vmatprep.subr.mxu0 %v103
    %1419 = vmatpush1.msra.mxu0 %v102
    %1420 = vmatprep.subr.mxu0 %v107
    %1421 = vmatpush1.msra.mxu0 %v106
    %1422 = vmatprep.subr.mxu0 %v111
    %1423 = vmatpush1.msra.mxu0 %v110
    %1424 = vmatprep.subr.mxu0 %v115
    %1425 = vmatpush1.msra.mxu0 %v114
    %1426 = vmatprep.subr.mxu0 0.0
    %1427 = vmatpush1.msra.mxu0 0.0
    %1428 = vmatprep.subr.mxu0 0.0
    %1429 = vmatpush1.msra.mxu0 0.0
    %1430 = vmatprep.subr.mxu0 0.0
    %1431 = vmatpush1.msra.mxu0 0.0
    %1432 = vmatprep.subr.mxu0 0.0
    %1433 = vmatpush1.msra.mxu0 0.0
    %1434 = vmatprep.subr.mxu0 0.0
    %1435 = vmatpush1.msra.mxu0 0.0
    %1436 = vmatprep.subr.mxu0 0.0
    %1437 = vmatpush1.msra.mxu0 0.0
    %1438 = vmatprep.subr.mxu0 0.0
    %1439 = vmatpush1.msra.mxu0 0.0
    %1440 = vmatprep.subr.mxu0 0.0
    %1441 = vmatpush1.msra.mxu0 0.0
    %1442 = vmatprep.subr.mxu0 0.0
    %1443 = vmatpush1.msra.mxu0 0.0
    %1444 = vmatprep.subr.mxu0 0.0
    %1445 = vmatpush1.msra.mxu0 0.0
    %1446 = vmatprep.subr.mxu0 0.0
    %1447 = vmatpush1.msra.mxu0 0.0
    %1448 = vmatprep.subr.mxu0 0.0
    %1449 = vmatpush1.msra.mxu0 0.0
    %1450 = vmatprep.subr.mxu0 0.0
    %1451 = vmatpush1.msra.mxu0 0.0
    %1452 = vmatprep.subr.mxu0 0.0
    %1453 = vmatpush1.msra.mxu0 0.0
    %1454 = vmatprep.subr.mxu0 0.0
    %1455 = vmatpush1.msra.mxu0 0.0
    %1456 = vmatprep.subr.mxu0 0.0
    %1457 = vmatpush1.msra.mxu0 0.0
    %1458 = vmatprep.mubr.f32.mxu0 0.0
    %1459 = vmatmul.mubr.f32.gmra.mrb[0].mxu0 %v1317
    %v1460 = vpop.f32.mrb[0].mxu0
    %v1461 = vadd.f32 0.0, %v1460
    %v1462 = vpop.f32.mrb[0].mxu0
    %v1463 = vadd.f32 0.0, %v1462
    %1464 = vdwg.mxu0
    %v1465 = vadd.f32 %v1319, %v1390
    %v1466 = vadd.f32 %v1320, %v1392
    %v1467 = vadd.f32 %v1321, %v1461
    %v1468 = vadd.f32 %v1322, %v1463
    %v1469 = vxor.u32 %v1465, 2147483648
    %v1470 = vxor.u32 %v1466, 2147483648
    %v1471 = vxor.u32 %v1467, 2147483648
    %v1472 = vmul.f32 %v1469, 1.442695
    %v1473 = vpow.pop %v1472
    %v1474 = vmul.f32 %v1470, 1.442695
    %v1475 = vpow.pop %v1474
    %v1476 = vmul.f32 %v1471, 1.442695
    %v1477 = vpow.pop %v1476
    %v1478 = vadd.f32 %v1473, 1.0
    %v1479 = vadd.f32 %v1475, 1.0
    %v1480 = vadd.f32 %v1477, 1.0
    %v1481 = vrcp.pop %v1478
    %v1482 = vmul.f32 1.0, %v1481
    %v1483 = vrcp.pop %v1479
    %v1484 = vmul.f32 1.0, %v1483
    %v1485 = vrcp.pop %v1480
    %v1486 = vmul.f32 1.0, %v1485
    %v1487 = vtanh.pop %v1468
    %v1488 = vmul.f32 %v1484, %v1315
    %v1489 = vmul.f32 %v1482, %v1487
    %v1490 = vadd.f32 %v1488, %v1489
    %v1491 = vtanh.pop %v1490
    %v1492 = vmul.f32 %v1486, %v1491
    %s1493 = scalar_lea.vmem [#allocation4], 192
    %v1494 = vld [vmem:[%s1493] sm:$0xff]
    %v1495 = vld [vmem:[%s1493 + $0x8] sm:$0xff]
    %v1496 = vld [vmem:[%s1493 + $0x10] sm:$0xff]
    %v1497 = vld [vmem:[%s1493 + $0x18] sm:$0xff]
    %1498 = vmatprep.subr.mxu0 %v53
    %1499 = vmatpush1.msra.mxu0 %v52
    %1500 = vmatprep.subr.mxu0 %v57
    %1501 = vmatpush1.msra.mxu0 %v56
    %1502 = vmatprep.subr.mxu0 %v61
    %1503 = vmatpush1.msra.mxu0 %v60
    %1504 = vmatprep.subr.mxu0 %v65
    %1505 = vmatpush1.msra.mxu0 %v64
    %1506 = vmatprep.subr.mxu0 %v69
    %1507 = vmatpush1.msra.mxu0 %v68
    %1508 = vmatprep.subr.mxu0 %v73
    %1509 = vmatpush1.msra.mxu0 %v72
    %1510 = vmatprep.subr.mxu0 %v77
    %1511 = vmatpush1.msra.mxu0 %v76
    %1512 = vmatprep.subr.mxu0 %v81
    %1513 = vmatpush1.msra.mxu0 %v80
    %1514 = vmatprep.subr.mxu0 %v85
    %1515 = vmatpush1.msra.mxu0 %v84
    %1516 = vmatprep.subr.mxu0 %v89
    %1517 = vmatpush1.msra.mxu0 %v88
    %1518 = vmatprep.subr.mxu0 %v93
    %1519 = vmatpush1.msra.mxu0 %v92
    %1520 = vmatprep.subr.mxu0 %v97
    %1521 = vmatpush1.msra.mxu0 %v96
    %1522 = vmatprep.subr.mxu0 %v101
    %1523 = vmatpush1.msra.mxu0 %v100
    %1524 = vmatprep.subr.mxu0 %v105
    %1525 = vmatpush1.msra.mxu0 %v104
    %1526 = vmatprep.subr.mxu0 %v109
    %1527 = vmatpush1.msra.mxu0 %v108
    %1528 = vmatprep.subr.mxu0 %v113
    %1529 = vmatpush1.msra.mxu0 %v112
    %1530 = vmatprep.subr.mxu0 0.0
    %1531 = vmatpush1.msra.mxu0 0.0
    %1532 = vmatprep.subr.mxu0 0.0
    %1533 = vmatpush1.msra.mxu0 0.0
    %1534 = vmatprep.subr.mxu0 0.0
    %1535 = vmatpush1.msra.mxu0 0.0
    %1536 = vmatprep.subr.mxu0 0.0
    %1537 = vmatpush1.msra.mxu0 0.0
    %1538 = vmatprep.subr.mxu0 0.0
    %1539 = vmatpush1.msra.mxu0 0.0
    %1540 = vmatprep.subr.mxu0 0.0
    %1541 = vmatpush1.msra.mxu0 0.0
    %1542 = vmatprep.subr.mxu0 0.0
    %1543 = vmatpush1.msra.mxu0 0.0
    %1544 = vmatprep.subr.mxu0 0.0
    %1545 = vmatpush1.msra.mxu0 0.0
    %1546 = vmatprep.subr.mxu0 0.0
    %1547 = vmatpush1.msra.mxu0 0.0
    %1548 = vmatprep.subr.mxu0 0.0
    %1549 = vmatpush1.msra.mxu0 0.0
    %1550 = vmatprep.subr.mxu0 0.0
    %1551 = vmatpush1.msra.mxu0 0.0
    %1552 = vmatprep.subr.mxu0 0.0
    %1553 = vmatpush1.msra.mxu0 0.0
    %1554 = vmatprep.subr.mxu0 0.0
    %1555 = vmatpush1.msra.mxu0 0.0
    %1556 = vmatprep.subr.mxu0 0.0
    %1557 = vmatpush1.msra.mxu0 0.0
    %1558 = vmatprep.subr.mxu0 0.0
    %1559 = vmatpush1.msra.mxu0 0.0
    %1560 = vmatprep.subr.mxu0 0.0
    %1561 = vmatpush1.msra.mxu0 0.0
    %1562 = vmatprep.mubr.f32.mxu0 0.0
    %1563 = vmatmul.mubr.f32.gmra.mrb[0].mxu0 %v1492
    %v1564 = vpop.f32.mrb[0].mxu0
    %v1565 = vadd.f32 0.0, %v1564
    %v1566 = vpop.f32.mrb[0].mxu0
    %v1567 = vadd.f32 0.0, %v1566
    %1568 = vdwg.mxu0
    %1569 = vmatprep.subr.mxu0 %v55
    %1570 = vmatpush1.msra.mxu0 %v54
    %1571 = vmatprep.subr.mxu0 %v59
    %1572 = vmatpush1.msra.mxu0 %v58
    %1573 = vmatprep.subr.mxu0 %v63
    %1574 = vmatpush1.msra.mxu0 %v62
    %1575 = vmatprep.subr.mxu0 %v67
    %1576 = vmatpush1.msra.mxu0 %v66
    %1577 = vmatprep.subr.mxu0 %v71
    %1578 = vmatpush1.msra.mxu0 %v70
    %1579 = vmatprep.subr.mxu0 %v75
    %1580 = vmatpush1.msra.mxu0 %v74
    %1581 = vmatprep.subr.mxu0 %v79
    %1582 = vmatpush1.msra.mxu0 %v78
    %1583 = vmatprep.subr.mxu0 %v83
    %1584 = vmatpush1.msra.mxu0 %v82
    %1585 = vmatprep.subr.mxu0 %v87
    %1586 = vmatpush1.msra.mxu0 %v86
    %1587 = vmatprep.subr.mxu0 %v91
    %1588 = vmatpush1.msra.mxu0 %v90
    %1589 = vmatprep.subr.mxu0 %v95
    %1590 = vmatpush1.msra.mxu0 %v94
    %1591 = vmatprep.subr.mxu0 %v99
    %1592 = vmatpush1.msra.mxu0 %v98
    %1593 = vmatprep.subr.mxu0 %v103
    %1594 = vmatpush1.msra.mxu0 %v102
    %1595 = vmatprep.subr.mxu0 %v107
    %1596 = vmatpush1.msra.mxu0 %v106
    %1597 = vmatprep.subr.mxu0 %v111
    %1598 = vmatpush1.msra.mxu0 %v110
    %1599 = vmatprep.subr.mxu0 %v115
    %1600 = vmatpush1.msra.mxu0 %v114
    %1601 = vmatprep.subr.mxu0 0.0
    %1602 = vmatpush1.msra.mxu0 0.0
    %1603 = vmatprep.subr.mxu0 0.0
    %1604 = vmatpush1.msra.mxu0 0.0
    %1605 = vmatprep.subr.mxu0 0.0
    %1606 = vmatpush1.msra.mxu0 0.0
    %1607 = vmatprep.subr.mxu0 0.0
    %1608 = vmatpush1.msra.mxu0 0.0
    %1609 = vmatprep.subr.mxu0 0.0
    %1610 = vmatpush1.msra.mxu0 0.0
    %1611 = vmatprep.subr.mxu0 0.0
    %1612 = vmatpush1.msra.mxu0 0.0
    %1613 = vmatprep.subr.mxu0 0.0
    %1614 = vmatpush1.msra.mxu0 0.0
    %1615 = vmatprep.subr.mxu0 0.0
    %1616 = vmatpush1.msra.mxu0 0.0
    %1617 = vmatprep.subr.mxu0 0.0
    %1618 = vmatpush1.msra.mxu0 0.0
    %1619 = vmatprep.subr.mxu0 0.0
    %1620 = vmatpush1.msra.mxu0 0.0
    %1621 = vmatprep.subr.mxu0 0.0
    %1622 = vmatpush1.msra.mxu0 0.0
    %1623 = vmatprep.subr.mxu0 0.0
    %1624 = vmatpush1.msra.mxu0 0.0
    %1625 = vmatprep.subr.mxu0 0.0
    %1626 = vmatpush1.msra.mxu0 0.0
    %1627 = vmatprep.subr.mxu0 0.0
    %1628 = vmatpush1.msra.mxu0 0.0
    %1629 = vmatprep.subr.mxu0 0.0
    %1630 = vmatpush1.msra.mxu0 0.0
    %1631 = vmatprep.subr.mxu0 0.0
    %1632 = vmatpush1.msra.mxu0 0.0
    %1633 = vmatprep.mubr.f32.mxu0 0.0
    %1634 = vmatmul.mubr.f32.gmra.mrb[0].mxu0 %v1492
    %v1635 = vpop.f32.mrb[0].mxu0
    %v1636 = vadd.f32 0.0, %v1635
    %v1637 = vpop.f32.mrb[0].mxu0
    %v1638 = vadd.f32 0.0, %v1637
    %1639 = vdwg.mxu0
    %v1640 = vadd.f32 %v1494, %v1565
    %v1641 = vadd.f32 %v1495, %v1567
    %v1642 = vadd.f32 %v1496, %v1636
    %v1643 = vadd.f32 %v1497, %v1638
    %v1644 = vxor.u32 %v1640, 2147483648
    %v1645 = vxor.u32 %v1641, 2147483648
    %v1646 = vxor.u32 %v1642, 2147483648
    %v1647 = vmul.f32 %v1644, 1.442695
    %v1648 = vpow.pop %v1647
    %v1649 = vmul.f32 %v1645, 1.442695
    %v1650 = vpow.pop %v1649
    %v1651 = vmul.f32 %v1646, 1.442695
    %v1652 = vpow.pop %v1651
    %v1653 = vadd.f32 %v1648, 1.0
    %v1654 = vadd.f32 %v1650, 1.0
    %v1655 = vadd.f32 %v1652, 1.0
    %v1656 = vrcp.pop %v1653
    %v1657 = vmul.f32 1.0, %v1656
    %v1658 = vrcp.pop %v1654
    %v1659 = vmul.f32 1.0, %v1658
    %v1660 = vrcp.pop %v1655
    %v1661 = vmul.f32 1.0, %v1660
    %v1662 = vtanh.pop %v1643
    %v1663 = vmul.f32 %v1659, %v1490
    %v1664 = vmul.f32 %v1657, %v1662
    %v1665 = vadd.f32 %v1663, %v1664
    %v1666 = vtanh.pop %v1665
    %v1667 = vmul.f32 %v1661, %v1666
    %s1668 = scalar_lea.vmem [#allocation4], 224
    %v1669 = vld [vmem:[%s1668] sm:$0xff]
    %v1670 = vld [vmem:[%s1668 + $0x8] sm:$0xff]
    %v1671 = vld [vmem:[%s1668 + $0x10] sm:$0xff]
    %v1672 = vld [vmem:[%s1668 + $0x18] sm:$0xff]
    %1673 = vmatprep.subr.mxu0 %v53
    %1674 = vmatpush1.msra.mxu0 %v52
    %1675 = vmatprep.subr.mxu0 %v57
    %1676 = vmatpush1.msra.mxu0 %v56
    %1677 = vmatprep.subr.mxu0 %v61
    %1678 = vmatpush1.msra.mxu0 %v60
    %1679 = vmatprep.subr.mxu0 %v65
    %1680 = vmatpush1.msra.mxu0 %v64
    %1681 = vmatprep.subr.mxu0 %v69
    %1682 = vmatpush1.msra.mxu0 %v68
    %1683 = vmatprep.subr.mxu0 %v73
    %1684 = vmatpush1.msra.mxu0 %v72
    %1685 = vmatprep.subr.mxu0 %v77
    %1686 = vmatpush1.msra.mxu0 %v76
    %1687 = vmatprep.subr.mxu0 %v81
    %1688 = vmatpush1.msra.mxu0 %v80
    %1689 = vmatprep.subr.mxu0 %v85
    %1690 = vmatpush1.msra.mxu0 %v84
    %1691 = vmatprep.subr.mxu0 %v89
    %1692 = vmatpush1.msra.mxu0 %v88
    %1693 = vmatprep.subr.mxu0 %v93
    %1694 = vmatpush1.msra.mxu0 %v92
    %1695 = vmatprep.subr.mxu0 %v97
    %1696 = vmatpush1.msra.mxu0 %v96
    %1697 = vmatprep.subr.mxu0 %v101
    %1698 = vmatpush1.msra.mxu0 %v100
    %1699 = vmatprep.subr.mxu0 %v105
    %1700 = vmatpush1.msra.mxu0 %v104
    %1701 = vmatprep.subr.mxu0 %v109
    %1702 = vmatpush1.msra.mxu0 %v108
    %1703 = vmatprep.subr.mxu0 %v113
    %1704 = vmatpush1.msra.mxu0 %v112
    %1705 = vmatprep.subr.mxu0 0.0
    %1706 = vmatpush1.msra.mxu0 0.0
    %1707 = vmatprep.subr.mxu0 0.0
    %1708 = vmatpush1.msra.mxu0 0.0
    %1709 = vmatprep.subr.mxu0 0.0
    %1710 = vmatpush1.msra.mxu0 0.0
    %1711 = vmatprep.subr.mxu0 0.0
    %1712 = vmatpush1.msra.mxu0 0.0
    %1713 = vmatprep.subr.mxu0 0.0
    %1714 = vmatpush1.msra.mxu0 0.0
    %1715 = vmatprep.subr.mxu0 0.0
    %1716 = vmatpush1.msra.mxu0 0.0
    %1717 = vmatprep.subr.mxu0 0.0
    %1718 = vmatpush1.msra.mxu0 0.0
    %1719 = vmatprep.subr.mxu0 0.0
    %1720 = vmatpush1.msra.mxu0 0.0
    %1721 = vmatprep.subr.mxu0 0.0
    %1722 = vmatpush1.msra.mxu0 0.0
    %1723 = vmatprep.subr.mxu0 0.0
    %1724 = vmatpush1.msra.mxu0 0.0
    %1725 = vmatprep.subr.mxu0 0.0
    %1726 = vmatpush1.msra.mxu0 0.0
    %1727 = vmatprep.subr.mxu0 0.0
    %1728 = vmatpush1.msra.mxu0 0.0
    %1729 = vmatprep.subr.mxu0 0.0
    %1730 = vmatpush1.msra.mxu0 0.0
    %1731 = vmatprep.subr.mxu0 0.0
    %1732 = vmatpush1.msra.mxu0 0.0
    %1733 = vmatprep.subr.mxu0 0.0
    %1734 = vmatpush1.msra.mxu0 0.0
    %1735 = vmatprep.subr.mxu0 0.0
    %1736 = vmatpush1.msra.mxu0 0.0
    %1737 = vmatprep.mubr.f32.mxu0 0.0
    %1738 = vmatmul.mubr.f32.gmra.mrb[0].mxu0 %v1667
    %v1739 = vpop.f32.mrb[0].mxu0
    %v1740 = vadd.f32 0.0, %v1739
    %v1741 = vpop.f32.mrb[0].mxu0
    %v1742 = vadd.f32 0.0, %v1741
    %1743 = vdwg.mxu0
    %1744 = vmatprep.subr.mxu0 %v55
    %1745 = vmatpush1.msra.mxu0 %v54
    %1746 = vmatprep.subr.mxu0 %v59
    %1747 = vmatpush1.msra.mxu0 %v58
    %1748 = vmatprep.subr.mxu0 %v63
    %1749 = vmatpush1.msra.mxu0 %v62
    %1750 = vmatprep.subr.mxu0 %v67
    %1751 = vmatpush1.msra.mxu0 %v66
    %1752 = vmatprep.subr.mxu0 %v71
    %1753 = vmatpush1.msra.mxu0 %v70
    %1754 = vmatprep.subr.mxu0 %v75
    %1755 = vmatpush1.msra.mxu0 %v74
    %1756 = vmatprep.subr.mxu0 %v79
    %1757 = vmatpush1.msra.mxu0 %v78
    %1758 = vmatprep.subr.mxu0 %v83
    %1759 = vmatpush1.msra.mxu0 %v82
    %1760 = vmatprep.subr.mxu0 %v87
    %1761 = vmatpush1.msra.mxu0 %v86
    %1762 = vmatprep.subr.mxu0 %v91
    %1763 = vmatpush1.msra.mxu0 %v90
    %1764 = vmatprep.subr.mxu0 %v95
    %1765 = vmatpush1.msra.mxu0 %v94
    %1766 = vmatprep.subr.mxu0 %v99
    %1767 = vmatpush1.msra.mxu0 %v98
    %1768 = vmatprep.subr.mxu0 %v103
    %1769 = vmatpush1.msra.mxu0 %v102
    %1770 = vmatprep.subr.mxu0 %v107
    %1771 = vmatpush1.msra.mxu0 %v106
    %1772 = vmatprep.subr.mxu0 %v111
    %1773 = vmatpush1.msra.mxu0 %v110
    %1774 = vmatprep.subr.mxu0 %v115
    %1775 = vmatpush1.msra.mxu0 %v114
    %1776 = vmatprep.subr.mxu0 0.0
    %1777 = vmatpush1.msra.mxu0 0.0
    %1778 = vmatprep.subr.mxu0 0.0
    %1779 = vmatpush1.msra.mxu0 0.0
    %1780 = vmatprep.subr.mxu0 0.0
    %1781 = vmatpush1.msra.mxu0 0.0
    %1782 = vmatprep.subr.mxu0 0.0
    %1783 = vmatpush1.msra.mxu0 0.0
    %1784 = vmatprep.subr.mxu0 0.0
    %1785 = vmatpush1.msra.mxu0 0.0
    %1786 = vmatprep.subr.mxu0 0.0
    %1787 = vmatpush1.msra.mxu0 0.0
    %1788 = vmatprep.subr.mxu0 0.0
    %1789 = vmatpush1.msra.mxu0 0.0
    %1790 = vmatprep.subr.mxu0 0.0
    %1791 = vmatpush1.msra.mxu0 0.0
    %1792 = vmatprep.subr.mxu0 0.0
    %1793 = vmatpush1.msra.mxu0 0.0
    %1794 = vmatprep.subr.mxu0 0.0
    %1795 = vmatpush1.msra.mxu0 0.0
    %1796 = vmatprep.subr.mxu0 0.0
    %1797 = vmatpush1.msra.mxu0 0.0
    %1798 = vmatprep.subr.mxu0 0.0
    %1799 = vmatpush1.msra.mxu0 0.0
    %1800 = vmatprep.subr.mxu0 0.0
    %1801 = vmatpush1.msra.mxu0 0.0
    %1802 = vmatprep.subr.mxu0 0.0
    %1803 = vmatpush1.msra.mxu0 0.0
    %1804 = vmatprep.subr.mxu0 0.0
    %1805 = vmatpush1.msra.mxu0 0.0
    %1806 = vmatprep.subr.mxu0 0.0
    %1807 = vmatpush1.msra.mxu0 0.0
    %1808 = vmatprep.mubr.f32.mxu0 0.0
    %1809 = vmatmul.mubr.f32.gmra.mrb[0].mxu0 %v1667
    %v1810 = vpop.f32.mrb[0].mxu0
    %v1811 = vadd.f32 0.0, %v1810
    %v1812 = vpop.f32.mrb[0].mxu0
    %v1813 = vadd.f32 0.0, %v1812
    %1814 = vdwg.mxu0
    %v1815 = vadd.f32 %v1669, %v1740
    %v1816 = vadd.f32 %v1670, %v1742
    %v1817 = vadd.f32 %v1671, %v1811
    %v1818 = vadd.f32 %v1672, %v1813
    %v1819 = vxor.u32 %v1815, 2147483648
    %v1820 = vxor.u32 %v1816, 2147483648
    %v1821 = vxor.u32 %v1817, 2147483648
    %v1822 = vmul.f32 %v1819, 1.442695
    %v1823 = vpow.pop %v1822
    %v1824 = vmul.f32 %v1820, 1.442695
    %v1825 = vpow.pop %v1824
    %v1826 = vmul.f32 %v1821, 1.442695
    %v1827 = vpow.pop %v1826
    %v1828 = vadd.f32 %v1823, 1.0
    %v1829 = vadd.f32 %v1825, 1.0
    %v1830 = vadd.f32 %v1827, 1.0
    %v1831 = vrcp.pop %v1828
    %v1832 = vmul.f32 1.0, %v1831
    %v1833 = vrcp.pop %v1829
    %v1834 = vmul.f32 1.0, %v1833
    %v1835 = vrcp.pop %v1830
    %v1836 = vmul.f32 1.0, %v1835
    %v1837 = vtanh.pop %v1818
    %v1838 = vmul.f32 %v1834, %v1665
    %v1839 = vmul.f32 %v1832, %v1837
    %v1840 = vadd.f32 %v1838, %v1839
    %v1841 = vtanh.pop %v1840
    %v1842 = vmul.f32 %v1836, %v1841
    %1843 = vst [vmem:[#allocation2] sm:$0xff] %v1842
    %1844 = vst [vmem:[#allocation3] sm:$0xff] %v1840
    // Predicated region
    $region42: #{tpu_custom_call.1} parent=1 // pred_check
      %p1845 = pneg %p44
    $region43: #{tpu_custom_call.1} parent=1 // pred_check_branch
      %1847 = sbr.rel (%p1845) target = $region45
    $region44: #{tpu_custom_call.1} parent=1 // pred_region
      %v1848 = vld [vmem:[%s4] sm:$0xff]
      %v1849 = vld [vmem:[%s4 + $0x8] sm:$0xff]
      %v1850 = vld [vmem:[%s4 + $0x10] sm:$0xff]
      %v1851 = vld [vmem:[%s4 + $0x18] sm:$0xff]
      %v1852 = vld [vmem:[%s4 + $0x20] sm:$0xff]
      %v1853 = vld [vmem:[%s4 + $0x28] sm:$0xff]
      %v1854 = vld [vmem:[%s4 + $0x30] sm:$0xff]
      %v1855 = vld [vmem:[%s4 + $0x38] sm:$0xff]
      %v1856 = vld [vmem:[%s4 + $0x40] sm:$0xff]
      %v1857 = vld [vmem:[%s4 + $0x48] sm:$0xff]
      %v1858 = vld [vmem:[%s4 + $0x50] sm:$0xff]
      %v1859 = vld [vmem:[%s4 + $0x58] sm:$0xff]
      %v1860 = vld [vmem:[%s4 + $0x60] sm:$0xff]
      %v1861 = vld [vmem:[%s4 + $0x68] sm:$0xff]
      %v1862 = vld [vmem:[%s4 + $0x70] sm:$0xff]
      %v1863 = vld [vmem:[%s4 + $0x78] sm:$0xff]
      %v1864 = vld [vmem:[%s5] sm:$0x1]
      %v1866 = vlaneseq
      %v1867 = vshrl.u32 %v1866, 7
      %v1868 = vsub.s32 0, %v1867
      %v1869 = vrot.slane %v1864, %v1868
      %1871 = vmatprep.subr.mxu0 0.0
      %1872 = vmatpush1.msra.mxu0 %v1848
      %1873 = vmatprep.subr.mxu0 0.0
      %1874 = vmatpush1.msra.mxu0 %v1849
      %1875 = vmatprep.subr.mxu0 0.0
      %1876 = vmatpush1.msra.mxu0 %v1850
      %1877 = vmatprep.subr.mxu0 0.0
      %1878 = vmatpush1.msra.mxu0 %v1851
      %1879 = vmatprep.subr.mxu0 0.0
      %1880 = vmatpush1.msra.mxu0 %v1852
      %1881 = vmatprep.subr.mxu0 0.0
      %1882 = vmatpush1.msra.mxu0 %v1853
      %1883 = vmatprep.subr.mxu0 0.0
      %1884 = vmatpush1.msra.mxu0 %v1854
      %1885 = vmatprep.subr.mxu0 0.0
      %1886 = vmatpush1.msra.mxu0 %v1855
      %1887 = vmatprep.subr.mxu0 0.0
      %1888 = vmatpush1.msra.mxu0 %v1856
      %1889 = vmatprep.subr.mxu0 0.0
      %1890 = vmatpush1.msra.mxu0 %v1857
      %1891 = vmatprep.subr.mxu0 0.0
      %1892 = vmatpush1.msra.mxu0 %v1858
      %1893 = vmatprep.subr.mxu0 0.0
      %1894 = vmatpush1.msra.mxu0 %v1859
      %1895 = vmatprep.subr.mxu0 0.0
      %1896 = vmatpush1.msra.mxu0 %v1860
      %1897 = vmatprep.subr.mxu0 0.0
      %1898 = vmatpush1.msra.mxu0 %v1861
      %1899 = vmatprep.subr.mxu0 0.0
      %1900 = vmatpush1.msra.mxu0 %v1862
      %1901 = vmatprep.subr.mxu0 0.0
      %1902 = vmatpush1.msra.mxu0 %v1863
      %1903 = vmatprep.subr.mxu0 0.0
      %1904 = vmatpush1.msra.mxu0 0.0
      %1905 = vmatprep.subr.mxu0 0.0
      %1906 = vmatpush1.msra.mxu0 0.0
      %1907 = vmatprep.subr.mxu0 0.0
      %1908 = vmatpush1.msra.mxu0 0.0
      %1909 = vmatprep.subr.mxu0 0.0
      %1910 = vmatpush1.msra.mxu0 0.0
      %1911 = vmatprep.subr.mxu0 0.0
      %1912 = vmatpush1.msra.mxu0 0.0
      %1913 = vmatprep.subr.mxu0 0.0
      %1914 = vmatpush1.msra.mxu0 0.0
      %1915 = vmatprep.subr.mxu0 0.0
      %1916 = vmatpush1.msra.mxu0 0.0
      %1917 = vmatprep.subr.mxu0 0.0
      %1918 = vmatpush1.msra.mxu0 0.0
      %1919 = vmatprep.subr.mxu0 0.0
      %1920 = vmatpush1.msra.mxu0 0.0
      %1921 = vmatprep.subr.mxu0 0.0
      %1922 = vmatpush1.msra.mxu0 0.0
      %1923 = vmatprep.subr.mxu0 0.0
      %1924 = vmatpush1.msra.mxu0 0.0
      %1925 = vmatprep.subr.mxu0 0.0
      %1926 = vmatpush1.msra.mxu0 0.0
      %1927 = vmatprep.subr.mxu0 0.0
      %1928 = vmatpush1.msra.mxu0 0.0
      %1929 = vmatprep.subr.mxu0 0.0
      %1930 = vmatpush1.msra.mxu0 0.0
      %1931 = vmatprep.subr.mxu0 0.0
      %1932 = vmatpush1.msra.mxu0 0.0
      %1933 = vmatprep.subr.mxu0 0.0
      %1934 = vmatpush1.msra.mxu0 0.0
      %1935 = vmatprep.mubr.f32.mxu0 0.0
      %1936 = vmatmul.mubr.f32.gmra.mrb[0].mxu0 %v1842
      %v1937 = vpop.f32.mrb[0].mxu0
      %v1938 = vadd.f32 %v1869, %v1937
      %v1939 = vpop.f32.mrb[0].mxu0
      %1940 = vdwg.mxu0
      %v1941 = vmax.f32 %v1938, 0.0
      %v1942 = vld [vmem:[%s6] sm:$0xff]
      %v1943 = vld [vmem:[%s6 + $0x8] sm:$0xff]
      %v1944 = vld [vmem:[%s6 + $0x10] sm:$0xff]
      %v1945 = vld [vmem:[%s6 + $0x18] sm:$0xff]
      %v1946 = vld [vmem:[%s7] sm:$0x1]
      %v1948 = vlaneseq
      %v1949 = vshrl.u32 %v1948, 7
      %v1950 = vsub.s32 0, %v1949
      %v1951 = vrot.slane %v1946, %v1950
      %vm1953 = vcmask 261120
      %v1955 = vsel %vm1953, %v1941, 0
      %1957 = vmatprep.subr.mxu0 0.0
      %1958 = vmatpush1.msra.mxu0 %v1942
      %1959 = vmatprep.subr.mxu0 0.0
      %1960 = vmatpush1.msra.mxu0 %v1943
      %1961 = vmatprep.subr.mxu0 0.0
      %1962 = vmatpush1.msra.mxu0 %v1944
      %1963 = vmatprep.subr.mxu0 0.0
      %1964 = vmatpush1.msra.mxu0 %v1945
      %1965 = vmatprep.subr.mxu0 0.0
      %1966 = vmatpush1.msra.mxu0 0.0
      %1967 = vmatprep.subr.mxu0 0.0
      %1968 = vmatpush1.msra.mxu0 0.0
      %1969 = vmatprep.subr.mxu0 0.0
      %1970 = vmatpush1.msra.mxu0 0.0
      %1971 = vmatprep.subr.mxu0 0.0
      %1972 = vmatpush1.msra.mxu0 0.0
      %1973 = vmatprep.subr.mxu0 0.0
      %1974 = vmatpush1.msra.mxu0 0.0
      %1975 = vmatprep.subr.mxu0 0.0
      %1976 = vmatpush1.msra.mxu0 0.0
      %1977 = vmatprep.subr.mxu0 0.0
      %1978 = vmatpush1.msra.mxu0 0.0
      %1979 = vmatprep.subr.mxu0 0.0
      %1980 = vmatpush1.msra.mxu0 0.0
      %1981 = vmatprep.subr.mxu0 0.0
      %1982 = vmatpush1.msra.mxu0 0.0
      %1983 = vmatprep.subr.mxu0 0.0
      %1984 = vmatpush1.msra.mxu0 0.0
      %1985 = vmatprep.subr.mxu0 0.0
      %1986 = vmatpush1.msra.mxu0 0.0
      %1987 = vmatprep.subr.mxu0 0.0
      %1988 = vmatpush1.msra.mxu0 0.0
      %1989 = vmatprep.subr.mxu0 0.0
      %1990 = vmatpush1.msra.mxu0 0.0
      %1991 = vmatprep.subr.mxu0 0.0
      %1992 = vmatpush1.msra.mxu0 0.0
      %1993 = vmatprep.subr.mxu0 0.0
      %1994 = vmatpush1.msra.mxu0 0.0
      %1995 = vmatprep.subr.mxu0 0.0
      %1996 = vmatpush1.msra.mxu0 0.0
      %1997 = vmatprep.subr.mxu0 0.0
      %1998 = vmatpush1.msra.mxu0 0.0
      %1999 = vmatprep.subr.mxu0 0.0
      %2000 = vmatpush1.msra.mxu0 0.0
      %2001 = vmatprep.subr.mxu0 0.0
      %2002 = vmatpush1.msra.mxu0 0.0
      %2003 = vmatprep.subr.mxu0 0.0
      %2004 = vmatpush1.msra.mxu0 0.0
      %2005 = vmatprep.subr.mxu0 0.0
      %2006 = vmatpush1.msra.mxu0 0.0
      %2007 = vmatprep.subr.mxu0 0.0
      %2008 = vmatpush1.msra.mxu0 0.0
      %2009 = vmatprep.subr.mxu0 0.0
      %2010 = vmatpush1.msra.mxu0 0.0
      %2011 = vmatprep.subr.mxu0 0.0
      %2012 = vmatpush1.msra.mxu0 0.0
      %2013 = vmatprep.subr.mxu0 0.0
      %2014 = vmatpush1.msra.mxu0 0.0
      %2015 = vmatprep.subr.mxu0 0.0
      %2016 = vmatpush1.msra.mxu0 0.0
      %2017 = vmatprep.subr.mxu0 0.0
      %2018 = vmatpush1.msra.mxu0 0.0
      %2019 = vmatprep.subr.mxu0 0.0
      %2020 = vmatpush1.msra.mxu0 0.0
      %2021 = vmatprep.mubr.f32.mxu0 0.0
      %2022 = vmatmul.mubr.f32.gmra.mrb[0].mxu0 %v1955
      %v2023 = vpop.f32.mrb[0].mxu0
      %v2024 = vadd.f32 %v1951, %v2023
      %v2025 = vpop.f32.mrb[0].mxu0
      %2026 = vdwg.mxu0
      %v2027 = vsel %vm150, %v2024, 0.0
      %2028 = vst [vmem:[#allocation8] sm:$0xff] %v2027
      %2029 = vst [vmem:[#allocation8 + $0x8] sm:$0xff] %v1842
      %2030 = vst [vmem:[#allocation8 + $0x10] sm:$0xff] %v1840
    $region45: #{tpu_custom_call.1} parent=1 // pred_fallthru
      _
    // Predicated region
    $region46: #{tpu_custom_call.1} parent=1 // pred_check
      _
    $region47: #{tpu_custom_call.1} parent=1 // pred_check_branch
      %2032 = sbr.rel (0) target = $region49
    $region48: #{tpu_custom_call.1} parent=1 // pred_region
      %s2034 = ssub.s32 384, 384
      %2035 = vsyncadd [#allocation7], %s2034
      %s2037 = sshll.u32 [#allocation8], 4
      %s2038 = int_to_ptr.vmem [resolvable:$true] %s2037
      %2040 = dma.vmem_to_hbm [thread:$0]  %s2038, 384, %s8, [#allocation7]
    $region49: #{tpu_custom_call.1} parent=1 // pred_fallthru
      _
    // Predicated region
    $region50: #{tpu_custom_call.1} parent=1 // pred_check
      _
    $region51: #{tpu_custom_call.1} parent=1 // pred_check_branch
      %2042 = sbr.rel (0) target = $region53
    $region52: #{tpu_custom_call.1} parent=1 // pred_region
      %2043 = dma.done [#allocation7], 384
    $region53: #{tpu_custom_call.1} parent=1 // pred_fallthru
      _
    %2044 = vsyncpa [#allocation6], 1
    %2045 = vsyncpa [#allocation7], 1

</llo_original>
